<compile_context>
chip_gen: v7x
topology: tpu7x:2x2x1
jax: 0.10.0
libtpu: 0.0.40
codegen_flags: <defaults>
</compile_context>

<pallas_src>
import functools

import jax
import jax.numpy as jnp
from jax.experimental import pallas as pl
from jax.experimental.pallas import tpu as pltpu


def _fused_profile_kernel(w_ref, b_ref, x_ref, out_ref,
                          m_sc, z_sc, ws_sc, ls_sc,
                          *, S, C, K, TL, L):
    """One grid step: conv one length chunk, fold it into online-softmax stats.

    w_ref : SMEM (S*C*K,) f32  flattened conv weights.
    b_ref : SMEM (S,)     f32  conv bias.
    x_ref : VMEM (1, C, TB, TL + K - 1) f32  halo'd input chunk (length=lanes).
    out_ref: VMEM (TB, 1) f32  ProfileWrapper output for this batch tile.
    m_sc, z_sc, ws_sc, ls_sc : VMEM (TB, 128) f32 per-lane running
        max / exp-sum / logit-weighted exp-sum / plain sum.
    """
    l_idx = pl.program_id(1)
    n_l = pl.num_programs(1)
    TB = m_sc.shape[0]
    G = TL // 128

    @pl.when(l_idx == 0)
    def _init():
        m_sc[...] = jnp.full((TB, 128), -1e30, dtype=jnp.float32)
        z_sc[...] = jnp.zeros((TB, 128), dtype=jnp.float32)
        ws_sc[...] = jnp.zeros((TB, 128), dtype=jnp.float32)
        ls_sc[...] = jnp.zeros((TB, 128), dtype=jnp.float32)

    # ---- Conv1d ('same', cross-correlation) for this chunk: VPU FMAs over
    # lane-dense (TB, TL) tiles built from K static shifted slices.  Bias is
    # folded into the accumulator init. ----
    accs = [jnp.zeros((TB, TL), dtype=jnp.float32) + b_ref[s] for s in range(S)]
    for c in range(C):
        xc = x_ref[0, c]                         # (TB, TL + K - 1)
        for k in range(K):
            xk = xc[:, k:k + TL]                 # shifted window, (TB, TL)
            for s in range(S):
                accs[s] = accs[s] + w_ref[s * C * K + c * K + k] * xk

    # ---- Online softmax-weighted-sum; both strands share one flat axis and a
    # single rescale (exp(m_old - m_new)) per chunk. ----
    cmax = accs[0][:, 0:128]
    for s in range(S):
        for g in range(G):
            if s == 0 and g == 0:
                continue
            cmax = jnp.maximum(cmax, accs[s][:, g * 128:(g + 1) * 128])

    m_old = m_sc[...]
    m_new = jnp.maximum(m_old, cmax)
    alpha = jnp.exp(m_old - m_new)
    z_acc = alpha * z_sc[...]
    w_acc = alpha * ws_sc[...]
    l_acc = ls_sc[...]
    for s in range(S):
        for g in range(G):
            a_g = accs[s][:, g * 128:(g + 1) * 128]
            p_g = jnp.exp(a_g - m_new)
            z_acc = z_acc + p_g
            w_acc = w_acc + a_g * p_g
            l_acc = l_acc + a_g
    m_sc[...] = m_new
    z_sc[...] = z_acc
    ws_sc[...] = w_acc
    ls_sc[...] = l_acc

    # ---- Finalize:  out = sum_j l_j*softmax(l)_j - mean_j l_j  (mean-centering
    # folded algebraically; softmax is shift invariant). ----
    @pl.when(l_idx == n_l - 1)
    def _finalize():
        m_lane = m_sc[...]
        gmax = jnp.max(m_lane, axis=-1, keepdims=True)            # (TB, 1)
        scale = jnp.exp(m_lane - gmax)                            # (TB, 128)
        z = jnp.sum(z_sc[...] * scale, axis=-1, keepdims=True)
        ws = jnp.sum(ws_sc[...] * scale, axis=-1, keepdims=True)
        lsum = jnp.sum(ls_sc[...], axis=-1, keepdims=True)
        out_ref[...] = (ws * pl.reciprocal(z, approx=True)
                        - lsum * (1.0 / float(S * L)))


def profile_wrapper_forward(x, weight, bias, x_ctl=None, *, tile_len=1024):
    """ProfileWrapper.forward for a synthetic BPNet profile head.

    x: (B, C, L) f32 one-hot sequence (PyTorch Conv1d NCW layout),
    weight: (S, C, K) f32 (K odd, 'same' padding), bias: (S,).  Returns (B, 1).
    """
    # TODO(synk): X_ctl (control-track) input of real BPNet models is not part
    # of this synthetic head and is ignored.
    del x_ctl
    B, C, L = x.shape
    S, C_w, K = weight.shape
    assert C_w == C, "weight channel mismatch"
    assert K % 2 == 1, "'same' padding path assumes odd kernel size"
    assert L % 128 == 0, "sequence length must be a multiple of 128"

    TL = min(tile_len, L)
    while TL > 128 and L % TL != 0:
        TL //= 2
    assert TL % 128 == 0 and L % TL == 0
    NL = L // TL
    TB = 8 if B % 8 == 0 else B
    assert B % TB == 0
    TLH = TL + K - 1

    # Host prep: 'same' zero padding + overlapping (halo) length chunks.
    # Halo duplication is (K-1)/TL (<1%) vs the K x HBM inflation of im2col.
    pad = K // 2
    xp = jnp.pad(x.astype(jnp.float32), ((0, 0), (0, 0), (pad, pad)))
    xt = jnp.transpose(xp, (1, 0, 2))                     # (C, B, L + K - 1)
    x_chunks = jnp.stack(
        [xt[:, :, i * TL:i * TL + TLH] for i in range(NL)], axis=0
    )                                                     # (NL, C, B, TLH)
    w_flat = weight.astype(jnp.float32).reshape(-1)       # (S*C*K,)
    b_flat = bias.astype(jnp.float32).reshape(-1)         # (S,)

    kernel = functools.partial(_fused_profile_kernel,
                               S=S, C=C, K=K, TL=TL, L=L)

    flops = 2 * B * L * C * K * S + 10 * B * S * L
    bytes_accessed = 4 * (x_chunks.size + w_flat.size + b_flat.size + B)

    return pl.pallas_call(
        kernel,
        out_shape=jax.ShapeDtypeStruct((B, 1), jnp.float32),
        grid_spec=pltpu.PrefetchScalarGridSpec(
            num_scalar_prefetch=0,
            grid=(B // TB, NL),
            in_specs=[
                pl.BlockSpec(memory_space=pltpu.MemorySpace.SMEM),   # weights
                pl.BlockSpec(memory_space=pltpu.MemorySpace.SMEM),   # bias
                pl.BlockSpec((1, C, TB, TLH), lambda b, l: (l, 0, b, 0)),
            ],
            out_specs=pl.BlockSpec((TB, 1), lambda b, l: (b, 0)),
            scratch_shapes=[pltpu.VMEM((TB, 128), jnp.float32)] * 4,
        ),
        compiler_params=pltpu.CompilerParams(
            dimension_semantics=("parallel", "arbitrary"),
            vmem_limit_bytes=32 * 1024 * 1024,
        ),
        cost_estimate=pl.CostEstimate(
            flops=flops,
            transcendentals=2 * B * S * L,
            bytes_accessed=bytes_accessed,
        ),
    )(w_flat, b_flat, x_chunks)


def _reference_forward(x, weight, bias):
    """Pure-JAX mirror of ProfileWrapper(model).forward for the synthetic head."""
    B, C, L = x.shape
    S, _, K = weight.shape
    pad = K // 2
    xp = jnp.pad(x, ((0, 0), (0, 0), (pad, pad)))
    idx = jnp.arange(L)[:, None] + jnp.arange(K)[None, :]
    windows = xp[:, :, idx]                                # (B, C, L, K)
    logits = jnp.einsum("bclk,sck->bsl", windows, weight) + bias[None, :, None]
    flat = logits.reshape(B, S * L)
    cent = flat - jnp.mean(flat, axis=-1, keepdims=True)
    p = jax.nn.softmax(cent, axis=-1)
    return jnp.sum(cent * p, axis=-1, keepdims=True)


if __name__ == "__main__":
    B, C, L, K, S = 8, 4, 1024, 7, 2

    key = jax.random.PRNGKey(0)
    k_seq, k_w, k_b = jax.random.split(key, 3)
    seq = jax.random.randint(k_seq, (B, L), 0, C)
    x = jax.nn.one_hot(seq, C, axis=1, dtype=jnp.float32)        # (B, C, L)
    weight = 0.5 * jax.random.normal(k_w, (S, C, K), dtype=jnp.float32)
    bias = 0.1 * jax.random.normal(k_b, (S,), dtype=jnp.float32)

    out = jax.jit(profile_wrapper_forward)(x, weight, bias)
    out = jax.block_until_ready(out)

    ref = _reference_forward(x, weight, bias)
    err = float(jnp.max(jnp.abs(out - ref)))
    if not err < 5e-2:
        raise AssertionError(f"Pallas output mismatch vs reference (max abs err {err})")
    print("KERNEL_OK")
</pallas_src>

<mosaic_0001>
module attributes {stable_mosaic.version = 11 : i64} {
  func.func @_fused_profile_kernel(%arg0: i32, %arg1: i32, %arg2: memref<56xf32, #tpu.memory_space<smem>>, %arg3: memref<2xf32, #tpu.memory_space<smem>>, %arg4: memref<1x4x8x1030xf32, #tpu.memory_space<vmem>>, %arg5: memref<8x1xf32, #tpu.memory_space<vmem>>, %arg6: memref<8x128xf32, #tpu.memory_space<vmem>>, %arg7: memref<8x128xf32, #tpu.memory_space<vmem>>, %arg8: memref<8x128xf32, #tpu.memory_space<vmem>>, %arg9: memref<8x128xf32, #tpu.memory_space<vmem>>) attributes {dimension_semantics = [#tpu.dimension_semantics<parallel>, #tpu.dimension_semantics<arbitrary>], iteration_bounds = array<i64: 1, 1>, scalar_prefetch = 0 : i64, scratch_operands = 4 : i64, tpu.core_type = #tpu.core_type<tc>, window_params = [{transform_indices = @transform_0, window_bounds = array<i64: 56>}, {transform_indices = @transform_1, window_bounds = array<i64: 2>}, {transform_indices = @transform_2, window_bounds = array<i64: 1, 4, 8, 1030>}, {transform_indices = @transform_3, window_bounds = array<i64: 8, 1>}]} {
    %c0_i32 = arith.constant 0 : i32
    %0 = arith.cmpi eq, %arg1, %c0_i32 : i32
    %1 = arith.extui %0 : i1 to i32
    %c0_i32_0 = arith.constant 0 : i32
    %2 = arith.cmpi ne, %1, %c0_i32_0 : i32
    scf.if %2 {
      %cst_38 = arith.constant -1.000000e+30 : f32
      %430 = vector.broadcast %cst_38 : f32 to vector<8x128xf32>
      %c0_39 = arith.constant 0 : index
      %c0_40 = arith.constant 0 : index
      %431 = vector.load %arg6[%c0_39, %c0_40] : memref<8x128xf32, #tpu.memory_space<vmem>>, vector<8x128xf32>
      tpu.vector_store %arg6[%c0_39, %c0_40], %430 {strides = array<i32>} : memref<8x128xf32, #tpu.memory_space<vmem>>, vector<8x128xf32>,
      %cst_41 = arith.constant 0.000000e+00 : f32
      %432 = vector.broadcast %cst_41 : f32 to vector<8x128xf32>
      %c0_42 = arith.constant 0 : index
      %c0_43 = arith.constant 0 : index
      %433 = vector.load %arg7[%c0_42, %c0_43] : memref<8x128xf32, #tpu.memory_space<vmem>>, vector<8x128xf32>
      tpu.vector_store %arg7[%c0_42, %c0_43], %432 {strides = array<i32>} : memref<8x128xf32, #tpu.memory_space<vmem>>, vector<8x128xf32>,
      %cst_44 = arith.constant 0.000000e+00 : f32
      %434 = vector.broadcast %cst_44 : f32 to vector<8x128xf32>
      %c0_45 = arith.constant 0 : index
      %c0_46 = arith.constant 0 : index
      %435 = vector.load %arg8[%c0_45, %c0_46] : memref<8x128xf32, #tpu.memory_space<vmem>>, vector<8x128xf32>
      tpu.vector_store %arg8[%c0_45, %c0_46], %434 {strides = array<i32>} : memref<8x128xf32, #tpu.memory_space<vmem>>, vector<8x128xf32>,
      %cst_47 = arith.constant 0.000000e+00 : f32
      %436 = vector.broadcast %cst_47 : f32 to vector<8x128xf32>
      %c0_48 = arith.constant 0 : index
      %c0_49 = arith.constant 0 : index
      %437 = vector.load %arg9[%c0_48, %c0_49] : memref<8x128xf32, #tpu.memory_space<vmem>>, vector<8x128xf32>
      tpu.vector_store %arg9[%c0_48, %c0_49], %436 {strides = array<i32>} : memref<8x128xf32, #tpu.memory_space<vmem>>, vector<8x128xf32>,
    } else {
    }
    %cst = arith.constant 0.000000e+00 : f32
    %3 = vector.broadcast %cst : f32 to vector<8x1024xf32>
    %c0 = arith.constant 0 : index
    %4 = memref.load %arg3[%c0] : memref<2xf32, #tpu.memory_space<smem>>
    %5 = vector.broadcast %4 : f32 to vector<8x1024xf32>
    %6 = arith.addf %3, %5 : vector<8x1024xf32>
    %cst_1 = arith.constant 0.000000e+00 : f32
    %7 = vector.broadcast %cst_1 : f32 to vector<8x1024xf32>
    %c1 = arith.constant 1 : index
    %8 = memref.load %arg3[%c1] : memref<2xf32, #tpu.memory_space<smem>>
    %9 = vector.broadcast %8 : f32 to vector<8x1024xf32>
    %10 = arith.addf %7, %9 : vector<8x1024xf32>
    %c0_2 = arith.constant 0 : index
    %c0_3 = arith.constant 0 : index
    %c0_4 = arith.constant 0 : index
    %c0_5 = arith.constant 0 : index
    %11 = vector.load %arg4[%c0_2, %c0_3, %c0_4, %c0_5] : memref<1x4x8x1030xf32, #tpu.memory_space<vmem>>, vector<1x1x8x1030xf32>
    %12 = vector.shape_cast %11 : vector<1x1x8x1030xf32> to vector<8x1030xf32>
    %13 = vector.extract_strided_slice %12 {offsets = [0, 0], sizes = [8, 1024], strides = [1, 1]} : vector<8x1030xf32> to vector<8x1024xf32>
    %c0_6 = arith.constant 0 : index
    %14 = memref.load %arg2[%c0_6] : memref<56xf32, #tpu.memory_space<smem>>
    %15 = vector.broadcast %14 : f32 to vector<8x1024xf32>
    %16 = arith.mulf %15, %13 : vector<8x1024xf32>
    %17 = arith.addf %6, %16 : vector<8x1024xf32>
    %c28 = arith.constant 28 : index
    %18 = memref.load %arg2[%c28] : memref<56xf32, #tpu.memory_space<smem>>
    %19 = vector.broadcast %18 : f32 to vector<8x1024xf32>
    %20 = arith.mulf %19, %13 : vector<8x1024xf32>
    %21 = arith.addf %10, %20 : vector<8x1024xf32>
    %22 = vector.extract_strided_slice %12 {offsets = [0, 1], sizes = [8, 1024], strides = [1, 1]} : vector<8x1030xf32> to vector<8x1024xf32>
    %c1_7 = arith.constant 1 : index
    %23 = memref.load %arg2[%c1_7] : memref<56xf32, #tpu.memory_space<smem>>
    %24 = vector.broadcast %23 : f32 to vector<8x1024xf32>
    %25 = arith.mulf %24, %22 : vector<8x1024xf32>
    %26 = arith.addf %17, %25 : vector<8x1024xf32>
    %c29 = arith.constant 29 : index
    %27 = memref.load %arg2[%c29] : memref<56xf32, #tpu.memory_space<smem>>
    %28 = vector.broadcast %27 : f32 to vector<8x1024xf32>
    %29 = arith.mulf %28, %22 : vector<8x1024xf32>
    %30 = arith.addf %21, %29 : vector<8x1024xf32>
    %31 = vector.extract_strided_slice %12 {offsets = [0, 2], sizes = [8, 1024], strides = [1, 1]} : vector<8x1030xf32> to vector<8x1024xf32>
    %c2 = arith.constant 2 : index
    %32 = memref.load %arg2[%c2] : memref<56xf32, #tpu.memory_space<smem>>
    %33 = vector.broadcast %32 : f32 to vector<8x1024xf32>
    %34 = arith.mulf %33, %31 : vector<8x1024xf32>
    %35 = arith.addf %26, %34 : vector<8x1024xf32>
    %c30 = arith.constant 30 : index
    %36 = memref.load %arg2[%c30] : memref<56xf32, #tpu.memory_space<smem>>
    %37 = vector.broadcast %36 : f32 to vector<8x1024xf32>
    %38 = arith.mulf %37, %31 : vector<8x1024xf32>
    %39 = arith.addf %30, %38 : vector<8x1024xf32>
    %40 = vector.extract_strided_slice %12 {offsets = [0, 3], sizes = [8, 1024], strides = [1, 1]} : vector<8x1030xf32> to vector<8x1024xf32>
    %c3 = arith.constant 3 : index
    %41 = memref.load %arg2[%c3] : memref<56xf32, #tpu.memory_space<smem>>
    %42 = vector.broadcast %41 : f32 to vector<8x1024xf32>
    %43 = arith.mulf %42, %40 : vector<8x1024xf32>
    %44 = arith.addf %35, %43 : vector<8x1024xf32>
    %c31 = arith.constant 31 : index
    %45 = memref.load %arg2[%c31] : memref<56xf32, #tpu.memory_space<smem>>
    %46 = vector.broadcast %45 : f32 to vector<8x1024xf32>
    %47 = arith.mulf %46, %40 : vector<8x1024xf32>
    %48 = arith.addf %39, %47 : vector<8x1024xf32>
    %49 = vector.extract_strided_slice %12 {offsets = [0, 4], sizes = [8, 1024], strides = [1, 1]} : vector<8x1030xf32> to vector<8x1024xf32>
    %c4 = arith.constant 4 : index
    %50 = memref.load %arg2[%c4] : memref<56xf32, #tpu.memory_space<smem>>
    %51 = vector.broadcast %50 : f32 to vector<8x1024xf32>
    %52 = arith.mulf %51, %49 : vector<8x1024xf32>
    %53 = arith.addf %44, %52 : vector<8x1024xf32>
    %c32 = arith.constant 32 : index
    %54 = memref.load %arg2[%c32] : memref<56xf32, #tpu.memory_space<smem>>
    %55 = vector.broadcast %54 : f32 to vector<8x1024xf32>
    %56 = arith.mulf %55, %49 : vector<8x1024xf32>
    %57 = arith.addf %48, %56 : vector<8x1024xf32>
    %58 = vector.extract_strided_slice %12 {offsets = [0, 5], sizes = [8, 1024], strides = [1, 1]} : vector<8x1030xf32> to vector<8x1024xf32>
    %c5 = arith.constant 5 : index
    %59 = memref.load %arg2[%c5] : memref<56xf32, #tpu.memory_space<smem>>
    %60 = vector.broadcast %59 : f32 to vector<8x1024xf32>
    %61 = arith.mulf %60, %58 : vector<8x1024xf32>
    %62 = arith.addf %53, %61 : vector<8x1024xf32>
    %c33 = arith.constant 33 : index
    %63 = memref.load %arg2[%c33] : memref<56xf32, #tpu.memory_space<smem>>
    %64 = vector.broadcast %63 : f32 to vector<8x1024xf32>
    %65 = arith.mulf %64, %58 : vector<8x1024xf32>
    %66 = arith.addf %57, %65 : vector<8x1024xf32>
    %67 = vector.extract_strided_slice %12 {offsets = [0, 6], sizes = [8, 1024], strides = [1, 1]} : vector<8x1030xf32> to vector<8x1024xf32>
    %c6 = arith.constant 6 : index
    %68 = memref.load %arg2[%c6] : memref<56xf32, #tpu.memory_space<smem>>
    %69 = vector.broadcast %68 : f32 to vector<8x1024xf32>
    %70 = arith.mulf %69, %67 : vector<8x1024xf32>
    %71 = arith.addf %62, %70 : vector<8x1024xf32>
    %c34 = arith.constant 34 : index
    %72 = memref.load %arg2[%c34] : memref<56xf32, #tpu.memory_space<smem>>
    %73 = vector.broadcast %72 : f32 to vector<8x1024xf32>
    %74 = arith.mulf %73, %67 : vector<8x1024xf32>
    %75 = arith.addf %66, %74 : vector<8x1024xf32>
    %c0_8 = arith.constant 0 : index
    %c1_9 = arith.constant 1 : index
    %c0_10 = arith.constant 0 : index
    %c0_11 = arith.constant 0 : index
    %76 = vector.load %arg4[%c0_8, %c1_9, %c0_10, %c0_11] : memref<1x4x8x1030xf32, #tpu.memory_space<vmem>>, vector<1x1x8x1030xf32>
    %77 = vector.shape_cast %76 : vector<1x1x8x1030xf32> to vector<8x1030xf32>
    %78 = vector.extract_strided_slice %77 {offsets = [0, 0], sizes = [8, 1024], strides = [1, 1]} : vector<8x1030xf32> to vector<8x1024xf32>
    %c7 = arith.constant 7 : index
    %79 = memref.load %arg2[%c7] : memref<56xf32, #tpu.memory_space<smem>>
    %80 = vector.broadcast %79 : f32 to vector<8x1024xf32>
    %81 = arith.mulf %80, %78 : vector<8x1024xf32>
    %82 = arith.addf %71, %81 : vector<8x1024xf32>
    %c35 = arith.constant 35 : index
    %83 = memref.load %arg2[%c35] : memref<56xf32, #tpu.memory_space<smem>>
    %84 = vector.broadcast %83 : f32 to vector<8x1024xf32>
    %85 = arith.mulf %84, %78 : vector<8x1024xf32>
    %86 = arith.addf %75, %85 : vector<8x1024xf32>
    %87 = vector.extract_strided_slice %77 {offsets = [0, 1], sizes = [8, 1024], strides = [1, 1]} : vector<8x1030xf32> to vector<8x1024xf32>
    %c8 = arith.constant 8 : index
    %88 = memref.load %arg2[%c8] : memref<56xf32, #tpu.memory_space<smem>>
    %89 = vector.broadcast %88 : f32 to vector<8x1024xf32>
    %90 = arith.mulf %89, %87 : vector<8x1024xf32>
    %91 = arith.addf %82, %90 : vector<8x1024xf32>
    %c36 = arith.constant 36 : index
    %92 = memref.load %arg2[%c36] : memref<56xf32, #tpu.memory_space<smem>>
    %93 = vector.broadcast %92 : f32 to vector<8x1024xf32>
    %94 = arith.mulf %93, %87 : vector<8x1024xf32>
    %95 = arith.addf %86, %94 : vector<8x1024xf32>
    %96 = vector.extract_strided_slice %77 {offsets = [0, 2], sizes = [8, 1024], strides = [1, 1]} : vector<8x1030xf32> to vector<8x1024xf32>
    %c9 = arith.constant 9 : index
    %97 = memref.load %arg2[%c9] : memref<56xf32, #tpu.memory_space<smem>>
    %98 = vector.broadcast %97 : f32 to vector<8x1024xf32>
    %99 = arith.mulf %98, %96 : vector<8x1024xf32>
    %100 = arith.addf %91, %99 : vector<8x1024xf32>
    %c37 = arith.constant 37 : index
    %101 = memref.load %arg2[%c37] : memref<56xf32, #tpu.memory_space<smem>>
    %102 = vector.broadcast %101 : f32 to vector<8x1024xf32>
    %103 = arith.mulf %102, %96 : vector<8x1024xf32>
    %104 = arith.addf %95, %103 : vector<8x1024xf32>
    %105 = vector.extract_strided_slice %77 {offsets = [0, 3], sizes = [8, 1024], strides = [1, 1]} : vector<8x1030xf32> to vector<8x1024xf32>
    %c10 = arith.constant 10 : index
    %106 = memref.load %arg2[%c10] : memref<56xf32, #tpu.memory_space<smem>>
    %107 = vector.broadcast %106 : f32 to vector<8x1024xf32>
    %108 = arith.mulf %107, %105 : vector<8x1024xf32>
    %109 = arith.addf %100, %108 : vector<8x1024xf32>
    %c38 = arith.constant 38 : index
    %110 = memref.load %arg2[%c38] : memref<56xf32, #tpu.memory_space<smem>>
    %111 = vector.broadcast %110 : f32 to vector<8x1024xf32>
    %112 = arith.mulf %111, %105 : vector<8x1024xf32>
    %113 = arith.addf %104, %112 : vector<8x1024xf32>
    %114 = vector.extract_strided_slice %77 {offsets = [0, 4], sizes = [8, 1024], strides = [1, 1]} : vector<8x1030xf32> to vector<8x1024xf32>
    %c11 = arith.constant 11 : index
    %115 = memref.load %arg2[%c11] : memref<56xf32, #tpu.memory_space<smem>>
    %116 = vector.broadcast %115 : f32 to vector<8x1024xf32>
    %117 = arith.mulf %116, %114 : vector<8x1024xf32>
    %118 = arith.addf %109, %117 : vector<8x1024xf32>
    %c39 = arith.constant 39 : index
    %119 = memref.load %arg2[%c39] : memref<56xf32, #tpu.memory_space<smem>>
    %120 = vector.broadcast %119 : f32 to vector<8x1024xf32>
    %121 = arith.mulf %120, %114 : vector<8x1024xf32>
    %122 = arith.addf %113, %121 : vector<8x1024xf32>
    %123 = vector.extract_strided_slice %77 {offsets = [0, 5], sizes = [8, 1024], strides = [1, 1]} : vector<8x1030xf32> to vector<8x1024xf32>
    %c12 = arith.constant 12 : index
    %124 = memref.load %arg2[%c12] : memref<56xf32, #tpu.memory_space<smem>>
    %125 = vector.broadcast %124 : f32 to vector<8x1024xf32>
    %126 = arith.mulf %125, %123 : vector<8x1024xf32>
    %127 = arith.addf %118, %126 : vector<8x1024xf32>
    %c40 = arith.constant 40 : index
    %128 = memref.load %arg2[%c40] : memref<56xf32, #tpu.memory_space<smem>>
    %129 = vector.broadcast %128 : f32 to vector<8x1024xf32>
    %130 = arith.mulf %129, %123 : vector<8x1024xf32>
    %131 = arith.addf %122, %130 : vector<8x1024xf32>
    %132 = vector.extract_strided_slice %77 {offsets = [0, 6], sizes = [8, 1024], strides = [1, 1]} : vector<8x1030xf32> to vector<8x1024xf32>
    %c13 = arith.constant 13 : index
    %133 = memref.load %arg2[%c13] : memref<56xf32, #tpu.memory_space<smem>>
    %134 = vector.broadcast %133 : f32 to vector<8x1024xf32>
    %135 = arith.mulf %134, %132 : vector<8x1024xf32>
    %136 = arith.addf %127, %135 : vector<8x1024xf32>
    %c41 = arith.constant 41 : index
    %137 = memref.load %arg2[%c41] : memref<56xf32, #tpu.memory_space<smem>>
    %138 = vector.broadcast %137 : f32 to vector<8x1024xf32>
    %139 = arith.mulf %138, %132 : vector<8x1024xf32>
    %140 = arith.addf %131, %139 : vector<8x1024xf32>
    %c0_12 = arith.constant 0 : index
    %c2_13 = arith.constant 2 : index
    %c0_14 = arith.constant 0 : index
    %c0_15 = arith.constant 0 : index
    %141 = vector.load %arg4[%c0_12, %c2_13, %c0_14, %c0_15] : memref<1x4x8x1030xf32, #tpu.memory_space<vmem>>, vector<1x1x8x1030xf32>
    %142 = vector.shape_cast %141 : vector<1x1x8x1030xf32> to vector<8x1030xf32>
    %143 = vector.extract_strided_slice %142 {offsets = [0, 0], sizes = [8, 1024], strides = [1, 1]} : vector<8x1030xf32> to vector<8x1024xf32>
    %c14 = arith.constant 14 : index
    %144 = memref.load %arg2[%c14] : memref<56xf32, #tpu.memory_space<smem>>
    %145 = vector.broadcast %144 : f32 to vector<8x1024xf32>
    %146 = arith.mulf %145, %143 : vector<8x1024xf32>
    %147 = arith.addf %136, %146 : vector<8x1024xf32>
    %c42 = arith.constant 42 : index
    %148 = memref.load %arg2[%c42] : memref<56xf32, #tpu.memory_space<smem>>
    %149 = vector.broadcast %148 : f32 to vector<8x1024xf32>
    %150 = arith.mulf %149, %143 : vector<8x1024xf32>
    %151 = arith.addf %140, %150 : vector<8x1024xf32>
    %152 = vector.extract_strided_slice %142 {offsets = [0, 1], sizes = [8, 1024], strides = [1, 1]} : vector<8x1030xf32> to vector<8x1024xf32>
    %c15 = arith.constant 15 : index
    %153 = memref.load %arg2[%c15] : memref<56xf32, #tpu.memory_space<smem>>
    %154 = vector.broadcast %153 : f32 to vector<8x1024xf32>
    %155 = arith.mulf %154, %152 : vector<8x1024xf32>
    %156 = arith.addf %147, %155 : vector<8x1024xf32>
    %c43 = arith.constant 43 : index
    %157 = memref.load %arg2[%c43] : memref<56xf32, #tpu.memory_space<smem>>
    %158 = vector.broadcast %157 : f32 to vector<8x1024xf32>
    %159 = arith.mulf %158, %152 : vector<8x1024xf32>
    %160 = arith.addf %151, %159 : vector<8x1024xf32>
    %161 = vector.extract_strided_slice %142 {offsets = [0, 2], sizes = [8, 1024], strides = [1, 1]} : vector<8x1030xf32> to vector<8x1024xf32>
    %c16 = arith.constant 16 : index
    %162 = memref.load %arg2[%c16] : memref<56xf32, #tpu.memory_space<smem>>
    %163 = vector.broadcast %162 : f32 to vector<8x1024xf32>
    %164 = arith.mulf %163, %161 : vector<8x1024xf32>
    %165 = arith.addf %156, %164 : vector<8x1024xf32>
    %c44 = arith.constant 44 : index
    %166 = memref.load %arg2[%c44] : memref<56xf32, #tpu.memory_space<smem>>
    %167 = vector.broadcast %166 : f32 to vector<8x1024xf32>
    %168 = arith.mulf %167, %161 : vector<8x1024xf32>
    %169 = arith.addf %160, %168 : vector<8x1024xf32>
    %170 = vector.extract_strided_slice %142 {offsets = [0, 3], sizes = [8, 1024], strides = [1, 1]} : vector<8x1030xf32> to vector<8x1024xf32>
    %c17 = arith.constant 17 : index
    %171 = memref.load %arg2[%c17] : memref<56xf32, #tpu.memory_space<smem>>
    %172 = vector.broadcast %171 : f32 to vector<8x1024xf32>
    %173 = arith.mulf %172, %170 : vector<8x1024xf32>
    %174 = arith.addf %165, %173 : vector<8x1024xf32>
    %c45 = arith.constant 45 : index
    %175 = memref.load %arg2[%c45] : memref<56xf32, #tpu.memory_space<smem>>
    %176 = vector.broadcast %175 : f32 to vector<8x1024xf32>
    %177 = arith.mulf %176, %170 : vector<8x1024xf32>
    %178 = arith.addf %169, %177 : vector<8x1024xf32>
    %179 = vector.extract_strided_slice %142 {offsets = [0, 4], sizes = [8, 1024], strides = [1, 1]} : vector<8x1030xf32> to vector<8x1024xf32>
    %c18 = arith.constant 18 : index
    %180 = memref.load %arg2[%c18] : memref<56xf32, #tpu.memory_space<smem>>
    %181 = vector.broadcast %180 : f32 to vector<8x1024xf32>
    %182 = arith.mulf %181, %179 : vector<8x1024xf32>
    %183 = arith.addf %174, %182 : vector<8x1024xf32>
    %c46 = arith.constant 46 : index
    %184 = memref.load %arg2[%c46] : memref<56xf32, #tpu.memory_space<smem>>
    %185 = vector.broadcast %184 : f32 to vector<8x1024xf32>
    %186 = arith.mulf %185, %179 : vector<8x1024xf32>
    %187 = arith.addf %178, %186 : vector<8x1024xf32>
    %188 = vector.extract_strided_slice %142 {offsets = [0, 5], sizes = [8, 1024], strides = [1, 1]} : vector<8x1030xf32> to vector<8x1024xf32>
    %c19 = arith.constant 19 : index
    %189 = memref.load %arg2[%c19] : memref<56xf32, #tpu.memory_space<smem>>
    %190 = vector.broadcast %189 : f32 to vector<8x1024xf32>
    %191 = arith.mulf %190, %188 : vector<8x1024xf32>
    %192 = arith.addf %183, %191 : vector<8x1024xf32>
    %c47 = arith.constant 47 : index
    %193 = memref.load %arg2[%c47] : memref<56xf32, #tpu.memory_space<smem>>
    %194 = vector.broadcast %193 : f32 to vector<8x1024xf32>
    %195 = arith.mulf %194, %188 : vector<8x1024xf32>
    %196 = arith.addf %187, %195 : vector<8x1024xf32>
    %197 = vector.extract_strided_slice %142 {offsets = [0, 6], sizes = [8, 1024], strides = [1, 1]} : vector<8x1030xf32> to vector<8x1024xf32>
    %c20 = arith.constant 20 : index
    %198 = memref.load %arg2[%c20] : memref<56xf32, #tpu.memory_space<smem>>
    %199 = vector.broadcast %198 : f32 to vector<8x1024xf32>
    %200 = arith.mulf %199, %197 : vector<8x1024xf32>
    %201 = arith.addf %192, %200 : vector<8x1024xf32>
    %c48 = arith.constant 48 : index
    %202 = memref.load %arg2[%c48] : memref<56xf32, #tpu.memory_space<smem>>
    %203 = vector.broadcast %202 : f32 to vector<8x1024xf32>
    %204 = arith.mulf %203, %197 : vector<8x1024xf32>
    %205 = arith.addf %196, %204 : vector<8x1024xf32>
    %c0_16 = arith.constant 0 : index
    %c3_17 = arith.constant 3 : index
    %c0_18 = arith.constant 0 : index
    %c0_19 = arith.constant 0 : index
    %206 = vector.load %arg4[%c0_16, %c3_17, %c0_18, %c0_19] : memref<1x4x8x1030xf32, #tpu.memory_space<vmem>>, vector<1x1x8x1030xf32>
    %207 = vector.shape_cast %206 : vector<1x1x8x1030xf32> to vector<8x1030xf32>
    %208 = vector.extract_strided_slice %207 {offsets = [0, 0], sizes = [8, 1024], strides = [1, 1]} : vector<8x1030xf32> to vector<8x1024xf32>
    %c21 = arith.constant 21 : index
    %209 = memref.load %arg2[%c21] : memref<56xf32, #tpu.memory_space<smem>>
    %210 = vector.broadcast %209 : f32 to vector<8x1024xf32>
    %211 = arith.mulf %210, %208 : vector<8x1024xf32>
    %212 = arith.addf %201, %211 : vector<8x1024xf32>
    %c49 = arith.constant 49 : index
    %213 = memref.load %arg2[%c49] : memref<56xf32, #tpu.memory_space<smem>>
    %214 = vector.broadcast %213 : f32 to vector<8x1024xf32>
    %215 = arith.mulf %214, %208 : vector<8x1024xf32>
    %216 = arith.addf %205, %215 : vector<8x1024xf32>
    %217 = vector.extract_strided_slice %207 {offsets = [0, 1], sizes = [8, 1024], strides = [1, 1]} : vector<8x1030xf32> to vector<8x1024xf32>
    %c22 = arith.constant 22 : index
    %218 = memref.load %arg2[%c22] : memref<56xf32, #tpu.memory_space<smem>>
    %219 = vector.broadcast %218 : f32 to vector<8x1024xf32>
    %220 = arith.mulf %219, %217 : vector<8x1024xf32>
    %221 = arith.addf %212, %220 : vector<8x1024xf32>
    %c50 = arith.constant 50 : index
    %222 = memref.load %arg2[%c50] : memref<56xf32, #tpu.memory_space<smem>>
    %223 = vector.broadcast %222 : f32 to vector<8x1024xf32>
    %224 = arith.mulf %223, %217 : vector<8x1024xf32>
    %225 = arith.addf %216, %224 : vector<8x1024xf32>
    %226 = vector.extract_strided_slice %207 {offsets = [0, 2], sizes = [8, 1024], strides = [1, 1]} : vector<8x1030xf32> to vector<8x1024xf32>
    %c23 = arith.constant 23 : index
    %227 = memref.load %arg2[%c23] : memref<56xf32, #tpu.memory_space<smem>>
    %228 = vector.broadcast %227 : f32 to vector<8x1024xf32>
    %229 = arith.mulf %228, %226 : vector<8x1024xf32>
    %230 = arith.addf %221, %229 : vector<8x1024xf32>
    %c51 = arith.constant 51 : index
    %231 = memref.load %arg2[%c51] : memref<56xf32, #tpu.memory_space<smem>>
    %232 = vector.broadcast %231 : f32 to vector<8x1024xf32>
    %233 = arith.mulf %232, %226 : vector<8x1024xf32>
    %234 = arith.addf %225, %233 : vector<8x1024xf32>
    %235 = vector.extract_strided_slice %207 {offsets = [0, 3], sizes = [8, 1024], strides = [1, 1]} : vector<8x1030xf32> to vector<8x1024xf32>
    %c24 = arith.constant 24 : index
    %236 = memref.load %arg2[%c24] : memref<56xf32, #tpu.memory_space<smem>>
    %237 = vector.broadcast %236 : f32 to vector<8x1024xf32>
    %238 = arith.mulf %237, %235 : vector<8x1024xf32>
    %239 = arith.addf %230, %238 : vector<8x1024xf32>
    %c52 = arith.constant 52 : index
    %240 = memref.load %arg2[%c52] : memref<56xf32, #tpu.memory_space<smem>>
    %241 = vector.broadcast %240 : f32 to vector<8x1024xf32>
    %242 = arith.mulf %241, %235 : vector<8x1024xf32>
    %243 = arith.addf %234, %242 : vector<8x1024xf32>
    %244 = vector.extract_strided_slice %207 {offsets = [0, 4], sizes = [8, 1024], strides = [1, 1]} : vector<8x1030xf32> to vector<8x1024xf32>
    %c25 = arith.constant 25 : index
    %245 = memref.load %arg2[%c25] : memref<56xf32, #tpu.memory_space<smem>>
    %246 = vector.broadcast %245 : f32 to vector<8x1024xf32>
    %247 = arith.mulf %246, %244 : vector<8x1024xf32>
    %248 = arith.addf %239, %247 : vector<8x1024xf32>
    %c53 = arith.constant 53 : index
    %249 = memref.load %arg2[%c53] : memref<56xf32, #tpu.memory_space<smem>>
    %250 = vector.broadcast %249 : f32 to vector<8x1024xf32>
    %251 = arith.mulf %250, %244 : vector<8x1024xf32>
    %252 = arith.addf %243, %251 : vector<8x1024xf32>
    %253 = vector.extract_strided_slice %207 {offsets = [0, 5], sizes = [8, 1024], strides = [1, 1]} : vector<8x1030xf32> to vector<8x1024xf32>
    %c26 = arith.constant 26 : index
    %254 = memref.load %arg2[%c26] : memref<56xf32, #tpu.memory_space<smem>>
    %255 = vector.broadcast %254 : f32 to vector<8x1024xf32>
    %256 = arith.mulf %255, %253 : vector<8x1024xf32>
    %257 = arith.addf %248, %256 : vector<8x1024xf32>
    %c54 = arith.constant 54 : index
    %258 = memref.load %arg2[%c54] : memref<56xf32, #tpu.memory_space<smem>>
    %259 = vector.broadcast %258 : f32 to vector<8x1024xf32>
    %260 = arith.mulf %259, %253 : vector<8x1024xf32>
    %261 = arith.addf %252, %260 : vector<8x1024xf32>
    %262 = vector.extract_strided_slice %207 {offsets = [0, 6], sizes = [8, 1024], strides = [1, 1]} : vector<8x1030xf32> to vector<8x1024xf32>
    %c27 = arith.constant 27 : index
    %263 = memref.load %arg2[%c27] : memref<56xf32, #tpu.memory_space<smem>>
    %264 = vector.broadcast %263 : f32 to vector<8x1024xf32>
    %265 = arith.mulf %264, %262 : vector<8x1024xf32>
    %266 = arith.addf %257, %265 : vector<8x1024xf32>
    %c55 = arith.constant 55 : index
    %267 = memref.load %arg2[%c55] : memref<56xf32, #tpu.memory_space<smem>>
    %268 = vector.broadcast %267 : f32 to vector<8x1024xf32>
    %269 = arith.mulf %268, %262 : vector<8x1024xf32>
    %270 = arith.addf %261, %269 : vector<8x1024xf32>
    %271 = vector.extract_strided_slice %266 {offsets = [0, 0], sizes = [8, 128], strides = [1, 1]} : vector<8x1024xf32> to vector<8x128xf32>
    %272 = vector.extract_strided_slice %266 {offsets = [0, 128], sizes = [8, 128], strides = [1, 1]} : vector<8x1024xf32> to vector<8x128xf32>
    %273 = arith.maximumf %271, %272 : vector<8x128xf32>
    %274 = vector.extract_strided_slice %266 {offsets = [0, 256], sizes = [8, 128], strides = [1, 1]} : vector<8x1024xf32> to vector<8x128xf32>
    %275 = arith.maximumf %273, %274 : vector<8x128xf32>
    %276 = vector.extract_strided_slice %266 {offsets = [0, 384], sizes = [8, 128], strides = [1, 1]} : vector<8x1024xf32> to vector<8x128xf32>
    %277 = arith.maximumf %275, %276 : vector<8x128xf32>
    %278 = vector.extract_strided_slice %266 {offsets = [0, 512], sizes = [8, 128], strides = [1, 1]} : vector<8x1024xf32> to vector<8x128xf32>
    %279 = arith.maximumf %277, %278 : vector<8x128xf32>
    %280 = vector.extract_strided_slice %266 {offsets = [0, 640], sizes = [8, 128], strides = [1, 1]} : vector<8x1024xf32> to vector<8x128xf32>
    %281 = arith.maximumf %279, %280 : vector<8x128xf32>
    %282 = vector.extract_strided_slice %266 {offsets = [0, 768], sizes = [8, 128], strides = [1, 1]} : vector<8x1024xf32> to vector<8x128xf32>
    %283 = arith.maximumf %281, %282 : vector<8x128xf32>
    %284 = vector.extract_strided_slice %266 {offsets = [0, 896], sizes = [8, 128], strides = [1, 1]} : vector<8x1024xf32> to vector<8x128xf32>
    %285 = arith.maximumf %283, %284 : vector<8x128xf32>
    %286 = vector.extract_strided_slice %270 {offsets = [0, 0], sizes = [8, 128], strides = [1, 1]} : vector<8x1024xf32> to vector<8x128xf32>
    %287 = arith.maximumf %285, %286 : vector<8x128xf32>
    %288 = vector.extract_strided_slice %270 {offsets = [0, 128], sizes = [8, 128], strides = [1, 1]} : vector<8x1024xf32> to vector<8x128xf32>
    %289 = arith.maximumf %287, %288 : vector<8x128xf32>
    %290 = vector.extract_strided_slice %270 {offsets = [0, 256], sizes = [8, 128], strides = [1, 1]} : vector<8x1024xf32> to vector<8x128xf32>
    %291 = arith.maximumf %289, %290 : vector<8x128xf32>
    %292 = vector.extract_strided_slice %270 {offsets = [0, 384], sizes = [8, 128], strides = [1, 1]} : vector<8x1024xf32> to vector<8x128xf32>
    %293 = arith.maximumf %291, %292 : vector<8x128xf32>
    %294 = vector.extract_strided_slice %270 {offsets = [0, 512], sizes = [8, 128], strides = [1, 1]} : vector<8x1024xf32> to vector<8x128xf32>
    %295 = arith.maximumf %293, %294 : vector<8x128xf32>
    %296 = vector.extract_strided_slice %270 {offsets = [0, 640], sizes = [8, 128], strides = [1, 1]} : vector<8x1024xf32> to vector<8x128xf32>
    %297 = arith.maximumf %295, %296 : vector<8x128xf32>
    %298 = vector.extract_strided_slice %270 {offsets = [0, 768], sizes = [8, 128], strides = [1, 1]} : vector<8x1024xf32> to vector<8x128xf32>
    %299 = arith.maximumf %297, %298 : vector<8x128xf32>
    %300 = vector.extract_strided_slice %270 {offsets = [0, 896], sizes = [8, 128], strides = [1, 1]} : vector<8x1024xf32> to vector<8x128xf32>
    %301 = arith.maximumf %299, %300 : vector<8x128xf32>
    %c0_20 = arith.constant 0 : index
    %c0_21 = arith.constant 0 : index
    %302 = vector.load %arg6[%c0_20, %c0_21] : memref<8x128xf32, #tpu.memory_space<vmem>>, vector<8x128xf32>
    %303 = arith.maximumf %302, %301 : vector<8x128xf32>
    %304 = arith.subf %302, %303 : vector<8x128xf32>
    %305 = math.exp %304 : vector<8x128xf32>
    %c0_22 = arith.constant 0 : index
    %c0_23 = arith.constant 0 : index
    %306 = vector.load %arg7[%c0_22, %c0_23] : memref<8x128xf32, #tpu.memory_space<vmem>>, vector<8x128xf32>
    %307 = arith.mulf %305, %306 : vector<8x128xf32>
    %c0_24 = arith.constant 0 : index
    %c0_25 = arith.constant 0 : index
    %308 = vector.load %arg8[%c0_24, %c0_25] : memref<8x128xf32, #tpu.memory_space<vmem>>, vector<8x128xf32>
    %309 = arith.mulf %305, %308 : vector<8x128xf32>
    %c0_26 = arith.constant 0 : index
    %c0_27 = arith.constant 0 : index
    %310 = vector.load %arg9[%c0_26, %c0_27] : memref<8x128xf32, #tpu.memory_space<vmem>>, vector<8x128xf32>
    %311 = vector.extract_strided_slice %266 {offsets = [0, 0], sizes = [8, 128], strides = [1, 1]} : vector<8x1024xf32> to vector<8x128xf32>
    %312 = arith.subf %311, %303 : vector<8x128xf32>
    %313 = math.exp %312 : vector<8x128xf32>
    %314 = arith.addf %307, %313 : vector<8x128xf32>
    %315 = arith.mulf %311, %313 : vector<8x128xf32>
    %316 = arith.addf %309, %315 : vector<8x128xf32>
    %317 = arith.addf %310, %311 : vector<8x128xf32>
    %318 = vector.extract_strided_slice %266 {offsets = [0, 128], sizes = [8, 128], strides = [1, 1]} : vector<8x1024xf32> to vector<8x128xf32>
    %319 = arith.subf %318, %303 : vector<8x128xf32>
    %320 = math.exp %319 : vector<8x128xf32>
    %321 = arith.addf %314, %320 : vector<8x128xf32>
    %322 = arith.mulf %318, %320 : vector<8x128xf32>
    %323 = arith.addf %316, %322 : vector<8x128xf32>
    %324 = arith.addf %317, %318 : vector<8x128xf32>
    %325 = vector.extract_strided_slice %266 {offsets = [0, 256], sizes = [8, 128], strides = [1, 1]} : vector<8x1024xf32> to vector<8x128xf32>
    %326 = arith.subf %325, %303 : vector<8x128xf32>
    %327 = math.exp %326 : vector<8x128xf32>
    %328 = arith.addf %321, %327 : vector<8x128xf32>
    %329 = arith.mulf %325, %327 : vector<8x128xf32>
    %330 = arith.addf %323, %329 : vector<8x128xf32>
    %331 = arith.addf %324, %325 : vector<8x128xf32>
    %332 = vector.extract_strided_slice %266 {offsets = [0, 384], sizes = [8, 128], strides = [1, 1]} : vector<8x1024xf32> to vector<8x128xf32>
    %333 = arith.subf %332, %303 : vector<8x128xf32>
    %334 = math.exp %333 : vector<8x128xf32>
    %335 = arith.addf %328, %334 : vector<8x128xf32>
    %336 = arith.mulf %332, %334 : vector<8x128xf32>
    %337 = arith.addf %330, %336 : vector<8x128xf32>
    %338 = arith.addf %331, %332 : vector<8x128xf32>
    %339 = vector.extract_strided_slice %266 {offsets = [0, 512], sizes = [8, 128], strides = [1, 1]} : vector<8x1024xf32> to vector<8x128xf32>
    %340 = arith.subf %339, %303 : vector<8x128xf32>
    %341 = math.exp %340 : vector<8x128xf32>
    %342 = arith.addf %335, %341 : vector<8x128xf32>
    %343 = arith.mulf %339, %341 : vector<8x128xf32>
    %344 = arith.addf %337, %343 : vector<8x128xf32>
    %345 = arith.addf %338, %339 : vector<8x128xf32>
    %346 = vector.extract_strided_slice %266 {offsets = [0, 640], sizes = [8, 128], strides = [1, 1]} : vector<8x1024xf32> to vector<8x128xf32>
    %347 = arith.subf %346, %303 : vector<8x128xf32>
    %348 = math.exp %347 : vector<8x128xf32>
    %349 = arith.addf %342, %348 : vector<8x128xf32>
    %350 = arith.mulf %346, %348 : vector<8x128xf32>
    %351 = arith.addf %344, %350 : vector<8x128xf32>
    %352 = arith.addf %345, %346 : vector<8x128xf32>
    %353 = vector.extract_strided_slice %266 {offsets = [0, 768], sizes = [8, 128], strides = [1, 1]} : vector<8x1024xf32> to vector<8x128xf32>
    %354 = arith.subf %353, %303 : vector<8x128xf32>
    %355 = math.exp %354 : vector<8x128xf32>
    %356 = arith.addf %349, %355 : vector<8x128xf32>
    %357 = arith.mulf %353, %355 : vector<8x128xf32>
    %358 = arith.addf %351, %357 : vector<8x128xf32>
    %359 = arith.addf %352, %353 : vector<8x128xf32>
    %360 = vector.extract_strided_slice %266 {offsets = [0, 896], sizes = [8, 128], strides = [1, 1]} : vector<8x1024xf32> to vector<8x128xf32>
    %361 = arith.subf %360, %303 : vector<8x128xf32>
    %362 = math.exp %361 : vector<8x128xf32>
    %363 = arith.addf %356, %362 : vector<8x128xf32>
    %364 = arith.mulf %360, %362 : vector<8x128xf32>
    %365 = arith.addf %358, %364 : vector<8x128xf32>
    %366 = arith.addf %359, %360 : vector<8x128xf32>
    %367 = vector.extract_strided_slice %270 {offsets = [0, 0], sizes = [8, 128], strides = [1, 1]} : vector<8x1024xf32> to vector<8x128xf32>
    %368 = arith.subf %367, %303 : vector<8x128xf32>
    %369 = math.exp %368 : vector<8x128xf32>
    %370 = arith.addf %363, %369 : vector<8x128xf32>
    %371 = arith.mulf %367, %369 : vector<8x128xf32>
    %372 = arith.addf %365, %371 : vector<8x128xf32>
    %373 = arith.addf %366, %367 : vector<8x128xf32>
    %374 = vector.extract_strided_slice %270 {offsets = [0, 128], sizes = [8, 128], strides = [1, 1]} : vector<8x1024xf32> to vector<8x128xf32>
    %375 = arith.subf %374, %303 : vector<8x128xf32>
    %376 = math.exp %375 : vector<8x128xf32>
    %377 = arith.addf %370, %376 : vector<8x128xf32>
    %378 = arith.mulf %374, %376 : vector<8x128xf32>
    %379 = arith.addf %372, %378 : vector<8x128xf32>
    %380 = arith.addf %373, %374 : vector<8x128xf32>
    %381 = vector.extract_strided_slice %270 {offsets = [0, 256], sizes = [8, 128], strides = [1, 1]} : vector<8x1024xf32> to vector<8x128xf32>
    %382 = arith.subf %381, %303 : vector<8x128xf32>
    %383 = math.exp %382 : vector<8x128xf32>
    %384 = arith.addf %377, %383 : vector<8x128xf32>
    %385 = arith.mulf %381, %383 : vector<8x128xf32>
    %386 = arith.addf %379, %385 : vector<8x128xf32>
    %387 = arith.addf %380, %381 : vector<8x128xf32>
    %388 = vector.extract_strided_slice %270 {offsets = [0, 384], sizes = [8, 128], strides = [1, 1]} : vector<8x1024xf32> to vector<8x128xf32>
    %389 = arith.subf %388, %303 : vector<8x128xf32>
    %390 = math.exp %389 : vector<8x128xf32>
    %391 = arith.addf %384, %390 : vector<8x128xf32>
    %392 = arith.mulf %388, %390 : vector<8x128xf32>
    %393 = arith.addf %386, %392 : vector<8x128xf32>
    %394 = arith.addf %387, %388 : vector<8x128xf32>
    %395 = vector.extract_strided_slice %270 {offsets = [0, 512], sizes = [8, 128], strides = [1, 1]} : vector<8x1024xf32> to vector<8x128xf32>
    %396 = arith.subf %395, %303 : vector<8x128xf32>
    %397 = math.exp %396 : vector<8x128xf32>
    %398 = arith.addf %391, %397 : vector<8x128xf32>
    %399 = arith.mulf %395, %397 : vector<8x128xf32>
    %400 = arith.addf %393, %399 : vector<8x128xf32>
    %401 = arith.addf %394, %395 : vector<8x128xf32>
    %402 = vector.extract_strided_slice %270 {offsets = [0, 640], sizes = [8, 128], strides = [1, 1]} : vector<8x1024xf32> to vector<8x128xf32>
    %403 = arith.subf %402, %303 : vector<8x128xf32>
    %404 = math.exp %403 : vector<8x128xf32>
    %405 = arith.addf %398, %404 : vector<8x128xf32>
    %406 = arith.mulf %402, %404 : vector<8x128xf32>
    %407 = arith.addf %400, %406 : vector<8x128xf32>
    %408 = arith.addf %401, %402 : vector<8x128xf32>
    %409 = vector.extract_strided_slice %270 {offsets = [0, 768], sizes = [8, 128], strides = [1, 1]} : vector<8x1024xf32> to vector<8x128xf32>
    %410 = arith.subf %409, %303 : vector<8x128xf32>
    %411 = math.exp %410 : vector<8x128xf32>
    %412 = arith.addf %405, %411 : vector<8x128xf32>
    %413 = arith.mulf %409, %411 : vector<8x128xf32>
    %414 = arith.addf %407, %413 : vector<8x128xf32>
    %415 = arith.addf %408, %409 : vector<8x128xf32>
    %416 = vector.extract_strided_slice %270 {offsets = [0, 896], sizes = [8, 128], strides = [1, 1]} : vector<8x1024xf32> to vector<8x128xf32>
    %417 = arith.subf %416, %303 : vector<8x128xf32>
    %418 = math.exp %417 : vector<8x128xf32>
    %419 = arith.addf %412, %418 : vector<8x128xf32>
    %420 = arith.mulf %416, %418 : vector<8x128xf32>
    %421 = arith.addf %414, %420 : vector<8x128xf32>
    %422 = arith.addf %415, %416 : vector<8x128xf32>
    %c0_28 = arith.constant 0 : index
    %c0_29 = arith.constant 0 : index
    %423 = vector.load %arg6[%c0_28, %c0_29] : memref<8x128xf32, #tpu.memory_space<vmem>>, vector<8x128xf32>
    tpu.vector_store %arg6[%c0_28, %c0_29], %303 {strides = array<i32>} : memref<8x128xf32, #tpu.memory_space<vmem>>, vector<8x128xf32>,
    %c0_30 = arith.constant 0 : index
    %c0_31 = arith.constant 0 : index
    %424 = vector.load %arg7[%c0_30, %c0_31] : memref<8x128xf32, #tpu.memory_space<vmem>>, vector<8x128xf32>
    tpu.vector_store %arg7[%c0_30, %c0_31], %419 {strides = array<i32>} : memref<8x128xf32, #tpu.memory_space<vmem>>, vector<8x128xf32>,
    %c0_32 = arith.constant 0 : index
    %c0_33 = arith.constant 0 : index
    %425 = vector.load %arg8[%c0_32, %c0_33] : memref<8x128xf32, #tpu.memory_space<vmem>>, vector<8x128xf32>
    tpu.vector_store %arg8[%c0_32, %c0_33], %421 {strides = array<i32>} : memref<8x128xf32, #tpu.memory_space<vmem>>, vector<8x128xf32>,
    %c0_34 = arith.constant 0 : index
    %c0_35 = arith.constant 0 : index
    %426 = vector.load %arg9[%c0_34, %c0_35] : memref<8x128xf32, #tpu.memory_space<vmem>>, vector<8x128xf32>
    tpu.vector_store %arg9[%c0_34, %c0_35], %422 {strides = array<i32>} : memref<8x128xf32, #tpu.memory_space<vmem>>, vector<8x128xf32>,
    %c0_i32_36 = arith.constant 0 : i32
    %427 = arith.cmpi eq, %arg1, %c0_i32_36 : i32
    %428 = arith.extui %427 : i1 to i32
    %c0_i32_37 = arith.constant 0 : i32
    %429 = arith.cmpi ne, %428, %c0_i32_37 : i32
    scf.if %429 {
      %c0_38 = arith.constant 0 : index
      %c0_39 = arith.constant 0 : index
      %430 = vector.load %arg6[%c0_38, %c0_39] : memref<8x128xf32, #tpu.memory_space<vmem>>, vector<8x128xf32>
      %cst_40 = arith.constant dense<0xFF800000> : vector<8xf32>
      %431 = vector.multi_reduction <maximumf>, %430, %cst_40 [1] : vector<8x128xf32> to vector<8xf32>
      %432 = vector.shape_cast %431 : vector<8xf32> to vector<8x1xf32>
      %433 = vector.broadcast %432 : vector<8x1xf32> to vector<8x128xf32>
      %434 = arith.subf %430, %433 : vector<8x128xf32>
      %435 = math.exp %434 : vector<8x128xf32>
      %c0_41 = arith.constant 0 : index
      %c0_42 = arith.constant 0 : index
      %436 = vector.load %arg7[%c0_41, %c0_42] : memref<8x128xf32, #tpu.memory_space<vmem>>, vector<8x128xf32>
      %437 = arith.mulf %436, %435 : vector<8x128xf32>
      %cst_43 = arith.constant dense<0.000000e+00> : vector<8xf32>
      %438 = vector.multi_reduction <add>, %437, %cst_43 [1] : vector<8x128xf32> to vector<8xf32>
      %439 = vector.shape_cast %438 : vector<8xf32> to vector<8x1xf32>
      %c0_44 = arith.constant 0 : index
      %c0_45 = arith.constant 0 : index
      %440 = vector.load %arg8[%c0_44, %c0_45] : memref<8x128xf32, #tpu.memory_space<vmem>>, vector<8x128xf32>
      %441 = arith.mulf %440, %435 : vector<8x128xf32>
      %cst_46 = arith.constant dense<0.000000e+00> : vector<8xf32>
      %442 = vector.multi_reduction <add>, %441, %cst_46 [1] : vector<8x128xf32> to vector<8xf32>
      %443 = vector.shape_cast %442 : vector<8xf32> to vector<8x1xf32>
      %c0_47 = arith.constant 0 : index
      %c0_48 = arith.constant 0 : index
      %444 = vector.load %arg9[%c0_47, %c0_48] : memref<8x128xf32, #tpu.memory_space<vmem>>, vector<8x128xf32>
      %cst_49 = arith.constant dense<0.000000e+00> : vector<8xf32>
      %445 = vector.multi_reduction <add>, %444, %cst_49 [1] : vector<8x128xf32> to vector<8xf32>
      %446 = vector.shape_cast %445 : vector<8xf32> to vector<8x1xf32>
      %447 = tpu.reciprocal %439 {approx = true} : vector<8x1xf32> -> vector<8x1xf32>
      %448 = arith.mulf %443, %447 : vector<8x1xf32>
      %cst_50 = arith.constant 4.8828125E-4 : f32
      %449 = vector.broadcast %cst_50 : f32 to vector<8x1xf32>
      %450 = arith.mulf %446, %449 : vector<8x1xf32>
      %451 = arith.subf %448, %450 : vector<8x1xf32>
      %c0_51 = arith.constant 0 : index
      %c0_52 = arith.constant 0 : index
      %452 = vector.load %arg5[%c0_51, %c0_52] : memref<8x1xf32, #tpu.memory_space<vmem>>, vector<8x1xf32>
      tpu.vector_store %arg5[%c0_51, %c0_52], %451 {strides = array<i32>} : memref<8x1xf32, #tpu.memory_space<vmem>>, vector<8x1xf32>,
    } else {
    }
    return
  }
  func.func @transform_0(%arg0: i32, %arg1: i32) -> i32 {
    %c0_i32 = arith.constant 0 : i32
    %c0_i32_0 = arith.constant 0 : i32
    return %c0_i32 : i32
  }
  func.func @transform_1(%arg0: i32, %arg1: i32) -> i32 {
    %c0_i32 = arith.constant 0 : i32
    %c0_i32_0 = arith.constant 0 : i32
    return %c0_i32 : i32
  }
  func.func @transform_2(%arg0: i32, %arg1: i32) -> (i32, i32, i32, i32) {
    %c0_i32 = arith.constant 0 : i32
    %c0_i32_0 = arith.constant 0 : i32
    %c0_i32_1 = arith.constant 0 : i32
    return %arg1, %c0_i32, %arg0, %c0_i32_0 : i32, i32, i32, i32
  }
  func.func @transform_3(%arg0: i32, %arg1: i32) -> (i32, i32) {
    %c0_i32 = arith.constant 0 : i32
    %c0_i32_0 = arith.constant 0 : i32
    return %arg0, %c0_i32 : i32, i32
  }
}

</mosaic_0001>

<llo_original>
// kernel: profile_wrapper_forward.1
$region0: #{profile_wrapper_forward.1}
  #allocation0 [shape = 'u32[]', space=smem, size = 0x4, offset = 0x4, fixed_abs, tag = 'smem constant byte address 0x4 - core index']
  #allocation1 [shape = 'u32[144,128]{1,0:T(1,128)}', space=vmem, size = 0x12000, scoped, tag = 'internal scratch']
  #allocation2 [shape = 'f32[8,128]{1,0:T(8,128)}', space=vmem, size = 0x1000, scoped, tag = 'scratch operand']
  #allocation3 [shape = 'f32[8,128]{1,0:T(8,128)}', space=vmem, size = 0x1000, scoped, tag = 'scratch operand']
  #allocation4 [shape = 'f32[8,128]{1,0:T(8,128)}', space=vmem, size = 0x1000, scoped, tag = 'scratch operand']
  #allocation5 [shape = 'f32[8,128]{1,0:T(8,128)}', space=vmem, size = 0x1000, scoped, tag = 'scratch operand']
  %s0 = inlined_call_operand.vmem [shape: f32[56], index: 0, kind: input, shape index: {}]
  %s1 = inlined_call_operand.vmem [shape: f32[2], index: 1, kind: input, shape index: {}]
  %s2 = inlined_call_operand.vmem [shape: f32[1,4,8,1030], index: 2, kind: input, shape index: {}]
  %s3 = inlined_call_operand.vmem [shape: f32[8,1], index: 3, kind: output, shape index: {}]
  %s4 = sld [smem:[#allocation0]]
  $region38: #{profile_wrapper_forward.1} parent=0
    _
  %s6 = ssub.s32 1, %s4
  %s7 = scalar_select 0, %s6, %s4
  $region1: #{profile_wrapper_forward.1} parent=0
    #allocation6 [shape = 'u8[512]{0}', space=smem, size = 0x200, scoped, tag = 'input window, operand 0, single buffered']
    #allocation7 [shape = 's32[1]{0}', space=sflag, size = 0x4, scoped, tag = 'scoped memory for profile_wrapper_forward.1']
    #allocation8 [shape = 'u8[512]{0}', space=smem, size = 0x200, scoped, tag = 'input window, operand 1, single buffered']
    #allocation9 [shape = 's32[1]{0}', space=sflag, size = 0x4, scoped, tag = 'scoped memory for profile_wrapper_forward.1']
    %8 = vsyncpa [#allocation7], 0
    %9 = vsyncpa [#allocation9], 0
    // Predicated region
    $region2: #{profile_wrapper_forward.1} parent=1 // pred_check
      _
    $region3: #{profile_wrapper_forward.1} parent=1 // pred_check_branch
      %11 = sbr.rel (0) target = $region5
    $region4: #{profile_wrapper_forward.1} parent=1 // pred_region
      %s13 = ssub.s32 16, 16
      %14 = vsyncadd [#allocation7], %s13
      %s16 = sshll.u32 %s0, 4
      %s17 = int_to_ptr.vmem [resolvable:$true] %s16
      %19 = dma.vmem_to_smem %s17, 16, [#allocation6], [#allocation7]
    $region5: #{profile_wrapper_forward.1} parent=1 // pred_fallthru
      _
    // Predicated region
    $region6: #{profile_wrapper_forward.1} parent=1 // pred_check
      _
    $region7: #{profile_wrapper_forward.1} parent=1 // pred_check_branch
      %21 = sbr.rel (0) target = $region9
    $region8: #{profile_wrapper_forward.1} parent=1 // pred_region
      %s23 = ssub.s32 16, 16
      %24 = vsyncadd [#allocation9], %s23
      %s26 = sshll.u32 %s1, 4
      %s27 = int_to_ptr.vmem [resolvable:$true] %s26
      %29 = dma.vmem_to_smem %s27, 16, [#allocation8], [#allocation9]
    $region9: #{profile_wrapper_forward.1} parent=1 // pred_fallthru
      _
    // Predicated region
    $region10: #{profile_wrapper_forward.1} parent=1 // pred_check
      _
    $region11: #{profile_wrapper_forward.1} parent=1 // pred_check_branch
      %31 = sbr.rel (0) target = $region13
    $region12: #{profile_wrapper_forward.1} parent=1 // pred_region
      _
    $region13: #{profile_wrapper_forward.1} parent=1 // pred_fallthru
      _
    // Predicated region
    $region14: #{profile_wrapper_forward.1} parent=1 // pred_check
      _
    $region15: #{profile_wrapper_forward.1} parent=1 // pred_check_branch
      %33 = sbr.rel (0) target = $region17
    $region16: #{profile_wrapper_forward.1} parent=1 // pred_region
      %34 = dma.done [#allocation7], 16
    $region17: #{profile_wrapper_forward.1} parent=1 // pred_fallthru
      _
    // Predicated region
    $region18: #{profile_wrapper_forward.1} parent=1 // pred_check
      _
    $region19: #{profile_wrapper_forward.1} parent=1 // pred_check_branch
      %36 = sbr.rel (0) target = $region21
    $region20: #{profile_wrapper_forward.1} parent=1 // pred_region
      %37 = dma.done [#allocation9], 16
    $region21: #{profile_wrapper_forward.1} parent=1 // pred_fallthru
      _
    %38 = sfence
    %p39 = scmp.eq.s32.totalorder 0, 0
    // Predicated region
    $region22: #{profile_wrapper_forward.1} parent=1 // pred_check
      %p40 = pneg %p39
    $region23: #{profile_wrapper_forward.1} parent=1 // pred_check_branch
      %42 = sbr.rel (%p40) target = $region25
    $region24: #{profile_wrapper_forward.1} parent=1 // pred_region
      %43 = vst [vmem:[#allocation2] sm:$0xff] -1e+30
      %44 = vst [vmem:[#allocation3] sm:$0xff] 0.0
      %45 = vst [vmem:[#allocation4] sm:$0xff] 0.0
      %46 = vst [vmem:[#allocation5] sm:$0xff] 0.0
    $region25: #{profile_wrapper_forward.1} parent=1 // pred_fallthru
      _
    %s47 = sld [smem:[#allocation8]]
    %v48 = vstv %s47
    %v49 = vadd.f32 %v48, 0.0
    %s50 = sld [smem:[#allocation8 + $0x1]]
    %v51 = vstv %s50
    %v52 = vadd.f32 %v51, 0.0
    %v53 = vld [vmem:[%s2] sm:$0xff]
    %v54 = vld [vmem:[%s2 + $0x8] sm:$0xff]
    %v55 = vld [vmem:[%s2 + $0x10] sm:$0xff]
    %v56 = vld [vmem:[%s2 + $0x18] sm:$0xff]
    %v57 = vld [vmem:[%s2 + $0x20] sm:$0xff]
    %v58 = vld [vmem:[%s2 + $0x28] sm:$0xff]
    %v59 = vld [vmem:[%s2 + $0x30] sm:$0xff]
    %v60 = vld [vmem:[%s2 + $0x38] sm:$0xff]
    %v61 = vld [vmem:[%s2 + $0x40] sm:$0xff]
    %s62 = sld [smem:[#allocation6]]
    %v63 = vstv %s62
    %v64 = vmul.f32 %v63, %v53
    %v65 = vmul.f32 %v63, %v54
    %v66 = vmul.f32 %v63, %v55
    %v67 = vmul.f32 %v63, %v56
    %v68 = vmul.f32 %v63, %v57
    %v69 = vmul.f32 %v63, %v58
    %v70 = vmul.f32 %v63, %v59
    %v71 = vmul.f32 %v63, %v60
    %v72 = vadd.f32 %v49, %v64
    %v73 = vadd.f32 %v49, %v65
    %v74 = vadd.f32 %v49, %v66
    %v75 = vadd.f32 %v49, %v67
    %v76 = vadd.f32 %v49, %v68
    %v77 = vadd.f32 %v49, %v69
    %v78 = vadd.f32 %v49, %v70
    %v79 = vadd.f32 %v49, %v71
    %s80 = sld [smem:[#allocation6 + $0x1c]]
    %v81 = vstv %s80
    %v82 = vmul.f32 %v81, %v53
    %v83 = vmul.f32 %v81, %v54
    %v84 = vmul.f32 %v81, %v55
    %v85 = vmul.f32 %v81, %v56
    %v86 = vmul.f32 %v81, %v57
    %v87 = vmul.f32 %v81, %v58
    %v88 = vmul.f32 %v81, %v59
    %v89 = vmul.f32 %v81, %v60
    %v90 = vadd.f32 %v52, %v82
    %v91 = vadd.f32 %v52, %v83
    %v92 = vadd.f32 %v52, %v84
    %v93 = vadd.f32 %v52, %v85
    %v94 = vadd.f32 %v52, %v86
    %v95 = vadd.f32 %v52, %v87
    %v96 = vadd.f32 %v52, %v88
    %v97 = vadd.f32 %v52, %v89
    %s98 = sld [smem:[#allocation6 + $0x1]]
    %v99 = vstv %s98
    %v100 = vmul.f32 %v99, %v53
    %v101 = vmul.f32 %v99, %v54
    %v102 = vmul.f32 %v99, %v55
    %v103 = vmul.f32 %v99, %v56
    %v104 = vmul.f32 %v99, %v57
    %v105 = vmul.f32 %v99, %v58
    %v106 = vmul.f32 %v99, %v59
    %v107 = vmul.f32 %v99, %v60
    %v108 = vmul.f32 %v99, %v61
    %118 = vrot.lane.b32.xlu0 %v100, 127
    %v119 = vpop.permute.xlu0 %118
    %120 = vrot.lane.b32.xlu0 %v101, 127
    %v121 = vpop.permute.xlu0 %120
    %122 = vrot.lane.b32.xlu0 %v102, 127
    %v123 = vpop.permute.xlu0 %122
    %124 = vrot.lane.b32.xlu0 %v103, 127
    %v125 = vpop.permute.xlu0 %124
    %126 = vrot.lane.b32.xlu0 %v104, 127
    %v127 = vpop.permute.xlu0 %126
    %128 = vrot.lane.b32.xlu0 %v105, 127
    %v129 = vpop.permute.xlu0 %128
    %130 = vrot.lane.b32.xlu0 %v106, 127
    %v131 = vpop.permute.xlu0 %130
    %132 = vrot.lane.b32.xlu0 %v107, 127
    %v133 = vpop.permute.xlu0 %132
    %134 = vrot.lane.b32.xlu0 %v108, 127
    %v135 = vpop.permute.xlu0 %134
    %vm136 = vcmask 1039360
    %v137 = vsel %vm136, %v119, %v121
    %v138 = vsel %vm136, %v121, %v123
    %v139 = vsel %vm136, %v123, %v125
    %v140 = vsel %vm136, %v125, %v127
    %v141 = vsel %vm136, %v127, %v129
    %v142 = vsel %vm136, %v129, %v131
    %v143 = vsel %vm136, %v131, %v133
    %v144 = vsel %vm136, %v133, %v135
    %v153 = vadd.f32 %v72, %v137
    %v154 = vadd.f32 %v73, %v138
    %v155 = vadd.f32 %v74, %v139
    %v156 = vadd.f32 %v75, %v140
    %v157 = vadd.f32 %v76, %v141
    %v158 = vadd.f32 %v77, %v142
    %v159 = vadd.f32 %v78, %v143
    %v160 = vadd.f32 %v79, %v144
    %s161 = sld [smem:[#allocation6 + $0x1d]]
    %v162 = vstv %s161
    %v163 = vmul.f32 %v162, %v53
    %v164 = vmul.f32 %v162, %v54
    %v165 = vmul.f32 %v162, %v55
    %v166 = vmul.f32 %v162, %v56
    %v167 = vmul.f32 %v162, %v57
    %v168 = vmul.f32 %v162, %v58
    %v169 = vmul.f32 %v162, %v59
    %v170 = vmul.f32 %v162, %v60
    %v171 = vmul.f32 %v162, %v61
    %181 = vrot.lane.b32.xlu0 %v163, 127
    %v182 = vpop.permute.xlu0 %181
    %183 = vrot.lane.b32.xlu0 %v164, 127
    %v184 = vpop.permute.xlu0 %183
    %185 = vrot.lane.b32.xlu0 %v165, 127
    %v186 = vpop.permute.xlu0 %185
    %187 = vrot.lane.b32.xlu0 %v166, 127
    %v188 = vpop.permute.xlu0 %187
    %189 = vrot.lane.b32.xlu0 %v167, 127
    %v190 = vpop.permute.xlu0 %189
    %191 = vrot.lane.b32.xlu0 %v168, 127
    %v192 = vpop.permute.xlu0 %191
    %193 = vrot.lane.b32.xlu0 %v169, 127
    %v194 = vpop.permute.xlu0 %193
    %195 = vrot.lane.b32.xlu0 %v170, 127
    %v196 = vpop.permute.xlu0 %195
    %197 = vrot.lane.b32.xlu0 %v171, 127
    %v198 = vpop.permute.xlu0 %197
    %v199 = vsel %vm136, %v182, %v184
    %v200 = vsel %vm136, %v184, %v186
    %v201 = vsel %vm136, %v186, %v188
    %v202 = vsel %vm136, %v188, %v190
    %v203 = vsel %vm136, %v190, %v192
    %v204 = vsel %vm136, %v192, %v194
    %v205 = vsel %vm136, %v194, %v196
    %v206 = vsel %vm136, %v196, %v198
    %v215 = vadd.f32 %v90, %v199
    %v216 = vadd.f32 %v91, %v200
    %v217 = vadd.f32 %v92, %v201
    %v218 = vadd.f32 %v93, %v202
    %v219 = vadd.f32 %v94, %v203
    %v220 = vadd.f32 %v95, %v204
    %v221 = vadd.f32 %v96, %v205
    %v222 = vadd.f32 %v97, %v206
    %s223 = sld [smem:[#allocation6 + $0x2]]
    %v224 = vstv %s223
    %v225 = vmul.f32 %v224, %v53
    %v226 = vmul.f32 %v224, %v54
    %v227 = vmul.f32 %v224, %v55
    %v228 = vmul.f32 %v224, %v56
    %v229 = vmul.f32 %v224, %v57
    %v230 = vmul.f32 %v224, %v58
    %v231 = vmul.f32 %v224, %v59
    %v232 = vmul.f32 %v224, %v60
    %v233 = vmul.f32 %v224, %v61
    %243 = vrot.lane.b32.xlu0 %v225, 126
    %v244 = vpop.permute.xlu0 %243
    %245 = vrot.lane.b32.xlu0 %v226, 126
    %v246 = vpop.permute.xlu0 %245
    %247 = vrot.lane.b32.xlu0 %v227, 126
    %v248 = vpop.permute.xlu0 %247
    %249 = vrot.lane.b32.xlu0 %v228, 126
    %v250 = vpop.permute.xlu0 %249
    %251 = vrot.lane.b32.xlu0 %v229, 126
    %v252 = vpop.permute.xlu0 %251
    %253 = vrot.lane.b32.xlu0 %v230, 126
    %v254 = vpop.permute.xlu0 %253
    %255 = vrot.lane.b32.xlu0 %v231, 126
    %v256 = vpop.permute.xlu0 %255
    %257 = vrot.lane.b32.xlu0 %v232, 126
    %v258 = vpop.permute.xlu0 %257
    %259 = vrot.lane.b32.xlu0 %v233, 126
    %v260 = vpop.permute.xlu0 %259
    %vm261 = vcmask 1031168
    %v262 = vsel %vm261, %v244, %v246
    %v263 = vsel %vm261, %v246, %v248
    %v264 = vsel %vm261, %v248, %v250
    %v265 = vsel %vm261, %v250, %v252
    %v266 = vsel %vm261, %v252, %v254
    %v267 = vsel %vm261, %v254, %v256
    %v268 = vsel %vm261, %v256, %v258
    %v269 = vsel %vm261, %v258, %v260
    %v278 = vadd.f32 %v153, %v262
    %v279 = vadd.f32 %v154, %v263
    %v280 = vadd.f32 %v155, %v264
    %v281 = vadd.f32 %v156, %v265
    %v282 = vadd.f32 %v157, %v266
    %v283 = vadd.f32 %v158, %v267
    %v284 = vadd.f32 %v159, %v268
    %v285 = vadd.f32 %v160, %v269
    %s286 = sld [smem:[#allocation6 + $0x1e]]
    %v287 = vstv %s286
    %v288 = vmul.f32 %v287, %v53
    %v289 = vmul.f32 %v287, %v54
    %v290 = vmul.f32 %v287, %v55
    %v291 = vmul.f32 %v287, %v56
    %v292 = vmul.f32 %v287, %v57
    %v293 = vmul.f32 %v287, %v58
    %v294 = vmul.f32 %v287, %v59
    %v295 = vmul.f32 %v287, %v60
    %v296 = vmul.f32 %v287, %v61
    %306 = vrot.lane.b32.xlu0 %v288, 126
    %v307 = vpop.permute.xlu0 %306
    %308 = vrot.lane.b32.xlu0 %v289, 126
    %v309 = vpop.permute.xlu0 %308
    %310 = vrot.lane.b32.xlu0 %v290, 126
    %v311 = vpop.permute.xlu0 %310
    %312 = vrot.lane.b32.xlu0 %v291, 126
    %v313 = vpop.permute.xlu0 %312
    %314 = vrot.lane.b32.xlu0 %v292, 126
    %v315 = vpop.permute.xlu0 %314
    %316 = vrot.lane.b32.xlu0 %v293, 126
    %v317 = vpop.permute.xlu0 %316
    %318 = vrot.lane.b32.xlu0 %v294, 126
    %v319 = vpop.permute.xlu0 %318
    %320 = vrot.lane.b32.xlu0 %v295, 126
    %v321 = vpop.permute.xlu0 %320
    %322 = vrot.lane.b32.xlu0 %v296, 126
    %v323 = vpop.permute.xlu0 %322
    %v324 = vsel %vm261, %v307, %v309
    %v325 = vsel %vm261, %v309, %v311
    %v326 = vsel %vm261, %v311, %v313
    %v327 = vsel %vm261, %v313, %v315
    %v328 = vsel %vm261, %v315, %v317
    %v329 = vsel %vm261, %v317, %v319
    %v330 = vsel %vm261, %v319, %v321
    %v331 = vsel %vm261, %v321, %v323
    %v340 = vadd.f32 %v215, %v324
    %v341 = vadd.f32 %v216, %v325
    %v342 = vadd.f32 %v217, %v326
    %v343 = vadd.f32 %v218, %v327
    %v344 = vadd.f32 %v219, %v328
    %v345 = vadd.f32 %v220, %v329
    %v346 = vadd.f32 %v221, %v330
    %v347 = vadd.f32 %v222, %v331
    %s348 = sld [smem:[#allocation6 + $0x3]]
    %v349 = vstv %s348
    %v350 = vmul.f32 %v349, %v53
    %v351 = vmul.f32 %v349, %v54
    %v352 = vmul.f32 %v349, %v55
    %v353 = vmul.f32 %v349, %v56
    %v354 = vmul.f32 %v349, %v57
    %v355 = vmul.f32 %v349, %v58
    %v356 = vmul.f32 %v349, %v59
    %v357 = vmul.f32 %v349, %v60
    %v358 = vmul.f32 %v349, %v61
    %368 = vrot.lane.b32.xlu0 %v350, 125
    %v369 = vpop.permute.xlu0 %368
    %370 = vrot.lane.b32.xlu0 %v351, 125
    %v371 = vpop.permute.xlu0 %370
    %372 = vrot.lane.b32.xlu0 %v352, 125
    %v373 = vpop.permute.xlu0 %372
    %374 = vrot.lane.b32.xlu0 %v353, 125
    %v375 = vpop.permute.xlu0 %374
    %376 = vrot.lane.b32.xlu0 %v354, 125
    %v377 = vpop.permute.xlu0 %376
    %378 = vrot.lane.b32.xlu0 %v355, 125
    %v379 = vpop.permute.xlu0 %378
    %380 = vrot.lane.b32.xlu0 %v356, 125
    %v381 = vpop.permute.xlu0 %380
    %382 = vrot.lane.b32.xlu0 %v357, 125
    %v383 = vpop.permute.xlu0 %382
    %384 = vrot.lane.b32.xlu0 %v358, 125
    %v385 = vpop.permute.xlu0 %384
    %vm386 = vcmask 1022976
    %v387 = vsel %vm386, %v369, %v371
    %v388 = vsel %vm386, %v371, %v373
    %v389 = vsel %vm386, %v373, %v375
    %v390 = vsel %vm386, %v375, %v377
    %v391 = vsel %vm386, %v377, %v379
    %v392 = vsel %vm386, %v379, %v381
    %v393 = vsel %vm386, %v381, %v383
    %v394 = vsel %vm386, %v383, %v385
    %v403 = vadd.f32 %v278, %v387
    %v404 = vadd.f32 %v279, %v388
    %v405 = vadd.f32 %v280, %v389
    %v406 = vadd.f32 %v281, %v390
    %v407 = vadd.f32 %v282, %v391
    %v408 = vadd.f32 %v283, %v392
    %v409 = vadd.f32 %v284, %v393
    %v410 = vadd.f32 %v285, %v394
    %s411 = sld [smem:[#allocation6 + $0x1f]]
    %v412 = vstv %s411
    %v413 = vmul.f32 %v412, %v53
    %v414 = vmul.f32 %v412, %v54
    %v415 = vmul.f32 %v412, %v55
    %v416 = vmul.f32 %v412, %v56
    %v417 = vmul.f32 %v412, %v57
    %v418 = vmul.f32 %v412, %v58
    %v419 = vmul.f32 %v412, %v59
    %v420 = vmul.f32 %v412, %v60
    %v421 = vmul.f32 %v412, %v61
    %431 = vrot.lane.b32.xlu0 %v413, 125
    %v432 = vpop.permute.xlu0 %431
    %433 = vrot.lane.b32.xlu0 %v414, 125
    %v434 = vpop.permute.xlu0 %433
    %435 = vrot.lane.b32.xlu0 %v415, 125
    %v436 = vpop.permute.xlu0 %435
    %437 = vrot.lane.b32.xlu0 %v416, 125
    %v438 = vpop.permute.xlu0 %437
    %439 = vrot.lane.b32.xlu0 %v417, 125
    %v440 = vpop.permute.xlu0 %439
    %441 = vrot.lane.b32.xlu0 %v418, 125
    %v442 = vpop.permute.xlu0 %441
    %443 = vrot.lane.b32.xlu0 %v419, 125
    %v444 = vpop.permute.xlu0 %443
    %445 = vrot.lane.b32.xlu0 %v420, 125
    %v446 = vpop.permute.xlu0 %445
    %447 = vrot.lane.b32.xlu0 %v421, 125
    %v448 = vpop.permute.xlu0 %447
    %v449 = vsel %vm386, %v432, %v434
    %v450 = vsel %vm386, %v434, %v436
    %v451 = vsel %vm386, %v436, %v438
    %v452 = vsel %vm386, %v438, %v440
    %v453 = vsel %vm386, %v440, %v442
    %v454 = vsel %vm386, %v442, %v444
    %v455 = vsel %vm386, %v444, %v446
    %v456 = vsel %vm386, %v446, %v448
    %v465 = vadd.f32 %v340, %v449
    %v466 = vadd.f32 %v341, %v450
    %v467 = vadd.f32 %v342, %v451
    %v468 = vadd.f32 %v343, %v452
    %v469 = vadd.f32 %v344, %v453
    %v470 = vadd.f32 %v345, %v454
    %v471 = vadd.f32 %v346, %v455
    %v472 = vadd.f32 %v347, %v456
    %s473 = sld [smem:[#allocation6 + $0x4]]
    %v474 = vstv %s473
    %v475 = vmul.f32 %v474, %v53
    %v476 = vmul.f32 %v474, %v54
    %v477 = vmul.f32 %v474, %v55
    %v478 = vmul.f32 %v474, %v56
    %v479 = vmul.f32 %v474, %v57
    %v480 = vmul.f32 %v474, %v58
    %v481 = vmul.f32 %v474, %v59
    %v482 = vmul.f32 %v474, %v60
    %v483 = vmul.f32 %v474, %v61
    %493 = vrot.lane.b32.xlu0 %v475, 124
    %v494 = vpop.permute.xlu0 %493
    %495 = vrot.lane.b32.xlu0 %v476, 124
    %v496 = vpop.permute.xlu0 %495
    %497 = vrot.lane.b32.xlu0 %v477, 124
    %v498 = vpop.permute.xlu0 %497
    %499 = vrot.lane.b32.xlu0 %v478, 124
    %v500 = vpop.permute.xlu0 %499
    %501 = vrot.lane.b32.xlu0 %v479, 124
    %v502 = vpop.permute.xlu0 %501
    %503 = vrot.lane.b32.xlu0 %v480, 124
    %v504 = vpop.permute.xlu0 %503
    %505 = vrot.lane.b32.xlu0 %v481, 124
    %v506 = vpop.permute.xlu0 %505
    %507 = vrot.lane.b32.xlu0 %v482, 124
    %v508 = vpop.permute.xlu0 %507
    %509 = vrot.lane.b32.xlu0 %v483, 124
    %v510 = vpop.permute.xlu0 %509
    %vm511 = vcmask 1014784
    %v512 = vsel %vm511, %v494, %v496
    %v513 = vsel %vm511, %v496, %v498
    %v514 = vsel %vm511, %v498, %v500
    %v515 = vsel %vm511, %v500, %v502
    %v516 = vsel %vm511, %v502, %v504
    %v517 = vsel %vm511, %v504, %v506
    %v518 = vsel %vm511, %v506, %v508
    %v519 = vsel %vm511, %v508, %v510
    %v528 = vadd.f32 %v403, %v512
    %v529 = vadd.f32 %v404, %v513
    %v530 = vadd.f32 %v405, %v514
    %v531 = vadd.f32 %v406, %v515
    %v532 = vadd.f32 %v407, %v516
    %v533 = vadd.f32 %v408, %v517
    %v534 = vadd.f32 %v409, %v518
    %v535 = vadd.f32 %v410, %v519
    %s536 = sld [smem:[#allocation6 + $0x20]]
    %v537 = vstv %s536
    %v538 = vmul.f32 %v537, %v53
    %v539 = vmul.f32 %v537, %v54
    %v540 = vmul.f32 %v537, %v55
    %v541 = vmul.f32 %v537, %v56
    %v542 = vmul.f32 %v537, %v57
    %v543 = vmul.f32 %v537, %v58
    %v544 = vmul.f32 %v537, %v59
    %v545 = vmul.f32 %v537, %v60
    %v546 = vmul.f32 %v537, %v61
    %556 = vrot.lane.b32.xlu0 %v538, 124
    %v557 = vpop.permute.xlu0 %556
    %558 = vrot.lane.b32.xlu0 %v539, 124
    %v559 = vpop.permute.xlu0 %558
    %560 = vrot.lane.b32.xlu0 %v540, 124
    %v561 = vpop.permute.xlu0 %560
    %562 = vrot.lane.b32.xlu0 %v541, 124
    %v563 = vpop.permute.xlu0 %562
    %564 = vrot.lane.b32.xlu0 %v542, 124
    %v565 = vpop.permute.xlu0 %564
    %566 = vrot.lane.b32.xlu0 %v543, 124
    %v567 = vpop.permute.xlu0 %566
    %568 = vrot.lane.b32.xlu0 %v544, 124
    %v569 = vpop.permute.xlu0 %568
    %570 = vrot.lane.b32.xlu0 %v545, 124
    %v571 = vpop.permute.xlu0 %570
    %572 = vrot.lane.b32.xlu0 %v546, 124
    %v573 = vpop.permute.xlu0 %572
    %v574 = vsel %vm511, %v557, %v559
    %v575 = vsel %vm511, %v559, %v561
    %v576 = vsel %vm511, %v561, %v563
    %v577 = vsel %vm511, %v563, %v565
    %v578 = vsel %vm511, %v565, %v567
    %v579 = vsel %vm511, %v567, %v569
    %v580 = vsel %vm511, %v569, %v571
    %v581 = vsel %vm511, %v571, %v573
    %v590 = vadd.f32 %v465, %v574
    %v591 = vadd.f32 %v466, %v575
    %v592 = vadd.f32 %v467, %v576
    %v593 = vadd.f32 %v468, %v577
    %v594 = vadd.f32 %v469, %v578
    %v595 = vadd.f32 %v470, %v579
    %v596 = vadd.f32 %v471, %v580
    %v597 = vadd.f32 %v472, %v581
    %s598 = sld [smem:[#allocation6 + $0x5]]
    %v599 = vstv %s598
    %v600 = vmul.f32 %v599, %v53
    %v601 = vmul.f32 %v599, %v54
    %v602 = vmul.f32 %v599, %v55
    %v603 = vmul.f32 %v599, %v56
    %v604 = vmul.f32 %v599, %v57
    %v605 = vmul.f32 %v599, %v58
    %v606 = vmul.f32 %v599, %v59
    %v607 = vmul.f32 %v599, %v60
    %v608 = vmul.f32 %v599, %v61
    %618 = vrot.lane.b32.xlu0 %v600, 123
    %v619 = vpop.permute.xlu0 %618
    %620 = vrot.lane.b32.xlu0 %v601, 123
    %v621 = vpop.permute.xlu0 %620
    %622 = vrot.lane.b32.xlu0 %v602, 123
    %v623 = vpop.permute.xlu0 %622
    %624 = vrot.lane.b32.xlu0 %v603, 123
    %v625 = vpop.permute.xlu0 %624
    %626 = vrot.lane.b32.xlu0 %v604, 123
    %v627 = vpop.permute.xlu0 %626
    %628 = vrot.lane.b32.xlu0 %v605, 123
    %v629 = vpop.permute.xlu0 %628
    %630 = vrot.lane.b32.xlu0 %v606, 123
    %v631 = vpop.permute.xlu0 %630
    %632 = vrot.lane.b32.xlu0 %v607, 123
    %v633 = vpop.permute.xlu0 %632
    %634 = vrot.lane.b32.xlu0 %v608, 123
    %v635 = vpop.permute.xlu0 %634
    %vm636 = vcmask 1006592
    %v637 = vsel %vm636, %v619, %v621
    %v638 = vsel %vm636, %v621, %v623
    %v639 = vsel %vm636, %v623, %v625
    %v640 = vsel %vm636, %v625, %v627
    %v641 = vsel %vm636, %v627, %v629
    %v642 = vsel %vm636, %v629, %v631
    %v643 = vsel %vm636, %v631, %v633
    %v644 = vsel %vm636, %v633, %v635
    %v653 = vadd.f32 %v528, %v637
    %v654 = vadd.f32 %v529, %v638
    %v655 = vadd.f32 %v530, %v639
    %v656 = vadd.f32 %v531, %v640
    %v657 = vadd.f32 %v532, %v641
    %v658 = vadd.f32 %v533, %v642
    %v659 = vadd.f32 %v534, %v643
    %v660 = vadd.f32 %v535, %v644
    %s661 = sld [smem:[#allocation6 + $0x21]]
    %v662 = vstv %s661
    %v663 = vmul.f32 %v662, %v53
    %v664 = vmul.f32 %v662, %v54
    %v665 = vmul.f32 %v662, %v55
    %v666 = vmul.f32 %v662, %v56
    %v667 = vmul.f32 %v662, %v57
    %v668 = vmul.f32 %v662, %v58
    %v669 = vmul.f32 %v662, %v59
    %v670 = vmul.f32 %v662, %v60
    %v671 = vmul.f32 %v662, %v61
    %681 = vrot.lane.b32.xlu0 %v663, 123
    %v682 = vpop.permute.xlu0 %681
    %683 = vrot.lane.b32.xlu0 %v664, 123
    %v684 = vpop.permute.xlu0 %683
    %685 = vrot.lane.b32.xlu0 %v665, 123
    %v686 = vpop.permute.xlu0 %685
    %687 = vrot.lane.b32.xlu0 %v666, 123
    %v688 = vpop.permute.xlu0 %687
    %689 = vrot.lane.b32.xlu0 %v667, 123
    %v690 = vpop.permute.xlu0 %689
    %691 = vrot.lane.b32.xlu0 %v668, 123
    %v692 = vpop.permute.xlu0 %691
    %693 = vrot.lane.b32.xlu0 %v669, 123
    %v694 = vpop.permute.xlu0 %693
    %695 = vrot.lane.b32.xlu0 %v670, 123
    %v696 = vpop.permute.xlu0 %695
    %697 = vrot.lane.b32.xlu0 %v671, 123
    %v698 = vpop.permute.xlu0 %697
    %v699 = vsel %vm636, %v682, %v684
    %v700 = vsel %vm636, %v684, %v686
    %v701 = vsel %vm636, %v686, %v688
    %v702 = vsel %vm636, %v688, %v690
    %v703 = vsel %vm636, %v690, %v692
    %v704 = vsel %vm636, %v692, %v694
    %v705 = vsel %vm636, %v694, %v696
    %v706 = vsel %vm636, %v696, %v698
    %v715 = vadd.f32 %v590, %v699
    %v716 = vadd.f32 %v591, %v700
    %v717 = vadd.f32 %v592, %v701
    %v718 = vadd.f32 %v593, %v702
    %v719 = vadd.f32 %v594, %v703
    %v720 = vadd.f32 %v595, %v704
    %v721 = vadd.f32 %v596, %v705
    %v722 = vadd.f32 %v597, %v706
    %s723 = sld [smem:[#allocation6 + $0x6]]
    %v724 = vstv %s723
    %v725 = vmul.f32 %v724, %v53
    %v726 = vmul.f32 %v724, %v54
    %v727 = vmul.f32 %v724, %v55
    %v728 = vmul.f32 %v724, %v56
    %v729 = vmul.f32 %v724, %v57
    %v730 = vmul.f32 %v724, %v58
    %v731 = vmul.f32 %v724, %v59
    %v732 = vmul.f32 %v724, %v60
    %v733 = vmul.f32 %v724, %v61
    %743 = vrot.lane.b32.xlu0 %v725, 122
    %v744 = vpop.permute.xlu0 %743
    %745 = vrot.lane.b32.xlu0 %v726, 122
    %v746 = vpop.permute.xlu0 %745
    %747 = vrot.lane.b32.xlu0 %v727, 122
    %v748 = vpop.permute.xlu0 %747
    %749 = vrot.lane.b32.xlu0 %v728, 122
    %v750 = vpop.permute.xlu0 %749
    %751 = vrot.lane.b32.xlu0 %v729, 122
    %v752 = vpop.permute.xlu0 %751
    %753 = vrot.lane.b32.xlu0 %v730, 122
    %v754 = vpop.permute.xlu0 %753
    %755 = vrot.lane.b32.xlu0 %v731, 122
    %v756 = vpop.permute.xlu0 %755
    %757 = vrot.lane.b32.xlu0 %v732, 122
    %v758 = vpop.permute.xlu0 %757
    %759 = vrot.lane.b32.xlu0 %v733, 122
    %v760 = vpop.permute.xlu0 %759
    %vm761 = vcmask 998400
    %v762 = vsel %vm761, %v744, %v746
    %v763 = vsel %vm761, %v746, %v748
    %v764 = vsel %vm761, %v748, %v750
    %v765 = vsel %vm761, %v750, %v752
    %v766 = vsel %vm761, %v752, %v754
    %v767 = vsel %vm761, %v754, %v756
    %v768 = vsel %vm761, %v756, %v758
    %v769 = vsel %vm761, %v758, %v760
    %v778 = vadd.f32 %v653, %v762
    %v779 = vadd.f32 %v654, %v763
    %v780 = vadd.f32 %v655, %v764
    %v781 = vadd.f32 %v656, %v765
    %v782 = vadd.f32 %v657, %v766
    %v783 = vadd.f32 %v658, %v767
    %v784 = vadd.f32 %v659, %v768
    %v785 = vadd.f32 %v660, %v769
    %s786 = sld [smem:[#allocation6 + $0x22]]
    %v787 = vstv %s786
    %v788 = vmul.f32 %v787, %v53
    %v789 = vmul.f32 %v787, %v54
    %v790 = vmul.f32 %v787, %v55
    %v791 = vmul.f32 %v787, %v56
    %v792 = vmul.f32 %v787, %v57
    %v793 = vmul.f32 %v787, %v58
    %v794 = vmul.f32 %v787, %v59
    %v795 = vmul.f32 %v787, %v60
    %v796 = vmul.f32 %v787, %v61
    %806 = vrot.lane.b32.xlu0 %v788, 122
    %v807 = vpop.permute.xlu0 %806
    %808 = vrot.lane.b32.xlu0 %v789, 122
    %v809 = vpop.permute.xlu0 %808
    %810 = vrot.lane.b32.xlu0 %v790, 122
    %v811 = vpop.permute.xlu0 %810
    %812 = vrot.lane.b32.xlu0 %v791, 122
    %v813 = vpop.permute.xlu0 %812
    %814 = vrot.lane.b32.xlu0 %v792, 122
    %v815 = vpop.permute.xlu0 %814
    %816 = vrot.lane.b32.xlu0 %v793, 122
    %v817 = vpop.permute.xlu0 %816
    %818 = vrot.lane.b32.xlu0 %v794, 122
    %v819 = vpop.permute.xlu0 %818
    %820 = vrot.lane.b32.xlu0 %v795, 122
    %v821 = vpop.permute.xlu0 %820
    %822 = vrot.lane.b32.xlu0 %v796, 122
    %v823 = vpop.permute.xlu0 %822
    %v824 = vsel %vm761, %v807, %v809
    %v825 = vsel %vm761, %v809, %v811
    %v826 = vsel %vm761, %v811, %v813
    %v827 = vsel %vm761, %v813, %v815
    %v828 = vsel %vm761, %v815, %v817
    %v829 = vsel %vm761, %v817, %v819
    %v830 = vsel %vm761, %v819, %v821
    %v831 = vsel %vm761, %v821, %v823
    %v840 = vadd.f32 %v715, %v824
    %v841 = vadd.f32 %v716, %v825
    %v842 = vadd.f32 %v717, %v826
    %v843 = vadd.f32 %v718, %v827
    %v844 = vadd.f32 %v719, %v828
    %v845 = vadd.f32 %v720, %v829
    %v846 = vadd.f32 %v721, %v830
    %v847 = vadd.f32 %v722, %v831
    %s848 = scalar_lea.vmem %s2, 72
    %v849 = vld [vmem:[%s848] sm:$0xff]
    %v850 = vld [vmem:[%s848 + $0x8] sm:$0xff]
    %v851 = vld [vmem:[%s848 + $0x10] sm:$0xff]
    %v852 = vld [vmem:[%s848 + $0x18] sm:$0xff]
    %v853 = vld [vmem:[%s848 + $0x20] sm:$0xff]
    %v854 = vld [vmem:[%s848 + $0x28] sm:$0xff]
    %v855 = vld [vmem:[%s848 + $0x30] sm:$0xff]
    %v856 = vld [vmem:[%s848 + $0x38] sm:$0xff]
    %v857 = vld [vmem:[%s848 + $0x40] sm:$0xff]
    %s858 = sld [smem:[#allocation6 + $0x7]]
    %v859 = vstv %s858
    %v860 = vmul.f32 %v859, %v849
    %v861 = vmul.f32 %v859, %v850
    %v862 = vmul.f32 %v859, %v851
    %v863 = vmul.f32 %v859, %v852
    %v864 = vmul.f32 %v859, %v853
    %v865 = vmul.f32 %v859, %v854
    %v866 = vmul.f32 %v859, %v855
    %v867 = vmul.f32 %v859, %v856
    %v868 = vadd.f32 %v778, %v860
    %v869 = vadd.f32 %v779, %v861
    %v870 = vadd.f32 %v780, %v862
    %v871 = vadd.f32 %v781, %v863
    %v872 = vadd.f32 %v782, %v864
    %v873 = vadd.f32 %v783, %v865
    %v874 = vadd.f32 %v784, %v866
    %v875 = vadd.f32 %v785, %v867
    %s876 = sld [smem:[#allocation6 + $0x23]]
    %v877 = vstv %s876
    %v878 = vmul.f32 %v877, %v849
    %v879 = vmul.f32 %v877, %v850
    %v880 = vmul.f32 %v877, %v851
    %v881 = vmul.f32 %v877, %v852
    %v882 = vmul.f32 %v877, %v853
    %v883 = vmul.f32 %v877, %v854
    %v884 = vmul.f32 %v877, %v855
    %v885 = vmul.f32 %v877, %v856
    %v886 = vadd.f32 %v840, %v878
    %v887 = vadd.f32 %v841, %v879
    %v888 = vadd.f32 %v842, %v880
    %v889 = vadd.f32 %v843, %v881
    %v890 = vadd.f32 %v844, %v882
    %v891 = vadd.f32 %v845, %v883
    %v892 = vadd.f32 %v846, %v884
    %v893 = vadd.f32 %v847, %v885
    %s894 = sld [smem:[#allocation6 + $0x8]]
    %v895 = vstv %s894
    %v896 = vmul.f32 %v895, %v849
    %v897 = vmul.f32 %v895, %v850
    %v898 = vmul.f32 %v895, %v851
    %v899 = vmul.f32 %v895, %v852
    %v900 = vmul.f32 %v895, %v853
    %v901 = vmul.f32 %v895, %v854
    %v902 = vmul.f32 %v895, %v855
    %v903 = vmul.f32 %v895, %v856
    %v904 = vmul.f32 %v895, %v857
    %914 = vrot.lane.b32.xlu0 %v896, 127
    %v915 = vpop.permute.xlu0 %914
    %916 = vrot.lane.b32.xlu0 %v897, 127
    %v917 = vpop.permute.xlu0 %916
    %918 = vrot.lane.b32.xlu0 %v898, 127
    %v919 = vpop.permute.xlu0 %918
    %920 = vrot.lane.b32.xlu0 %v899, 127
    %v921 = vpop.permute.xlu0 %920
    %922 = vrot.lane.b32.xlu0 %v900, 127
    %v923 = vpop.permute.xlu0 %922
    %924 = vrot.lane.b32.xlu0 %v901, 127
    %v925 = vpop.permute.xlu0 %924
    %926 = vrot.lane.b32.xlu0 %v902, 127
    %v927 = vpop.permute.xlu0 %926
    %928 = vrot.lane.b32.xlu0 %v903, 127
    %v929 = vpop.permute.xlu0 %928
    %930 = vrot.lane.b32.xlu0 %v904, 127
    %v931 = vpop.permute.xlu0 %930
    %v932 = vsel %vm136, %v915, %v917
    %v933 = vsel %vm136, %v917, %v919
    %v934 = vsel %vm136, %v919, %v921
    %v935 = vsel %vm136, %v921, %v923
    %v936 = vsel %vm136, %v923, %v925
    %v937 = vsel %vm136, %v925, %v927
    %v938 = vsel %vm136, %v927, %v929
    %v939 = vsel %vm136, %v929, %v931
    %v948 = vadd.f32 %v868, %v932
    %v949 = vadd.f32 %v869, %v933
    %v950 = vadd.f32 %v870, %v934
    %v951 = vadd.f32 %v871, %v935
    %v952 = vadd.f32 %v872, %v936
    %v953 = vadd.f32 %v873, %v937
    %v954 = vadd.f32 %v874, %v938
    %v955 = vadd.f32 %v875, %v939
    %s956 = sld [smem:[#allocation6 + $0x24]]
    %v957 = vstv %s956
    %v958 = vmul.f32 %v957, %v849
    %v959 = vmul.f32 %v957, %v850
    %v960 = vmul.f32 %v957, %v851
    %v961 = vmul.f32 %v957, %v852
    %v962 = vmul.f32 %v957, %v853
    %v963 = vmul.f32 %v957, %v854
    %v964 = vmul.f32 %v957, %v855
    %v965 = vmul.f32 %v957, %v856
    %v966 = vmul.f32 %v957, %v857
    %976 = vrot.lane.b32.xlu0 %v958, 127
    %v977 = vpop.permute.xlu0 %976
    %978 = vrot.lane.b32.xlu0 %v959, 127
    %v979 = vpop.permute.xlu0 %978
    %980 = vrot.lane.b32.xlu0 %v960, 127
    %v981 = vpop.permute.xlu0 %980
    %982 = vrot.lane.b32.xlu0 %v961, 127
    %v983 = vpop.permute.xlu0 %982
    %984 = vrot.lane.b32.xlu0 %v962, 127
    %v985 = vpop.permute.xlu0 %984
    %986 = vrot.lane.b32.xlu0 %v963, 127
    %v987 = vpop.permute.xlu0 %986
    %988 = vrot.lane.b32.xlu0 %v964, 127
    %v989 = vpop.permute.xlu0 %988
    %990 = vrot.lane.b32.xlu0 %v965, 127
    %v991 = vpop.permute.xlu0 %990
    %992 = vrot.lane.b32.xlu0 %v966, 127
    %v993 = vpop.permute.xlu0 %992
    %v994 = vsel %vm136, %v977, %v979
    %v995 = vsel %vm136, %v979, %v981
    %v996 = vsel %vm136, %v981, %v983
    %v997 = vsel %vm136, %v983, %v985
    %v998 = vsel %vm136, %v985, %v987
    %v999 = vsel %vm136, %v987, %v989
    %v1000 = vsel %vm136, %v989, %v991
    %v1001 = vsel %vm136, %v991, %v993
    %v1010 = vadd.f32 %v886, %v994
    %v1011 = vadd.f32 %v887, %v995
    %v1012 = vadd.f32 %v888, %v996
    %v1013 = vadd.f32 %v889, %v997
    %v1014 = vadd.f32 %v890, %v998
    %v1015 = vadd.f32 %v891, %v999
    %v1016 = vadd.f32 %v892, %v1000
    %v1017 = vadd.f32 %v893, %v1001
    %s1018 = sld [smem:[#allocation6 + $0x9]]
    %v1019 = vstv %s1018
    %v1020 = vmul.f32 %v1019, %v849
    %v1021 = vmul.f32 %v1019, %v850
    %v1022 = vmul.f32 %v1019, %v851
    %v1023 = vmul.f32 %v1019, %v852
    %v1024 = vmul.f32 %v1019, %v853
    %v1025 = vmul.f32 %v1019, %v854
    %v1026 = vmul.f32 %v1019, %v855
    %v1027 = vmul.f32 %v1019, %v856
    %v1028 = vmul.f32 %v1019, %v857
    %1038 = vrot.lane.b32.xlu0 %v1020, 126
    %v1039 = vpop.permute.xlu0 %1038
    %1040 = vrot.lane.b32.xlu0 %v1021, 126
    %v1041 = vpop.permute.xlu0 %1040
    %1042 = vrot.lane.b32.xlu0 %v1022, 126
    %v1043 = vpop.permute.xlu0 %1042
    %1044 = vrot.lane.b32.xlu0 %v1023, 126
    %v1045 = vpop.permute.xlu0 %1044
    %1046 = vrot.lane.b32.xlu0 %v1024, 126
    %v1047 = vpop.permute.xlu0 %1046
    %1048 = vrot.lane.b32.xlu0 %v1025, 126
    %v1049 = vpop.permute.xlu0 %1048
    %1050 = vrot.lane.b32.xlu0 %v1026, 126
    %v1051 = vpop.permute.xlu0 %1050
    %1052 = vrot.lane.b32.xlu0 %v1027, 126
    %v1053 = vpop.permute.xlu0 %1052
    %1054 = vrot.lane.b32.xlu0 %v1028, 126
    %v1055 = vpop.permute.xlu0 %1054
    %v1056 = vsel %vm261, %v1039, %v1041
    %v1057 = vsel %vm261, %v1041, %v1043
    %v1058 = vsel %vm261, %v1043, %v1045
    %v1059 = vsel %vm261, %v1045, %v1047
    %v1060 = vsel %vm261, %v1047, %v1049
    %v1061 = vsel %vm261, %v1049, %v1051
    %v1062 = vsel %vm261, %v1051, %v1053
    %v1063 = vsel %vm261, %v1053, %v1055
    %v1072 = vadd.f32 %v948, %v1056
    %v1073 = vadd.f32 %v949, %v1057
    %v1074 = vadd.f32 %v950, %v1058
    %v1075 = vadd.f32 %v951, %v1059
    %v1076 = vadd.f32 %v952, %v1060
    %v1077 = vadd.f32 %v953, %v1061
    %v1078 = vadd.f32 %v954, %v1062
    %v1079 = vadd.f32 %v955, %v1063
    %s1080 = sld [smem:[#allocation6 + $0x25]]
    %v1081 = vstv %s1080
    %v1082 = vmul.f32 %v1081, %v849
    %v1083 = vmul.f32 %v1081, %v850
    %v1084 = vmul.f32 %v1081, %v851
    %v1085 = vmul.f32 %v1081, %v852
    %v1086 = vmul.f32 %v1081, %v853
    %v1087 = vmul.f32 %v1081, %v854
    %v1088 = vmul.f32 %v1081, %v855
    %v1089 = vmul.f32 %v1081, %v856
    %v1090 = vmul.f32 %v1081, %v857
    %1100 = vrot.lane.b32.xlu0 %v1082, 126
    %v1101 = vpop.permute.xlu0 %1100
    %1102 = vrot.lane.b32.xlu0 %v1083, 126
    %v1103 = vpop.permute.xlu0 %1102
    %1104 = vrot.lane.b32.xlu0 %v1084, 126
    %v1105 = vpop.permute.xlu0 %1104
    %1106 = vrot.lane.b32.xlu0 %v1085, 126
    %v1107 = vpop.permute.xlu0 %1106
    %1108 = vrot.lane.b32.xlu0 %v1086, 126
    %v1109 = vpop.permute.xlu0 %1108
    %1110 = vrot.lane.b32.xlu0 %v1087, 126
    %v1111 = vpop.permute.xlu0 %1110
    %1112 = vrot.lane.b32.xlu0 %v1088, 126
    %v1113 = vpop.permute.xlu0 %1112
    %1114 = vrot.lane.b32.xlu0 %v1089, 126
    %v1115 = vpop.permute.xlu0 %1114
    %1116 = vrot.lane.b32.xlu0 %v1090, 126
    %v1117 = vpop.permute.xlu0 %1116
    %v1118 = vsel %vm261, %v1101, %v1103
    %v1119 = vsel %vm261, %v1103, %v1105
    %v1120 = vsel %vm261, %v1105, %v1107
    %v1121 = vsel %vm261, %v1107, %v1109
    %v1122 = vsel %vm261, %v1109, %v1111
    %v1123 = vsel %vm261, %v1111, %v1113
    %v1124 = vsel %vm261, %v1113, %v1115
    %v1125 = vsel %vm261, %v1115, %v1117
    %v1134 = vadd.f32 %v1010, %v1118
    %v1135 = vadd.f32 %v1011, %v1119
    %v1136 = vadd.f32 %v1012, %v1120
    %v1137 = vadd.f32 %v1013, %v1121
    %v1138 = vadd.f32 %v1014, %v1122
    %v1139 = vadd.f32 %v1015, %v1123
    %v1140 = vadd.f32 %v1016, %v1124
    %v1141 = vadd.f32 %v1017, %v1125
    %s1142 = sld [smem:[#allocation6 + $0xa]]
    %v1143 = vstv %s1142
    %v1144 = vmul.f32 %v1143, %v849
    %v1145 = vmul.f32 %v1143, %v850
    %v1146 = vmul.f32 %v1143, %v851
    %v1147 = vmul.f32 %v1143, %v852
    %v1148 = vmul.f32 %v1143, %v853
    %v1149 = vmul.f32 %v1143, %v854
    %v1150 = vmul.f32 %v1143, %v855
    %v1151 = vmul.f32 %v1143, %v856
    %v1152 = vmul.f32 %v1143, %v857
    %1162 = vrot.lane.b32.xlu0 %v1144, 125
    %v1163 = vpop.permute.xlu0 %1162
    %1164 = vrot.lane.b32.xlu0 %v1145, 125
    %v1165 = vpop.permute.xlu0 %1164
    %1166 = vrot.lane.b32.xlu0 %v1146, 125
    %v1167 = vpop.permute.xlu0 %1166
    %1168 = vrot.lane.b32.xlu0 %v1147, 125
    %v1169 = vpop.permute.xlu0 %1168
    %1170 = vrot.lane.b32.xlu0 %v1148, 125
    %v1171 = vpop.permute.xlu0 %1170
    %1172 = vrot.lane.b32.xlu0 %v1149, 125
    %v1173 = vpop.permute.xlu0 %1172
    %1174 = vrot.lane.b32.xlu0 %v1150, 125
    %v1175 = vpop.permute.xlu0 %1174
    %1176 = vrot.lane.b32.xlu0 %v1151, 125
    %v1177 = vpop.permute.xlu0 %1176
    %1178 = vrot.lane.b32.xlu0 %v1152, 125
    %v1179 = vpop.permute.xlu0 %1178
    %v1180 = vsel %vm386, %v1163, %v1165
    %v1181 = vsel %vm386, %v1165, %v1167
    %v1182 = vsel %vm386, %v1167, %v1169
    %v1183 = vsel %vm386, %v1169, %v1171
    %v1184 = vsel %vm386, %v1171, %v1173
    %v1185 = vsel %vm386, %v1173, %v1175
    %v1186 = vsel %vm386, %v1175, %v1177
    %v1187 = vsel %vm386, %v1177, %v1179
    %v1196 = vadd.f32 %v1072, %v1180
    %v1197 = vadd.f32 %v1073, %v1181
    %v1198 = vadd.f32 %v1074, %v1182
    %v1199 = vadd.f32 %v1075, %v1183
    %v1200 = vadd.f32 %v1076, %v1184
    %v1201 = vadd.f32 %v1077, %v1185
    %v1202 = vadd.f32 %v1078, %v1186
    %v1203 = vadd.f32 %v1079, %v1187
    %s1204 = sld [smem:[#allocation6 + $0x26]]
    %v1205 = vstv %s1204
    %v1206 = vmul.f32 %v1205, %v849
    %v1207 = vmul.f32 %v1205, %v850
    %v1208 = vmul.f32 %v1205, %v851
    %v1209 = vmul.f32 %v1205, %v852
    %v1210 = vmul.f32 %v1205, %v853
    %v1211 = vmul.f32 %v1205, %v854
    %v1212 = vmul.f32 %v1205, %v855
    %v1213 = vmul.f32 %v1205, %v856
    %v1214 = vmul.f32 %v1205, %v857
    %1224 = vrot.lane.b32.xlu0 %v1206, 125
    %v1225 = vpop.permute.xlu0 %1224
    %1226 = vrot.lane.b32.xlu0 %v1207, 125
    %v1227 = vpop.permute.xlu0 %1226
    %1228 = vrot.lane.b32.xlu0 %v1208, 125
    %v1229 = vpop.permute.xlu0 %1228
    %1230 = vrot.lane.b32.xlu0 %v1209, 125
    %v1231 = vpop.permute.xlu0 %1230
    %1232 = vrot.lane.b32.xlu0 %v1210, 125
    %v1233 = vpop.permute.xlu0 %1232
    %1234 = vrot.lane.b32.xlu0 %v1211, 125
    %v1235 = vpop.permute.xlu0 %1234
    %1236 = vrot.lane.b32.xlu0 %v1212, 125
    %v1237 = vpop.permute.xlu0 %1236
    %1238 = vrot.lane.b32.xlu0 %v1213, 125
    %v1239 = vpop.permute.xlu0 %1238
    %1240 = vrot.lane.b32.xlu0 %v1214, 125
    %v1241 = vpop.permute.xlu0 %1240
    %v1242 = vsel %vm386, %v1225, %v1227
    %v1243 = vsel %vm386, %v1227, %v1229
    %v1244 = vsel %vm386, %v1229, %v1231
    %v1245 = vsel %vm386, %v1231, %v1233
    %v1246 = vsel %vm386, %v1233, %v1235
    %v1247 = vsel %vm386, %v1235, %v1237
    %v1248 = vsel %vm386, %v1237, %v1239
    %v1249 = vsel %vm386, %v1239, %v1241
    %v1258 = vadd.f32 %v1134, %v1242
    %v1259 = vadd.f32 %v1135, %v1243
    %v1260 = vadd.f32 %v1136, %v1244
    %v1261 = vadd.f32 %v1137, %v1245
    %v1262 = vadd.f32 %v1138, %v1246
    %v1263 = vadd.f32 %v1139, %v1247
    %v1264 = vadd.f32 %v1140, %v1248
    %v1265 = vadd.f32 %v1141, %v1249
    %s1266 = sld [smem:[#allocation6 + $0xb]]
    %v1267 = vstv %s1266
    %v1268 = vmul.f32 %v1267, %v849
    %v1269 = vmul.f32 %v1267, %v850
    %v1270 = vmul.f32 %v1267, %v851
    %v1271 = vmul.f32 %v1267, %v852
    %v1272 = vmul.f32 %v1267, %v853
    %v1273 = vmul.f32 %v1267, %v854
    %v1274 = vmul.f32 %v1267, %v855
    %v1275 = vmul.f32 %v1267, %v856
    %v1276 = vmul.f32 %v1267, %v857
    %1286 = vrot.lane.b32.xlu0 %v1268, 124
    %v1287 = vpop.permute.xlu0 %1286
    %1288 = vrot.lane.b32.xlu0 %v1269, 124
    %v1289 = vpop.permute.xlu0 %1288
    %1290 = vrot.lane.b32.xlu0 %v1270, 124
    %v1291 = vpop.permute.xlu0 %1290
    %1292 = vrot.lane.b32.xlu0 %v1271, 124
    %v1293 = vpop.permute.xlu0 %1292
    %1294 = vrot.lane.b32.xlu0 %v1272, 124
    %v1295 = vpop.permute.xlu0 %1294
    %1296 = vrot.lane.b32.xlu0 %v1273, 124
    %v1297 = vpop.permute.xlu0 %1296
    %1298 = vrot.lane.b32.xlu0 %v1274, 124
    %v1299 = vpop.permute.xlu0 %1298
    %1300 = vrot.lane.b32.xlu0 %v1275, 124
    %v1301 = vpop.permute.xlu0 %1300
    %1302 = vrot.lane.b32.xlu0 %v1276, 124
    %v1303 = vpop.permute.xlu0 %1302
    %v1304 = vsel %vm511, %v1287, %v1289
    %v1305 = vsel %vm511, %v1289, %v1291
    %v1306 = vsel %vm511, %v1291, %v1293
    %v1307 = vsel %vm511, %v1293, %v1295
    %v1308 = vsel %vm511, %v1295, %v1297
    %v1309 = vsel %vm511, %v1297, %v1299
    %v1310 = vsel %vm511, %v1299, %v1301
    %v1311 = vsel %vm511, %v1301, %v1303
    %v1320 = vadd.f32 %v1196, %v1304
    %v1321 = vadd.f32 %v1197, %v1305
    %v1322 = vadd.f32 %v1198, %v1306
    %v1323 = vadd.f32 %v1199, %v1307
    %v1324 = vadd.f32 %v1200, %v1308
    %v1325 = vadd.f32 %v1201, %v1309
    %v1326 = vadd.f32 %v1202, %v1310
    %v1327 = vadd.f32 %v1203, %v1311
    %s1328 = sld [smem:[#allocation6 + $0x27]]
    %v1329 = vstv %s1328
    %v1330 = vmul.f32 %v1329, %v849
    %v1331 = vmul.f32 %v1329, %v850
    %v1332 = vmul.f32 %v1329, %v851
    %v1333 = vmul.f32 %v1329, %v852
    %v1334 = vmul.f32 %v1329, %v853
    %v1335 = vmul.f32 %v1329, %v854
    %v1336 = vmul.f32 %v1329, %v855
    %v1337 = vmul.f32 %v1329, %v856
    %v1338 = vmul.f32 %v1329, %v857
    %1348 = vrot.lane.b32.xlu0 %v1330, 124
    %v1349 = vpop.permute.xlu0 %1348
    %1350 = vrot.lane.b32.xlu0 %v1331, 124
    %v1351 = vpop.permute.xlu0 %1350
    %1352 = vrot.lane.b32.xlu0 %v1332, 124
    %v1353 = vpop.permute.xlu0 %1352
    %1354 = vrot.lane.b32.xlu0 %v1333, 124
    %v1355 = vpop.permute.xlu0 %1354
    %1356 = vrot.lane.b32.xlu0 %v1334, 124
    %v1357 = vpop.permute.xlu0 %1356
    %1358 = vrot.lane.b32.xlu0 %v1335, 124
    %v1359 = vpop.permute.xlu0 %1358
    %1360 = vrot.lane.b32.xlu0 %v1336, 124
    %v1361 = vpop.permute.xlu0 %1360
    %1362 = vrot.lane.b32.xlu0 %v1337, 124
    %v1363 = vpop.permute.xlu0 %1362
    %1364 = vrot.lane.b32.xlu0 %v1338, 124
    %v1365 = vpop.permute.xlu0 %1364
    %v1366 = vsel %vm511, %v1349, %v1351
    %v1367 = vsel %vm511, %v1351, %v1353
    %v1368 = vsel %vm511, %v1353, %v1355
    %v1369 = vsel %vm511, %v1355, %v1357
    %v1370 = vsel %vm511, %v1357, %v1359
    %v1371 = vsel %vm511, %v1359, %v1361
    %v1372 = vsel %vm511, %v1361, %v1363
    %v1373 = vsel %vm511, %v1363, %v1365
    %v1382 = vadd.f32 %v1258, %v1366
    %v1383 = vadd.f32 %v1259, %v1367
    %v1384 = vadd.f32 %v1260, %v1368
    %v1385 = vadd.f32 %v1261, %v1369
    %v1386 = vadd.f32 %v1262, %v1370
    %v1387 = vadd.f32 %v1263, %v1371
    %v1388 = vadd.f32 %v1264, %v1372
    %v1389 = vadd.f32 %v1265, %v1373
    %s1390 = sld [smem:[#allocation6 + $0xc]]
    %v1391 = vstv %s1390
    %v1392 = vmul.f32 %v1391, %v849
    %v1393 = vmul.f32 %v1391, %v850
    %v1394 = vmul.f32 %v1391, %v851
    %v1395 = vmul.f32 %v1391, %v852
    %v1396 = vmul.f32 %v1391, %v853
    %v1397 = vmul.f32 %v1391, %v854
    %v1398 = vmul.f32 %v1391, %v855
    %v1399 = vmul.f32 %v1391, %v856
    %v1400 = vmul.f32 %v1391, %v857
    %1410 = vrot.lane.b32.xlu0 %v1392, 123
    %v1411 = vpop.permute.xlu0 %1410
    %1412 = vrot.lane.b32.xlu0 %v1393, 123
    %v1413 = vpop.permute.xlu0 %1412
    %1414 = vrot.lane.b32.xlu0 %v1394, 123
    %v1415 = vpop.permute.xlu0 %1414
    %1416 = vrot.lane.b32.xlu0 %v1395, 123
    %v1417 = vpop.permute.xlu0 %1416
    %1418 = vrot.lane.b32.xlu0 %v1396, 123
    %v1419 = vpop.permute.xlu0 %1418
    %1420 = vrot.lane.b32.xlu0 %v1397, 123
    %v1421 = vpop.permute.xlu0 %1420
    %1422 = vrot.lane.b32.xlu0 %v1398, 123
    %v1423 = vpop.permute.xlu0 %1422
    %1424 = vrot.lane.b32.xlu0 %v1399, 123
    %v1425 = vpop.permute.xlu0 %1424
    %1426 = vrot.lane.b32.xlu0 %v1400, 123
    %v1427 = vpop.permute.xlu0 %1426
    %v1428 = vsel %vm636, %v1411, %v1413
    %v1429 = vsel %vm636, %v1413, %v1415
    %v1430 = vsel %vm636, %v1415, %v1417
    %v1431 = vsel %vm636, %v1417, %v1419
    %v1432 = vsel %vm636, %v1419, %v1421
    %v1433 = vsel %vm636, %v1421, %v1423
    %v1434 = vsel %vm636, %v1423, %v1425
    %v1435 = vsel %vm636, %v1425, %v1427
    %v1444 = vadd.f32 %v1320, %v1428
    %v1445 = vadd.f32 %v1321, %v1429
    %v1446 = vadd.f32 %v1322, %v1430
    %v1447 = vadd.f32 %v1323, %v1431
    %v1448 = vadd.f32 %v1324, %v1432
    %v1449 = vadd.f32 %v1325, %v1433
    %v1450 = vadd.f32 %v1326, %v1434
    %v1451 = vadd.f32 %v1327, %v1435
    %s1452 = sld [smem:[#allocation6 + $0x28]]
    %v1453 = vstv %s1452
    %v1454 = vmul.f32 %v1453, %v849
    %v1455 = vmul.f32 %v1453, %v850
    %v1456 = vmul.f32 %v1453, %v851
    %v1457 = vmul.f32 %v1453, %v852
    %v1458 = vmul.f32 %v1453, %v853
    %v1459 = vmul.f32 %v1453, %v854
    %v1460 = vmul.f32 %v1453, %v855
    %v1461 = vmul.f32 %v1453, %v856
    %v1462 = vmul.f32 %v1453, %v857
    %1472 = vrot.lane.b32.xlu0 %v1454, 123
    %v1473 = vpop.permute.xlu0 %1472
    %1474 = vrot.lane.b32.xlu0 %v1455, 123
    %v1475 = vpop.permute.xlu0 %1474
    %1476 = vrot.lane.b32.xlu0 %v1456, 123
    %v1477 = vpop.permute.xlu0 %1476
    %1478 = vrot.lane.b32.xlu0 %v1457, 123
    %v1479 = vpop.permute.xlu0 %1478
    %1480 = vrot.lane.b32.xlu0 %v1458, 123
    %v1481 = vpop.permute.xlu0 %1480
    %1482 = vrot.lane.b32.xlu0 %v1459, 123
    %v1483 = vpop.permute.xlu0 %1482
    %1484 = vrot.lane.b32.xlu0 %v1460, 123
    %v1485 = vpop.permute.xlu0 %1484
    %1486 = vrot.lane.b32.xlu0 %v1461, 123
    %v1487 = vpop.permute.xlu0 %1486
    %1488 = vrot.lane.b32.xlu0 %v1462, 123
    %v1489 = vpop.permute.xlu0 %1488
    %v1490 = vsel %vm636, %v1473, %v1475
    %v1491 = vsel %vm636, %v1475, %v1477
    %v1492 = vsel %vm636, %v1477, %v1479
    %v1493 = vsel %vm636, %v1479, %v1481
    %v1494 = vsel %vm636, %v1481, %v1483
    %v1495 = vsel %vm636, %v1483, %v1485
    %v1496 = vsel %vm636, %v1485, %v1487
    %v1497 = vsel %vm636, %v1487, %v1489
    %v1506 = vadd.f32 %v1382, %v1490
    %v1507 = vadd.f32 %v1383, %v1491
    %v1508 = vadd.f32 %v1384, %v1492
    %v1509 = vadd.f32 %v1385, %v1493
    %v1510 = vadd.f32 %v1386, %v1494
    %v1511 = vadd.f32 %v1387, %v1495
    %v1512 = vadd.f32 %v1388, %v1496
    %v1513 = vadd.f32 %v1389, %v1497
    %s1514 = sld [smem:[#allocation6 + $0xd]]
    %v1515 = vstv %s1514
    %v1516 = vmul.f32 %v1515, %v849
    %v1517 = vmul.f32 %v1515, %v850
    %v1518 = vmul.f32 %v1515, %v851
    %v1519 = vmul.f32 %v1515, %v852
    %v1520 = vmul.f32 %v1515, %v853
    %v1521 = vmul.f32 %v1515, %v854
    %v1522 = vmul.f32 %v1515, %v855
    %v1523 = vmul.f32 %v1515, %v856
    %v1524 = vmul.f32 %v1515, %v857
    %1534 = vrot.lane.b32.xlu0 %v1516, 122
    %v1535 = vpop.permute.xlu0 %1534
    %1536 = vrot.lane.b32.xlu0 %v1517, 122
    %v1537 = vpop.permute.xlu0 %1536
    %1538 = vrot.lane.b32.xlu0 %v1518, 122
    %v1539 = vpop.permute.xlu0 %1538
    %1540 = vrot.lane.b32.xlu0 %v1519, 122
    %v1541 = vpop.permute.xlu0 %1540
    %1542 = vrot.lane.b32.xlu0 %v1520, 122
    %v1543 = vpop.permute.xlu0 %1542
    %1544 = vrot.lane.b32.xlu0 %v1521, 122
    %v1545 = vpop.permute.xlu0 %1544
    %1546 = vrot.lane.b32.xlu0 %v1522, 122
    %v1547 = vpop.permute.xlu0 %1546
    %1548 = vrot.lane.b32.xlu0 %v1523, 122
    %v1549 = vpop.permute.xlu0 %1548
    %1550 = vrot.lane.b32.xlu0 %v1524, 122
    %v1551 = vpop.permute.xlu0 %1550
    %v1552 = vsel %vm761, %v1535, %v1537
    %v1553 = vsel %vm761, %v1537, %v1539
    %v1554 = vsel %vm761, %v1539, %v1541
    %v1555 = vsel %vm761, %v1541, %v1543
    %v1556 = vsel %vm761, %v1543, %v1545
    %v1557 = vsel %vm761, %v1545, %v1547
    %v1558 = vsel %vm761, %v1547, %v1549
    %v1559 = vsel %vm761, %v1549, %v1551
    %v1568 = vadd.f32 %v1444, %v1552
    %v1569 = vadd.f32 %v1445, %v1553
    %v1570 = vadd.f32 %v1446, %v1554
    %v1571 = vadd.f32 %v1447, %v1555
    %v1572 = vadd.f32 %v1448, %v1556
    %v1573 = vadd.f32 %v1449, %v1557
    %v1574 = vadd.f32 %v1450, %v1558
    %v1575 = vadd.f32 %v1451, %v1559
    %s1576 = sld [smem:[#allocation6 + $0x29]]
    %v1577 = vstv %s1576
    %v1578 = vmul.f32 %v1577, %v849
    %v1579 = vmul.f32 %v1577, %v850
    %v1580 = vmul.f32 %v1577, %v851
    %v1581 = vmul.f32 %v1577, %v852
    %v1582 = vmul.f32 %v1577, %v853
    %v1583 = vmul.f32 %v1577, %v854
    %v1584 = vmul.f32 %v1577, %v855
    %v1585 = vmul.f32 %v1577, %v856
    %v1586 = vmul.f32 %v1577, %v857
    %1596 = vrot.lane.b32.xlu0 %v1578, 122
    %v1597 = vpop.permute.xlu0 %1596
    %1598 = vrot.lane.b32.xlu0 %v1579, 122
    %v1599 = vpop.permute.xlu0 %1598
    %1600 = vrot.lane.b32.xlu0 %v1580, 122
    %v1601 = vpop.permute.xlu0 %1600
    %1602 = vrot.lane.b32.xlu0 %v1581, 122
    %v1603 = vpop.permute.xlu0 %1602
    %1604 = vrot.lane.b32.xlu0 %v1582, 122
    %v1605 = vpop.permute.xlu0 %1604
    %1606 = vrot.lane.b32.xlu0 %v1583, 122
    %v1607 = vpop.permute.xlu0 %1606
    %1608 = vrot.lane.b32.xlu0 %v1584, 122
    %v1609 = vpop.permute.xlu0 %1608
    %1610 = vrot.lane.b32.xlu0 %v1585, 122
    %v1611 = vpop.permute.xlu0 %1610
    %1612 = vrot.lane.b32.xlu0 %v1586, 122
    %v1613 = vpop.permute.xlu0 %1612
    %v1614 = vsel %vm761, %v1597, %v1599
    %v1615 = vsel %vm761, %v1599, %v1601
    %v1616 = vsel %vm761, %v1601, %v1603
    %v1617 = vsel %vm761, %v1603, %v1605
    %v1618 = vsel %vm761, %v1605, %v1607
    %v1619 = vsel %vm761, %v1607, %v1609
    %v1620 = vsel %vm761, %v1609, %v1611
    %v1621 = vsel %vm761, %v1611, %v1613
    %v1630 = vadd.f32 %v1506, %v1614
    %v1631 = vadd.f32 %v1507, %v1615
    %v1632 = vadd.f32 %v1508, %v1616
    %v1633 = vadd.f32 %v1509, %v1617
    %v1634 = vadd.f32 %v1510, %v1618
    %v1635 = vadd.f32 %v1511, %v1619
    %v1636 = vadd.f32 %v1512, %v1620
    %v1637 = vadd.f32 %v1513, %v1621
    %s1638 = scalar_lea.vmem %s2, 144
    %v1639 = vld [vmem:[%s1638] sm:$0xff]
    %v1640 = vld [vmem:[%s1638 + $0x8] sm:$0xff]
    %v1641 = vld [vmem:[%s1638 + $0x10] sm:$0xff]
    %v1642 = vld [vmem:[%s1638 + $0x18] sm:$0xff]
    %v1643 = vld [vmem:[%s1638 + $0x20] sm:$0xff]
    %v1644 = vld [vmem:[%s1638 + $0x28] sm:$0xff]
    %v1645 = vld [vmem:[%s1638 + $0x30] sm:$0xff]
    %v1646 = vld [vmem:[%s1638 + $0x38] sm:$0xff]
    %v1647 = vld [vmem:[%s1638 + $0x40] sm:$0xff]
    %s1648 = sld [smem:[#allocation6 + $0xe]]
    %v1649 = vstv %s1648
    %v1650 = vmul.f32 %v1649, %v1639
    %v1651 = vmul.f32 %v1649, %v1640
    %v1652 = vmul.f32 %v1649, %v1641
    %v1653 = vmul.f32 %v1649, %v1642
    %v1654 = vmul.f32 %v1649, %v1643
    %v1655 = vmul.f32 %v1649, %v1644
    %v1656 = vmul.f32 %v1649, %v1645
    %v1657 = vmul.f32 %v1649, %v1646
    %v1658 = vadd.f32 %v1568, %v1650
    %v1659 = vadd.f32 %v1569, %v1651
    %v1660 = vadd.f32 %v1570, %v1652
    %v1661 = vadd.f32 %v1571, %v1653
    %v1662 = vadd.f32 %v1572, %v1654
    %v1663 = vadd.f32 %v1573, %v1655
    %v1664 = vadd.f32 %v1574, %v1656
    %v1665 = vadd.f32 %v1575, %v1657
    %s1666 = sld [smem:[#allocation6 + $0x2a]]
    %v1667 = vstv %s1666
    %v1668 = vmul.f32 %v1667, %v1639
    %v1669 = vmul.f32 %v1667, %v1640
    %v1670 = vmul.f32 %v1667, %v1641
    %v1671 = vmul.f32 %v1667, %v1642
    %v1672 = vmul.f32 %v1667, %v1643
    %v1673 = vmul.f32 %v1667, %v1644
    %v1674 = vmul.f32 %v1667, %v1645
    %v1675 = vmul.f32 %v1667, %v1646
    %v1676 = vadd.f32 %v1630, %v1668
    %v1677 = vadd.f32 %v1631, %v1669
    %v1678 = vadd.f32 %v1632, %v1670
    %v1679 = vadd.f32 %v1633, %v1671
    %v1680 = vadd.f32 %v1634, %v1672
    %v1681 = vadd.f32 %v1635, %v1673
    %v1682 = vadd.f32 %v1636, %v1674
    %v1683 = vadd.f32 %v1637, %v1675
    %s1684 = sld [smem:[#allocation6 + $0xf]]
    %v1685 = vstv %s1684
    %v1686 = vmul.f32 %v1685, %v1639
    %v1687 = vmul.f32 %v1685, %v1640
    %v1688 = vmul.f32 %v1685, %v1641
    %v1689 = vmul.f32 %v1685, %v1642
    %v1690 = vmul.f32 %v1685, %v1643
    %v1691 = vmul.f32 %v1685, %v1644
    %v1692 = vmul.f32 %v1685, %v1645
    %v1693 = vmul.f32 %v1685, %v1646
    %v1694 = vmul.f32 %v1685, %v1647
    %1704 = vrot.lane.b32.xlu0 %v1686, 127
    %v1705 = vpop.permute.xlu0 %1704
    %1706 = vrot.lane.b32.xlu0 %v1687, 127
    %v1707 = vpop.permute.xlu0 %1706
    %1708 = vrot.lane.b32.xlu0 %v1688, 127
    %v1709 = vpop.permute.xlu0 %1708
    %1710 = vrot.lane.b32.xlu0 %v1689, 127
    %v1711 = vpop.permute.xlu0 %1710
    %1712 = vrot.lane.b32.xlu0 %v1690, 127
    %v1713 = vpop.permute.xlu0 %1712
    %1714 = vrot.lane.b32.xlu0 %v1691, 127
    %v1715 = vpop.permute.xlu0 %1714
    %1716 = vrot.lane.b32.xlu0 %v1692, 127
    %v1717 = vpop.permute.xlu0 %1716
    %1718 = vrot.lane.b32.xlu0 %v1693, 127
    %v1719 = vpop.permute.xlu0 %1718
    %1720 = vrot.lane.b32.xlu0 %v1694, 127
    %v1721 = vpop.permute.xlu0 %1720
    %v1722 = vsel %vm136, %v1705, %v1707
    %v1723 = vsel %vm136, %v1707, %v1709
    %v1724 = vsel %vm136, %v1709, %v1711
    %v1725 = vsel %vm136, %v1711, %v1713
    %v1726 = vsel %vm136, %v1713, %v1715
    %v1727 = vsel %vm136, %v1715, %v1717
    %v1728 = vsel %vm136, %v1717, %v1719
    %v1729 = vsel %vm136, %v1719, %v1721
    %v1738 = vadd.f32 %v1658, %v1722
    %v1739 = vadd.f32 %v1659, %v1723
    %v1740 = vadd.f32 %v1660, %v1724
    %v1741 = vadd.f32 %v1661, %v1725
    %v1742 = vadd.f32 %v1662, %v1726
    %v1743 = vadd.f32 %v1663, %v1727
    %v1744 = vadd.f32 %v1664, %v1728
    %v1745 = vadd.f32 %v1665, %v1729
    %s1746 = sld [smem:[#allocation6 + $0x2b]]
    %v1747 = vstv %s1746
    %v1748 = vmul.f32 %v1747, %v1639
    %v1749 = vmul.f32 %v1747, %v1640
    %v1750 = vmul.f32 %v1747, %v1641
    %v1751 = vmul.f32 %v1747, %v1642
    %v1752 = vmul.f32 %v1747, %v1643
    %v1753 = vmul.f32 %v1747, %v1644
    %v1754 = vmul.f32 %v1747, %v1645
    %v1755 = vmul.f32 %v1747, %v1646
    %v1756 = vmul.f32 %v1747, %v1647
    %1766 = vrot.lane.b32.xlu0 %v1748, 127
    %v1767 = vpop.permute.xlu0 %1766
    %1768 = vrot.lane.b32.xlu0 %v1749, 127
    %v1769 = vpop.permute.xlu0 %1768
    %1770 = vrot.lane.b32.xlu0 %v1750, 127
    %v1771 = vpop.permute.xlu0 %1770
    %1772 = vrot.lane.b32.xlu0 %v1751, 127
    %v1773 = vpop.permute.xlu0 %1772
    %1774 = vrot.lane.b32.xlu0 %v1752, 127
    %v1775 = vpop.permute.xlu0 %1774
    %1776 = vrot.lane.b32.xlu0 %v1753, 127
    %v1777 = vpop.permute.xlu0 %1776
    %1778 = vrot.lane.b32.xlu0 %v1754, 127
    %v1779 = vpop.permute.xlu0 %1778
    %1780 = vrot.lane.b32.xlu0 %v1755, 127
    %v1781 = vpop.permute.xlu0 %1780
    %1782 = vrot.lane.b32.xlu0 %v1756, 127
    %v1783 = vpop.permute.xlu0 %1782
    %v1784 = vsel %vm136, %v1767, %v1769
    %v1785 = vsel %vm136, %v1769, %v1771
    %v1786 = vsel %vm136, %v1771, %v1773
    %v1787 = vsel %vm136, %v1773, %v1775
    %v1788 = vsel %vm136, %v1775, %v1777
    %v1789 = vsel %vm136, %v1777, %v1779
    %v1790 = vsel %vm136, %v1779, %v1781
    %v1791 = vsel %vm136, %v1781, %v1783
    %v1800 = vadd.f32 %v1676, %v1784
    %v1801 = vadd.f32 %v1677, %v1785
    %v1802 = vadd.f32 %v1678, %v1786
    %v1803 = vadd.f32 %v1679, %v1787
    %v1804 = vadd.f32 %v1680, %v1788
    %v1805 = vadd.f32 %v1681, %v1789
    %v1806 = vadd.f32 %v1682, %v1790
    %v1807 = vadd.f32 %v1683, %v1791
    %s1808 = sld [smem:[#allocation6 + $0x10]]
    %v1809 = vstv %s1808
    %v1810 = vmul.f32 %v1809, %v1639
    %v1811 = vmul.f32 %v1809, %v1640
    %v1812 = vmul.f32 %v1809, %v1641
    %v1813 = vmul.f32 %v1809, %v1642
    %v1814 = vmul.f32 %v1809, %v1643
    %v1815 = vmul.f32 %v1809, %v1644
    %v1816 = vmul.f32 %v1809, %v1645
    %v1817 = vmul.f32 %v1809, %v1646
    %v1818 = vmul.f32 %v1809, %v1647
    %1828 = vrot.lane.b32.xlu0 %v1810, 126
    %v1829 = vpop.permute.xlu0 %1828
    %1830 = vrot.lane.b32.xlu0 %v1811, 126
    %v1831 = vpop.permute.xlu0 %1830
    %1832 = vrot.lane.b32.xlu0 %v1812, 126
    %v1833 = vpop.permute.xlu0 %1832
    %1834 = vrot.lane.b32.xlu0 %v1813, 126
    %v1835 = vpop.permute.xlu0 %1834
    %1836 = vrot.lane.b32.xlu0 %v1814, 126
    %v1837 = vpop.permute.xlu0 %1836
    %1838 = vrot.lane.b32.xlu0 %v1815, 126
    %v1839 = vpop.permute.xlu0 %1838
    %1840 = vrot.lane.b32.xlu0 %v1816, 126
    %v1841 = vpop.permute.xlu0 %1840
    %1842 = vrot.lane.b32.xlu0 %v1817, 126
    %v1843 = vpop.permute.xlu0 %1842
    %1844 = vrot.lane.b32.xlu0 %v1818, 126
    %v1845 = vpop.permute.xlu0 %1844
    %v1846 = vsel %vm261, %v1829, %v1831
    %v1847 = vsel %vm261, %v1831, %v1833
    %v1848 = vsel %vm261, %v1833, %v1835
    %v1849 = vsel %vm261, %v1835, %v1837
    %v1850 = vsel %vm261, %v1837, %v1839
    %v1851 = vsel %vm261, %v1839, %v1841
    %v1852 = vsel %vm261, %v1841, %v1843
    %v1853 = vsel %vm261, %v1843, %v1845
    %v1862 = vadd.f32 %v1738, %v1846
    %v1863 = vadd.f32 %v1739, %v1847
    %v1864 = vadd.f32 %v1740, %v1848
    %v1865 = vadd.f32 %v1741, %v1849
    %v1866 = vadd.f32 %v1742, %v1850
    %v1867 = vadd.f32 %v1743, %v1851
    %v1868 = vadd.f32 %v1744, %v1852
    %v1869 = vadd.f32 %v1745, %v1853
    %s1870 = sld [smem:[#allocation6 + $0x2c]]
    %v1871 = vstv %s1870
    %v1872 = vmul.f32 %v1871, %v1639
    %v1873 = vmul.f32 %v1871, %v1640
    %v1874 = vmul.f32 %v1871, %v1641
    %v1875 = vmul.f32 %v1871, %v1642
    %v1876 = vmul.f32 %v1871, %v1643
    %v1877 = vmul.f32 %v1871, %v1644
    %v1878 = vmul.f32 %v1871, %v1645
    %v1879 = vmul.f32 %v1871, %v1646
    %v1880 = vmul.f32 %v1871, %v1647
    %1890 = vrot.lane.b32.xlu0 %v1872, 126
    %v1891 = vpop.permute.xlu0 %1890
    %1892 = vrot.lane.b32.xlu0 %v1873, 126
    %v1893 = vpop.permute.xlu0 %1892
    %1894 = vrot.lane.b32.xlu0 %v1874, 126
    %v1895 = vpop.permute.xlu0 %1894
    %1896 = vrot.lane.b32.xlu0 %v1875, 126
    %v1897 = vpop.permute.xlu0 %1896
    %1898 = vrot.lane.b32.xlu0 %v1876, 126
    %v1899 = vpop.permute.xlu0 %1898
    %1900 = vrot.lane.b32.xlu0 %v1877, 126
    %v1901 = vpop.permute.xlu0 %1900
    %1902 = vrot.lane.b32.xlu0 %v1878, 126
    %v1903 = vpop.permute.xlu0 %1902
    %1904 = vrot.lane.b32.xlu0 %v1879, 126
    %v1905 = vpop.permute.xlu0 %1904
    %1906 = vrot.lane.b32.xlu0 %v1880, 126
    %v1907 = vpop.permute.xlu0 %1906
    %v1908 = vsel %vm261, %v1891, %v1893
    %v1909 = vsel %vm261, %v1893, %v1895
    %v1910 = vsel %vm261, %v1895, %v1897
    %v1911 = vsel %vm261, %v1897, %v1899
    %v1912 = vsel %vm261, %v1899, %v1901
    %v1913 = vsel %vm261, %v1901, %v1903
    %v1914 = vsel %vm261, %v1903, %v1905
    %v1915 = vsel %vm261, %v1905, %v1907
    %v1924 = vadd.f32 %v1800, %v1908
    %v1925 = vadd.f32 %v1801, %v1909
    %v1926 = vadd.f32 %v1802, %v1910
    %v1927 = vadd.f32 %v1803, %v1911
    %v1928 = vadd.f32 %v1804, %v1912
    %v1929 = vadd.f32 %v1805, %v1913
    %v1930 = vadd.f32 %v1806, %v1914
    %v1931 = vadd.f32 %v1807, %v1915
    %s1932 = sld [smem:[#allocation6 + $0x11]]
    %v1933 = vstv %s1932
    %v1934 = vmul.f32 %v1933, %v1639
    %v1935 = vmul.f32 %v1933, %v1640
    %v1936 = vmul.f32 %v1933, %v1641
    %v1937 = vmul.f32 %v1933, %v1642
    %v1938 = vmul.f32 %v1933, %v1643
    %v1939 = vmul.f32 %v1933, %v1644
    %v1940 = vmul.f32 %v1933, %v1645
    %v1941 = vmul.f32 %v1933, %v1646
    %v1942 = vmul.f32 %v1933, %v1647
    %1952 = vrot.lane.b32.xlu0 %v1934, 125
    %v1953 = vpop.permute.xlu0 %1952
    %1954 = vrot.lane.b32.xlu0 %v1935, 125
    %v1955 = vpop.permute.xlu0 %1954
    %1956 = vrot.lane.b32.xlu0 %v1936, 125
    %v1957 = vpop.permute.xlu0 %1956
    %1958 = vrot.lane.b32.xlu0 %v1937, 125
    %v1959 = vpop.permute.xlu0 %1958
    %1960 = vrot.lane.b32.xlu0 %v1938, 125
    %v1961 = vpop.permute.xlu0 %1960
    %1962 = vrot.lane.b32.xlu0 %v1939, 125
    %v1963 = vpop.permute.xlu0 %1962
    %1964 = vrot.lane.b32.xlu0 %v1940, 125
    %v1965 = vpop.permute.xlu0 %1964
    %1966 = vrot.lane.b32.xlu0 %v1941, 125
    %v1967 = vpop.permute.xlu0 %1966
    %1968 = vrot.lane.b32.xlu0 %v1942, 125
    %v1969 = vpop.permute.xlu0 %1968
    %v1970 = vsel %vm386, %v1953, %v1955
    %v1971 = vsel %vm386, %v1955, %v1957
    %v1972 = vsel %vm386, %v1957, %v1959
    %v1973 = vsel %vm386, %v1959, %v1961
    %v1974 = vsel %vm386, %v1961, %v1963
    %v1975 = vsel %vm386, %v1963, %v1965
    %v1976 = vsel %vm386, %v1965, %v1967
    %v1977 = vsel %vm386, %v1967, %v1969
    %v1986 = vadd.f32 %v1862, %v1970
    %v1987 = vadd.f32 %v1863, %v1971
    %v1988 = vadd.f32 %v1864, %v1972
    %v1989 = vadd.f32 %v1865, %v1973
    %v1990 = vadd.f32 %v1866, %v1974
    %v1991 = vadd.f32 %v1867, %v1975
    %v1992 = vadd.f32 %v1868, %v1976
    %v1993 = vadd.f32 %v1869, %v1977
    %s1994 = sld [smem:[#allocation6 + $0x2d]]
    %v1995 = vstv %s1994
    %v1996 = vmul.f32 %v1995, %v1639
    %v1997 = vmul.f32 %v1995, %v1640
    %v1998 = vmul.f32 %v1995, %v1641
    %v1999 = vmul.f32 %v1995, %v1642
    %v2000 = vmul.f32 %v1995, %v1643
    %v2001 = vmul.f32 %v1995, %v1644
    %v2002 = vmul.f32 %v1995, %v1645
    %v2003 = vmul.f32 %v1995, %v1646
    %v2004 = vmul.f32 %v1995, %v1647
    %2014 = vrot.lane.b32.xlu0 %v1996, 125
    %v2015 = vpop.permute.xlu0 %2014
    %2016 = vrot.lane.b32.xlu0 %v1997, 125
    %v2017 = vpop.permute.xlu0 %2016
    %2018 = vrot.lane.b32.xlu0 %v1998, 125
    %v2019 = vpop.permute.xlu0 %2018
    %2020 = vrot.lane.b32.xlu0 %v1999, 125
    %v2021 = vpop.permute.xlu0 %2020
    %2022 = vrot.lane.b32.xlu0 %v2000, 125
    %v2023 = vpop.permute.xlu0 %2022
    %2024 = vrot.lane.b32.xlu0 %v2001, 125
    %v2025 = vpop.permute.xlu0 %2024
    %2026 = vrot.lane.b32.xlu0 %v2002, 125
    %v2027 = vpop.permute.xlu0 %2026
    %2028 = vrot.lane.b32.xlu0 %v2003, 125
    %v2029 = vpop.permute.xlu0 %2028
    %2030 = vrot.lane.b32.xlu0 %v2004, 125
    %v2031 = vpop.permute.xlu0 %2030
    %v2032 = vsel %vm386, %v2015, %v2017
    %v2033 = vsel %vm386, %v2017, %v2019
    %v2034 = vsel %vm386, %v2019, %v2021
    %v2035 = vsel %vm386, %v2021, %v2023
    %v2036 = vsel %vm386, %v2023, %v2025
    %v2037 = vsel %vm386, %v2025, %v2027
    %v2038 = vsel %vm386, %v2027, %v2029
    %v2039 = vsel %vm386, %v2029, %v2031
    %v2048 = vadd.f32 %v1924, %v2032
    %v2049 = vadd.f32 %v1925, %v2033
    %v2050 = vadd.f32 %v1926, %v2034
    %v2051 = vadd.f32 %v1927, %v2035
    %v2052 = vadd.f32 %v1928, %v2036
    %v2053 = vadd.f32 %v1929, %v2037
    %v2054 = vadd.f32 %v1930, %v2038
    %v2055 = vadd.f32 %v1931, %v2039
    %s2056 = sld [smem:[#allocation6 + $0x12]]
    %v2057 = vstv %s2056
    %v2058 = vmul.f32 %v2057, %v1639
    %v2059 = vmul.f32 %v2057, %v1640
    %v2060 = vmul.f32 %v2057, %v1641
    %v2061 = vmul.f32 %v2057, %v1642
    %v2062 = vmul.f32 %v2057, %v1643
    %v2063 = vmul.f32 %v2057, %v1644
    %v2064 = vmul.f32 %v2057, %v1645
    %v2065 = vmul.f32 %v2057, %v1646
    %v2066 = vmul.f32 %v2057, %v1647
    %2076 = vrot.lane.b32.xlu0 %v2058, 124
    %v2077 = vpop.permute.xlu0 %2076
    %2078 = vrot.lane.b32.xlu0 %v2059, 124
    %v2079 = vpop.permute.xlu0 %2078
    %2080 = vrot.lane.b32.xlu0 %v2060, 124
    %v2081 = vpop.permute.xlu0 %2080
    %2082 = vrot.lane.b32.xlu0 %v2061, 124
    %v2083 = vpop.permute.xlu0 %2082
    %2084 = vrot.lane.b32.xlu0 %v2062, 124
    %v2085 = vpop.permute.xlu0 %2084
    %2086 = vrot.lane.b32.xlu0 %v2063, 124
    %v2087 = vpop.permute.xlu0 %2086
    %2088 = vrot.lane.b32.xlu0 %v2064, 124
    %v2089 = vpop.permute.xlu0 %2088
    %2090 = vrot.lane.b32.xlu0 %v2065, 124
    %v2091 = vpop.permute.xlu0 %2090
    %2092 = vrot.lane.b32.xlu0 %v2066, 124
    %v2093 = vpop.permute.xlu0 %2092
    %v2094 = vsel %vm511, %v2077, %v2079
    %v2095 = vsel %vm511, %v2079, %v2081
    %v2096 = vsel %vm511, %v2081, %v2083
    %v2097 = vsel %vm511, %v2083, %v2085
    %v2098 = vsel %vm511, %v2085, %v2087
    %v2099 = vsel %vm511, %v2087, %v2089
    %v2100 = vsel %vm511, %v2089, %v2091
    %v2101 = vsel %vm511, %v2091, %v2093
    %v2110 = vadd.f32 %v1986, %v2094
    %v2111 = vadd.f32 %v1987, %v2095
    %v2112 = vadd.f32 %v1988, %v2096
    %v2113 = vadd.f32 %v1989, %v2097
    %v2114 = vadd.f32 %v1990, %v2098
    %v2115 = vadd.f32 %v1991, %v2099
    %v2116 = vadd.f32 %v1992, %v2100
    %v2117 = vadd.f32 %v1993, %v2101
    %s2118 = sld [smem:[#allocation6 + $0x2e]]
    %v2119 = vstv %s2118
    %v2120 = vmul.f32 %v2119, %v1639
    %v2121 = vmul.f32 %v2119, %v1640
    %v2122 = vmul.f32 %v2119, %v1641
    %v2123 = vmul.f32 %v2119, %v1642
    %v2124 = vmul.f32 %v2119, %v1643
    %v2125 = vmul.f32 %v2119, %v1644
    %v2126 = vmul.f32 %v2119, %v1645
    %v2127 = vmul.f32 %v2119, %v1646
    %v2128 = vmul.f32 %v2119, %v1647
    %2138 = vrot.lane.b32.xlu0 %v2120, 124
    %v2139 = vpop.permute.xlu0 %2138
    %2140 = vrot.lane.b32.xlu0 %v2121, 124
    %v2141 = vpop.permute.xlu0 %2140
    %2142 = vrot.lane.b32.xlu0 %v2122, 124
    %v2143 = vpop.permute.xlu0 %2142
    %2144 = vrot.lane.b32.xlu0 %v2123, 124
    %v2145 = vpop.permute.xlu0 %2144
    %2146 = vrot.lane.b32.xlu0 %v2124, 124
    %v2147 = vpop.permute.xlu0 %2146
    %2148 = vrot.lane.b32.xlu0 %v2125, 124
    %v2149 = vpop.permute.xlu0 %2148
    %2150 = vrot.lane.b32.xlu0 %v2126, 124
    %v2151 = vpop.permute.xlu0 %2150
    %2152 = vrot.lane.b32.xlu0 %v2127, 124
    %v2153 = vpop.permute.xlu0 %2152
    %2154 = vrot.lane.b32.xlu0 %v2128, 124
    %v2155 = vpop.permute.xlu0 %2154
    %v2156 = vsel %vm511, %v2139, %v2141
    %v2157 = vsel %vm511, %v2141, %v2143
    %v2158 = vsel %vm511, %v2143, %v2145
    %v2159 = vsel %vm511, %v2145, %v2147
    %v2160 = vsel %vm511, %v2147, %v2149
    %v2161 = vsel %vm511, %v2149, %v2151
    %v2162 = vsel %vm511, %v2151, %v2153
    %v2163 = vsel %vm511, %v2153, %v2155
    %v2172 = vadd.f32 %v2048, %v2156
    %v2173 = vadd.f32 %v2049, %v2157
    %v2174 = vadd.f32 %v2050, %v2158
    %v2175 = vadd.f32 %v2051, %v2159
    %v2176 = vadd.f32 %v2052, %v2160
    %v2177 = vadd.f32 %v2053, %v2161
    %v2178 = vadd.f32 %v2054, %v2162
    %v2179 = vadd.f32 %v2055, %v2163
    %s2180 = sld [smem:[#allocation6 + $0x13]]
    %v2181 = vstv %s2180
    %v2182 = vmul.f32 %v2181, %v1639
    %v2183 = vmul.f32 %v2181, %v1640
    %v2184 = vmul.f32 %v2181, %v1641
    %v2185 = vmul.f32 %v2181, %v1642
    %v2186 = vmul.f32 %v2181, %v1643
    %v2187 = vmul.f32 %v2181, %v1644
    %v2188 = vmul.f32 %v2181, %v1645
    %v2189 = vmul.f32 %v2181, %v1646
    %v2190 = vmul.f32 %v2181, %v1647
    %2200 = vrot.lane.b32.xlu0 %v2182, 123
    %v2201 = vpop.permute.xlu0 %2200
    %2202 = vrot.lane.b32.xlu0 %v2183, 123
    %v2203 = vpop.permute.xlu0 %2202
    %2204 = vrot.lane.b32.xlu0 %v2184, 123
    %v2205 = vpop.permute.xlu0 %2204
    %2206 = vrot.lane.b32.xlu0 %v2185, 123
    %v2207 = vpop.permute.xlu0 %2206
    %2208 = vrot.lane.b32.xlu0 %v2186, 123
    %v2209 = vpop.permute.xlu0 %2208
    %2210 = vrot.lane.b32.xlu0 %v2187, 123
    %v2211 = vpop.permute.xlu0 %2210
    %2212 = vrot.lane.b32.xlu0 %v2188, 123
    %v2213 = vpop.permute.xlu0 %2212
    %2214 = vrot.lane.b32.xlu0 %v2189, 123
    %v2215 = vpop.permute.xlu0 %2214
    %2216 = vrot.lane.b32.xlu0 %v2190, 123
    %v2217 = vpop.permute.xlu0 %2216
    %v2218 = vsel %vm636, %v2201, %v2203
    %v2219 = vsel %vm636, %v2203, %v2205
    %v2220 = vsel %vm636, %v2205, %v2207
    %v2221 = vsel %vm636, %v2207, %v2209
    %v2222 = vsel %vm636, %v2209, %v2211
    %v2223 = vsel %vm636, %v2211, %v2213
    %v2224 = vsel %vm636, %v2213, %v2215
    %v2225 = vsel %vm636, %v2215, %v2217
    %v2234 = vadd.f32 %v2110, %v2218
    %v2235 = vadd.f32 %v2111, %v2219
    %v2236 = vadd.f32 %v2112, %v2220
    %v2237 = vadd.f32 %v2113, %v2221
    %v2238 = vadd.f32 %v2114, %v2222
    %v2239 = vadd.f32 %v2115, %v2223
    %v2240 = vadd.f32 %v2116, %v2224
    %v2241 = vadd.f32 %v2117, %v2225
    %s2242 = sld [smem:[#allocation6 + $0x2f]]
    %v2243 = vstv %s2242
    %v2244 = vmul.f32 %v2243, %v1639
    %v2245 = vmul.f32 %v2243, %v1640
    %v2246 = vmul.f32 %v2243, %v1641
    %v2247 = vmul.f32 %v2243, %v1642
    %v2248 = vmul.f32 %v2243, %v1643
    %v2249 = vmul.f32 %v2243, %v1644
    %v2250 = vmul.f32 %v2243, %v1645
    %v2251 = vmul.f32 %v2243, %v1646
    %v2252 = vmul.f32 %v2243, %v1647
    %2262 = vrot.lane.b32.xlu0 %v2244, 123
    %v2263 = vpop.permute.xlu0 %2262
    %2264 = vrot.lane.b32.xlu0 %v2245, 123
    %v2265 = vpop.permute.xlu0 %2264
    %2266 = vrot.lane.b32.xlu0 %v2246, 123
    %v2267 = vpop.permute.xlu0 %2266
    %2268 = vrot.lane.b32.xlu0 %v2247, 123
    %v2269 = vpop.permute.xlu0 %2268
    %2270 = vrot.lane.b32.xlu0 %v2248, 123
    %v2271 = vpop.permute.xlu0 %2270
    %2272 = vrot.lane.b32.xlu0 %v2249, 123
    %v2273 = vpop.permute.xlu0 %2272
    %2274 = vrot.lane.b32.xlu0 %v2250, 123
    %v2275 = vpop.permute.xlu0 %2274
    %2276 = vrot.lane.b32.xlu0 %v2251, 123
    %v2277 = vpop.permute.xlu0 %2276
    %2278 = vrot.lane.b32.xlu0 %v2252, 123
    %v2279 = vpop.permute.xlu0 %2278
    %v2280 = vsel %vm636, %v2263, %v2265
    %v2281 = vsel %vm636, %v2265, %v2267
    %v2282 = vsel %vm636, %v2267, %v2269
    %v2283 = vsel %vm636, %v2269, %v2271
    %v2284 = vsel %vm636, %v2271, %v2273
    %v2285 = vsel %vm636, %v2273, %v2275
    %v2286 = vsel %vm636, %v2275, %v2277
    %v2287 = vsel %vm636, %v2277, %v2279
    %v2296 = vadd.f32 %v2172, %v2280
    %v2297 = vadd.f32 %v2173, %v2281
    %v2298 = vadd.f32 %v2174, %v2282
    %v2299 = vadd.f32 %v2175, %v2283
    %v2300 = vadd.f32 %v2176, %v2284
    %v2301 = vadd.f32 %v2177, %v2285
    %v2302 = vadd.f32 %v2178, %v2286
    %v2303 = vadd.f32 %v2179, %v2287
    %s2304 = sld [smem:[#allocation6 + $0x14]]
    %v2305 = vstv %s2304
    %v2306 = vmul.f32 %v2305, %v1639
    %v2307 = vmul.f32 %v2305, %v1640
    %v2308 = vmul.f32 %v2305, %v1641
    %v2309 = vmul.f32 %v2305, %v1642
    %v2310 = vmul.f32 %v2305, %v1643
    %v2311 = vmul.f32 %v2305, %v1644
    %v2312 = vmul.f32 %v2305, %v1645
    %v2313 = vmul.f32 %v2305, %v1646
    %v2314 = vmul.f32 %v2305, %v1647
    %2324 = vrot.lane.b32.xlu0 %v2306, 122
    %v2325 = vpop.permute.xlu0 %2324
    %2326 = vrot.lane.b32.xlu0 %v2307, 122
    %v2327 = vpop.permute.xlu0 %2326
    %2328 = vrot.lane.b32.xlu0 %v2308, 122
    %v2329 = vpop.permute.xlu0 %2328
    %2330 = vrot.lane.b32.xlu0 %v2309, 122
    %v2331 = vpop.permute.xlu0 %2330
    %2332 = vrot.lane.b32.xlu0 %v2310, 122
    %v2333 = vpop.permute.xlu0 %2332
    %2334 = vrot.lane.b32.xlu0 %v2311, 122
    %v2335 = vpop.permute.xlu0 %2334
    %2336 = vrot.lane.b32.xlu0 %v2312, 122
    %v2337 = vpop.permute.xlu0 %2336
    %2338 = vrot.lane.b32.xlu0 %v2313, 122
    %v2339 = vpop.permute.xlu0 %2338
    %2340 = vrot.lane.b32.xlu0 %v2314, 122
    %v2341 = vpop.permute.xlu0 %2340
    %v2342 = vsel %vm761, %v2325, %v2327
    %v2343 = vsel %vm761, %v2327, %v2329
    %v2344 = vsel %vm761, %v2329, %v2331
    %v2345 = vsel %vm761, %v2331, %v2333
    %v2346 = vsel %vm761, %v2333, %v2335
    %v2347 = vsel %vm761, %v2335, %v2337
    %v2348 = vsel %vm761, %v2337, %v2339
    %v2349 = vsel %vm761, %v2339, %v2341
    %v2358 = vadd.f32 %v2234, %v2342
    %v2359 = vadd.f32 %v2235, %v2343
    %v2360 = vadd.f32 %v2236, %v2344
    %v2361 = vadd.f32 %v2237, %v2345
    %v2362 = vadd.f32 %v2238, %v2346
    %v2363 = vadd.f32 %v2239, %v2347
    %v2364 = vadd.f32 %v2240, %v2348
    %v2365 = vadd.f32 %v2241, %v2349
    %s2366 = sld [smem:[#allocation6 + $0x30]]
    %v2367 = vstv %s2366
    %v2368 = vmul.f32 %v2367, %v1639
    %v2369 = vmul.f32 %v2367, %v1640
    %v2370 = vmul.f32 %v2367, %v1641
    %v2371 = vmul.f32 %v2367, %v1642
    %v2372 = vmul.f32 %v2367, %v1643
    %v2373 = vmul.f32 %v2367, %v1644
    %v2374 = vmul.f32 %v2367, %v1645
    %v2375 = vmul.f32 %v2367, %v1646
    %v2376 = vmul.f32 %v2367, %v1647
    %2386 = vrot.lane.b32.xlu0 %v2368, 122
    %v2387 = vpop.permute.xlu0 %2386
    %2388 = vrot.lane.b32.xlu0 %v2369, 122
    %v2389 = vpop.permute.xlu0 %2388
    %2390 = vrot.lane.b32.xlu0 %v2370, 122
    %v2391 = vpop.permute.xlu0 %2390
    %2392 = vrot.lane.b32.xlu0 %v2371, 122
    %v2393 = vpop.permute.xlu0 %2392
    %2394 = vrot.lane.b32.xlu0 %v2372, 122
    %v2395 = vpop.permute.xlu0 %2394
    %2396 = vrot.lane.b32.xlu0 %v2373, 122
    %v2397 = vpop.permute.xlu0 %2396
    %2398 = vrot.lane.b32.xlu0 %v2374, 122
    %v2399 = vpop.permute.xlu0 %2398
    %2400 = vrot.lane.b32.xlu0 %v2375, 122
    %v2401 = vpop.permute.xlu0 %2400
    %2402 = vrot.lane.b32.xlu0 %v2376, 122
    %v2403 = vpop.permute.xlu0 %2402
    %v2404 = vsel %vm761, %v2387, %v2389
    %v2405 = vsel %vm761, %v2389, %v2391
    %v2406 = vsel %vm761, %v2391, %v2393
    %v2407 = vsel %vm761, %v2393, %v2395
    %v2408 = vsel %vm761, %v2395, %v2397
    %v2409 = vsel %vm761, %v2397, %v2399
    %v2410 = vsel %vm761, %v2399, %v2401
    %v2411 = vsel %vm761, %v2401, %v2403
    %v2420 = vadd.f32 %v2296, %v2404
    %v2421 = vadd.f32 %v2297, %v2405
    %v2422 = vadd.f32 %v2298, %v2406
    %v2423 = vadd.f32 %v2299, %v2407
    %v2424 = vadd.f32 %v2300, %v2408
    %v2425 = vadd.f32 %v2301, %v2409
    %v2426 = vadd.f32 %v2302, %v2410
    %v2427 = vadd.f32 %v2303, %v2411
    %s2428 = scalar_lea.vmem %s2, 216
    %v2429 = vld [vmem:[%s2428] sm:$0xff]
    %v2430 = vld [vmem:[%s2428 + $0x8] sm:$0xff]
    %v2431 = vld [vmem:[%s2428 + $0x10] sm:$0xff]
    %v2432 = vld [vmem:[%s2428 + $0x18] sm:$0xff]
    %v2433 = vld [vmem:[%s2428 + $0x20] sm:$0xff]
    %v2434 = vld [vmem:[%s2428 + $0x28] sm:$0xff]
    %v2435 = vld [vmem:[%s2428 + $0x30] sm:$0xff]
    %v2436 = vld [vmem:[%s2428 + $0x38] sm:$0xff]
    %v2437 = vld [vmem:[%s2428 + $0x40] sm:$0xff]
    %s2438 = sld [smem:[#allocation6 + $0x15]]
    %v2439 = vstv %s2438
    %v2440 = vmul.f32 %v2439, %v2429
    %v2441 = vmul.f32 %v2439, %v2430
    %v2442 = vmul.f32 %v2439, %v2431
    %v2443 = vmul.f32 %v2439, %v2432
    %v2444 = vmul.f32 %v2439, %v2433
    %v2445 = vmul.f32 %v2439, %v2434
    %v2446 = vmul.f32 %v2439, %v2435
    %v2447 = vmul.f32 %v2439, %v2436
    %v2448 = vadd.f32 %v2358, %v2440
    %v2449 = vadd.f32 %v2359, %v2441
    %v2450 = vadd.f32 %v2360, %v2442
    %v2451 = vadd.f32 %v2361, %v2443
    %v2452 = vadd.f32 %v2362, %v2444
    %v2453 = vadd.f32 %v2363, %v2445
    %v2454 = vadd.f32 %v2364, %v2446
    %v2455 = vadd.f32 %v2365, %v2447
    %s2456 = sld [smem:[#allocation6 + $0x31]]
    %v2457 = vstv %s2456
    %v2458 = vmul.f32 %v2457, %v2429
    %v2459 = vmul.f32 %v2457, %v2430
    %v2460 = vmul.f32 %v2457, %v2431
    %v2461 = vmul.f32 %v2457, %v2432
    %v2462 = vmul.f32 %v2457, %v2433
    %v2463 = vmul.f32 %v2457, %v2434
    %v2464 = vmul.f32 %v2457, %v2435
    %v2465 = vmul.f32 %v2457, %v2436
    %v2466 = vadd.f32 %v2420, %v2458
    %v2467 = vadd.f32 %v2421, %v2459
    %v2468 = vadd.f32 %v2422, %v2460
    %v2469 = vadd.f32 %v2423, %v2461
    %v2470 = vadd.f32 %v2424, %v2462
    %v2471 = vadd.f32 %v2425, %v2463
    %v2472 = vadd.f32 %v2426, %v2464
    %v2473 = vadd.f32 %v2427, %v2465
    %s2474 = sld [smem:[#allocation6 + $0x16]]
    %v2475 = vstv %s2474
    %v2476 = vmul.f32 %v2475, %v2429
    %v2477 = vmul.f32 %v2475, %v2430
    %v2478 = vmul.f32 %v2475, %v2431
    %v2479 = vmul.f32 %v2475, %v2432
    %v2480 = vmul.f32 %v2475, %v2433
    %v2481 = vmul.f32 %v2475, %v2434
    %v2482 = vmul.f32 %v2475, %v2435
    %v2483 = vmul.f32 %v2475, %v2436
    %v2484 = vmul.f32 %v2475, %v2437
    %2494 = vrot.lane.b32.xlu0 %v2476, 127
    %v2495 = vpop.permute.xlu0 %2494
    %2496 = vrot.lane.b32.xlu0 %v2477, 127
    %v2497 = vpop.permute.xlu0 %2496
    %2498 = vrot.lane.b32.xlu0 %v2478, 127
    %v2499 = vpop.permute.xlu0 %2498
    %2500 = vrot.lane.b32.xlu0 %v2479, 127
    %v2501 = vpop.permute.xlu0 %2500
    %2502 = vrot.lane.b32.xlu0 %v2480, 127
    %v2503 = vpop.permute.xlu0 %2502
    %2504 = vrot.lane.b32.xlu0 %v2481, 127
    %v2505 = vpop.permute.xlu0 %2504
    %2506 = vrot.lane.b32.xlu0 %v2482, 127
    %v2507 = vpop.permute.xlu0 %2506
    %2508 = vrot.lane.b32.xlu0 %v2483, 127
    %v2509 = vpop.permute.xlu0 %2508
    %2510 = vrot.lane.b32.xlu0 %v2484, 127
    %v2511 = vpop.permute.xlu0 %2510
    %v2512 = vsel %vm136, %v2495, %v2497
    %v2513 = vsel %vm136, %v2497, %v2499
    %v2514 = vsel %vm136, %v2499, %v2501
    %v2515 = vsel %vm136, %v2501, %v2503
    %v2516 = vsel %vm136, %v2503, %v2505
    %v2517 = vsel %vm136, %v2505, %v2507
    %v2518 = vsel %vm136, %v2507, %v2509
    %v2519 = vsel %vm136, %v2509, %v2511
    %v2528 = vadd.f32 %v2448, %v2512
    %v2529 = vadd.f32 %v2449, %v2513
    %v2530 = vadd.f32 %v2450, %v2514
    %v2531 = vadd.f32 %v2451, %v2515
    %v2532 = vadd.f32 %v2452, %v2516
    %v2533 = vadd.f32 %v2453, %v2517
    %v2534 = vadd.f32 %v2454, %v2518
    %v2535 = vadd.f32 %v2455, %v2519
    %s2536 = sld [smem:[#allocation6 + $0x32]]
    %v2537 = vstv %s2536
    %v2538 = vmul.f32 %v2537, %v2429
    %v2539 = vmul.f32 %v2537, %v2430
    %v2540 = vmul.f32 %v2537, %v2431
    %v2541 = vmul.f32 %v2537, %v2432
    %v2542 = vmul.f32 %v2537, %v2433
    %v2543 = vmul.f32 %v2537, %v2434
    %v2544 = vmul.f32 %v2537, %v2435
    %v2545 = vmul.f32 %v2537, %v2436
    %v2546 = vmul.f32 %v2537, %v2437
    %2556 = vrot.lane.b32.xlu0 %v2538, 127
    %v2557 = vpop.permute.xlu0 %2556
    %2558 = vrot.lane.b32.xlu0 %v2539, 127
    %v2559 = vpop.permute.xlu0 %2558
    %2560 = vrot.lane.b32.xlu0 %v2540, 127
    %v2561 = vpop.permute.xlu0 %2560
    %2562 = vrot.lane.b32.xlu0 %v2541, 127
    %v2563 = vpop.permute.xlu0 %2562
    %2564 = vrot.lane.b32.xlu0 %v2542, 127
    %v2565 = vpop.permute.xlu0 %2564
    %2566 = vrot.lane.b32.xlu0 %v2543, 127
    %v2567 = vpop.permute.xlu0 %2566
    %2568 = vrot.lane.b32.xlu0 %v2544, 127
    %v2569 = vpop.permute.xlu0 %2568
    %2570 = vrot.lane.b32.xlu0 %v2545, 127
    %v2571 = vpop.permute.xlu0 %2570
    %2572 = vrot.lane.b32.xlu0 %v2546, 127
    %v2573 = vpop.permute.xlu0 %2572
    %v2574 = vsel %vm136, %v2557, %v2559
    %v2575 = vsel %vm136, %v2559, %v2561
    %v2576 = vsel %vm136, %v2561, %v2563
    %v2577 = vsel %vm136, %v2563, %v2565
    %v2578 = vsel %vm136, %v2565, %v2567
    %v2579 = vsel %vm136, %v2567, %v2569
    %v2580 = vsel %vm136, %v2569, %v2571
    %v2581 = vsel %vm136, %v2571, %v2573
    %v2590 = vadd.f32 %v2466, %v2574
    %v2591 = vadd.f32 %v2467, %v2575
    %v2592 = vadd.f32 %v2468, %v2576
    %v2593 = vadd.f32 %v2469, %v2577
    %v2594 = vadd.f32 %v2470, %v2578
    %v2595 = vadd.f32 %v2471, %v2579
    %v2596 = vadd.f32 %v2472, %v2580
    %v2597 = vadd.f32 %v2473, %v2581
    %s2598 = sld [smem:[#allocation6 + $0x17]]
    %v2599 = vstv %s2598
    %v2600 = vmul.f32 %v2599, %v2429
    %v2601 = vmul.f32 %v2599, %v2430
    %v2602 = vmul.f32 %v2599, %v2431
    %v2603 = vmul.f32 %v2599, %v2432
    %v2604 = vmul.f32 %v2599, %v2433
    %v2605 = vmul.f32 %v2599, %v2434
    %v2606 = vmul.f32 %v2599, %v2435
    %v2607 = vmul.f32 %v2599, %v2436
    %v2608 = vmul.f32 %v2599, %v2437
    %2618 = vrot.lane.b32.xlu0 %v2600, 126
    %v2619 = vpop.permute.xlu0 %2618
    %2620 = vrot.lane.b32.xlu0 %v2601, 126
    %v2621 = vpop.permute.xlu0 %2620
    %2622 = vrot.lane.b32.xlu0 %v2602, 126
    %v2623 = vpop.permute.xlu0 %2622
    %2624 = vrot.lane.b32.xlu0 %v2603, 126
    %v2625 = vpop.permute.xlu0 %2624
    %2626 = vrot.lane.b32.xlu0 %v2604, 126
    %v2627 = vpop.permute.xlu0 %2626
    %2628 = vrot.lane.b32.xlu0 %v2605, 126
    %v2629 = vpop.permute.xlu0 %2628
    %2630 = vrot.lane.b32.xlu0 %v2606, 126
    %v2631 = vpop.permute.xlu0 %2630
    %2632 = vrot.lane.b32.xlu0 %v2607, 126
    %v2633 = vpop.permute.xlu0 %2632
    %2634 = vrot.lane.b32.xlu0 %v2608, 126
    %v2635 = vpop.permute.xlu0 %2634
    %v2636 = vsel %vm261, %v2619, %v2621
    %v2637 = vsel %vm261, %v2621, %v2623
    %v2638 = vsel %vm261, %v2623, %v2625
    %v2639 = vsel %vm261, %v2625, %v2627
    %v2640 = vsel %vm261, %v2627, %v2629
    %v2641 = vsel %vm261, %v2629, %v2631
    %v2642 = vsel %vm261, %v2631, %v2633
    %v2643 = vsel %vm261, %v2633, %v2635
    %v2652 = vadd.f32 %v2528, %v2636
    %v2653 = vadd.f32 %v2529, %v2637
    %v2654 = vadd.f32 %v2530, %v2638
    %v2655 = vadd.f32 %v2531, %v2639
    %v2656 = vadd.f32 %v2532, %v2640
    %v2657 = vadd.f32 %v2533, %v2641
    %v2658 = vadd.f32 %v2534, %v2642
    %v2659 = vadd.f32 %v2535, %v2643
    %s2660 = sld [smem:[#allocation6 + $0x33]]
    %v2661 = vstv %s2660
    %v2662 = vmul.f32 %v2661, %v2429
    %v2663 = vmul.f32 %v2661, %v2430
    %v2664 = vmul.f32 %v2661, %v2431
    %v2665 = vmul.f32 %v2661, %v2432
    %v2666 = vmul.f32 %v2661, %v2433
    %v2667 = vmul.f32 %v2661, %v2434
    %v2668 = vmul.f32 %v2661, %v2435
    %v2669 = vmul.f32 %v2661, %v2436
    %v2670 = vmul.f32 %v2661, %v2437
    %2680 = vrot.lane.b32.xlu0 %v2662, 126
    %v2681 = vpop.permute.xlu0 %2680
    %2682 = vrot.lane.b32.xlu0 %v2663, 126
    %v2683 = vpop.permute.xlu0 %2682
    %2684 = vrot.lane.b32.xlu0 %v2664, 126
    %v2685 = vpop.permute.xlu0 %2684
    %2686 = vrot.lane.b32.xlu0 %v2665, 126
    %v2687 = vpop.permute.xlu0 %2686
    %2688 = vrot.lane.b32.xlu0 %v2666, 126
    %v2689 = vpop.permute.xlu0 %2688
    %2690 = vrot.lane.b32.xlu0 %v2667, 126
    %v2691 = vpop.permute.xlu0 %2690
    %2692 = vrot.lane.b32.xlu0 %v2668, 126
    %v2693 = vpop.permute.xlu0 %2692
    %2694 = vrot.lane.b32.xlu0 %v2669, 126
    %v2695 = vpop.permute.xlu0 %2694
    %2696 = vrot.lane.b32.xlu0 %v2670, 126
    %v2697 = vpop.permute.xlu0 %2696
    %v2698 = vsel %vm261, %v2681, %v2683
    %v2699 = vsel %vm261, %v2683, %v2685
    %v2700 = vsel %vm261, %v2685, %v2687
    %v2701 = vsel %vm261, %v2687, %v2689
    %v2702 = vsel %vm261, %v2689, %v2691
    %v2703 = vsel %vm261, %v2691, %v2693
    %v2704 = vsel %vm261, %v2693, %v2695
    %v2705 = vsel %vm261, %v2695, %v2697
    %v2714 = vadd.f32 %v2590, %v2698
    %v2715 = vadd.f32 %v2591, %v2699
    %v2716 = vadd.f32 %v2592, %v2700
    %v2717 = vadd.f32 %v2593, %v2701
    %v2718 = vadd.f32 %v2594, %v2702
    %v2719 = vadd.f32 %v2595, %v2703
    %v2720 = vadd.f32 %v2596, %v2704
    %v2721 = vadd.f32 %v2597, %v2705
    %s2722 = sld [smem:[#allocation6 + $0x18]]
    %v2723 = vstv %s2722
    %v2724 = vmul.f32 %v2723, %v2429
    %v2725 = vmul.f32 %v2723, %v2430
    %v2726 = vmul.f32 %v2723, %v2431
    %v2727 = vmul.f32 %v2723, %v2432
    %v2728 = vmul.f32 %v2723, %v2433
    %v2729 = vmul.f32 %v2723, %v2434
    %v2730 = vmul.f32 %v2723, %v2435
    %v2731 = vmul.f32 %v2723, %v2436
    %v2732 = vmul.f32 %v2723, %v2437
    %2742 = vrot.lane.b32.xlu0 %v2724, 125
    %v2743 = vpop.permute.xlu0 %2742
    %2744 = vrot.lane.b32.xlu0 %v2725, 125
    %v2745 = vpop.permute.xlu0 %2744
    %2746 = vrot.lane.b32.xlu0 %v2726, 125
    %v2747 = vpop.permute.xlu0 %2746
    %2748 = vrot.lane.b32.xlu0 %v2727, 125
    %v2749 = vpop.permute.xlu0 %2748
    %2750 = vrot.lane.b32.xlu0 %v2728, 125
    %v2751 = vpop.permute.xlu0 %2750
    %2752 = vrot.lane.b32.xlu0 %v2729, 125
    %v2753 = vpop.permute.xlu0 %2752
    %2754 = vrot.lane.b32.xlu0 %v2730, 125
    %v2755 = vpop.permute.xlu0 %2754
    %2756 = vrot.lane.b32.xlu0 %v2731, 125
    %v2757 = vpop.permute.xlu0 %2756
    %2758 = vrot.lane.b32.xlu0 %v2732, 125
    %v2759 = vpop.permute.xlu0 %2758
    %v2760 = vsel %vm386, %v2743, %v2745
    %v2761 = vsel %vm386, %v2745, %v2747
    %v2762 = vsel %vm386, %v2747, %v2749
    %v2763 = vsel %vm386, %v2749, %v2751
    %v2764 = vsel %vm386, %v2751, %v2753
    %v2765 = vsel %vm386, %v2753, %v2755
    %v2766 = vsel %vm386, %v2755, %v2757
    %v2767 = vsel %vm386, %v2757, %v2759
    %v2776 = vadd.f32 %v2652, %v2760
    %v2777 = vadd.f32 %v2653, %v2761
    %v2778 = vadd.f32 %v2654, %v2762
    %v2779 = vadd.f32 %v2655, %v2763
    %v2780 = vadd.f32 %v2656, %v2764
    %v2781 = vadd.f32 %v2657, %v2765
    %v2782 = vadd.f32 %v2658, %v2766
    %v2783 = vadd.f32 %v2659, %v2767
    %s2784 = sld [smem:[#allocation6 + $0x34]]
    %v2785 = vstv %s2784
    %v2786 = vmul.f32 %v2785, %v2429
    %v2787 = vmul.f32 %v2785, %v2430
    %v2788 = vmul.f32 %v2785, %v2431
    %v2789 = vmul.f32 %v2785, %v2432
    %v2790 = vmul.f32 %v2785, %v2433
    %v2791 = vmul.f32 %v2785, %v2434
    %v2792 = vmul.f32 %v2785, %v2435
    %v2793 = vmul.f32 %v2785, %v2436
    %v2794 = vmul.f32 %v2785, %v2437
    %2804 = vrot.lane.b32.xlu0 %v2786, 125
    %v2805 = vpop.permute.xlu0 %2804
    %2806 = vrot.lane.b32.xlu0 %v2787, 125
    %v2807 = vpop.permute.xlu0 %2806
    %2808 = vrot.lane.b32.xlu0 %v2788, 125
    %v2809 = vpop.permute.xlu0 %2808
    %2810 = vrot.lane.b32.xlu0 %v2789, 125
    %v2811 = vpop.permute.xlu0 %2810
    %2812 = vrot.lane.b32.xlu0 %v2790, 125
    %v2813 = vpop.permute.xlu0 %2812
    %2814 = vrot.lane.b32.xlu0 %v2791, 125
    %v2815 = vpop.permute.xlu0 %2814
    %2816 = vrot.lane.b32.xlu0 %v2792, 125
    %v2817 = vpop.permute.xlu0 %2816
    %2818 = vrot.lane.b32.xlu0 %v2793, 125
    %v2819 = vpop.permute.xlu0 %2818
    %2820 = vrot.lane.b32.xlu0 %v2794, 125
    %v2821 = vpop.permute.xlu0 %2820
    %v2822 = vsel %vm386, %v2805, %v2807
    %v2823 = vsel %vm386, %v2807, %v2809
    %v2824 = vsel %vm386, %v2809, %v2811
    %v2825 = vsel %vm386, %v2811, %v2813
    %v2826 = vsel %vm386, %v2813, %v2815
    %v2827 = vsel %vm386, %v2815, %v2817
    %v2828 = vsel %vm386, %v2817, %v2819
    %v2829 = vsel %vm386, %v2819, %v2821
    %v2838 = vadd.f32 %v2714, %v2822
    %v2839 = vadd.f32 %v2715, %v2823
    %v2840 = vadd.f32 %v2716, %v2824
    %v2841 = vadd.f32 %v2717, %v2825
    %v2842 = vadd.f32 %v2718, %v2826
    %v2843 = vadd.f32 %v2719, %v2827
    %v2844 = vadd.f32 %v2720, %v2828
    %v2845 = vadd.f32 %v2721, %v2829
    %s2846 = sld [smem:[#allocation6 + $0x19]]
    %v2847 = vstv %s2846
    %v2848 = vmul.f32 %v2847, %v2429
    %v2849 = vmul.f32 %v2847, %v2430
    %v2850 = vmul.f32 %v2847, %v2431
    %v2851 = vmul.f32 %v2847, %v2432
    %v2852 = vmul.f32 %v2847, %v2433
    %v2853 = vmul.f32 %v2847, %v2434
    %v2854 = vmul.f32 %v2847, %v2435
    %v2855 = vmul.f32 %v2847, %v2436
    %v2856 = vmul.f32 %v2847, %v2437
    %2866 = vrot.lane.b32.xlu0 %v2848, 124
    %v2867 = vpop.permute.xlu0 %2866
    %2868 = vrot.lane.b32.xlu0 %v2849, 124
    %v2869 = vpop.permute.xlu0 %2868
    %2870 = vrot.lane.b32.xlu0 %v2850, 124
    %v2871 = vpop.permute.xlu0 %2870
    %2872 = vrot.lane.b32.xlu0 %v2851, 124
    %v2873 = vpop.permute.xlu0 %2872
    %2874 = vrot.lane.b32.xlu0 %v2852, 124
    %v2875 = vpop.permute.xlu0 %2874
    %2876 = vrot.lane.b32.xlu0 %v2853, 124
    %v2877 = vpop.permute.xlu0 %2876
    %2878 = vrot.lane.b32.xlu0 %v2854, 124
    %v2879 = vpop.permute.xlu0 %2878
    %2880 = vrot.lane.b32.xlu0 %v2855, 124
    %v2881 = vpop.permute.xlu0 %2880
    %2882 = vrot.lane.b32.xlu0 %v2856, 124
    %v2883 = vpop.permute.xlu0 %2882
    %v2884 = vsel %vm511, %v2867, %v2869
    %v2885 = vsel %vm511, %v2869, %v2871
    %v2886 = vsel %vm511, %v2871, %v2873
    %v2887 = vsel %vm511, %v2873, %v2875
    %v2888 = vsel %vm511, %v2875, %v2877
    %v2889 = vsel %vm511, %v2877, %v2879
    %v2890 = vsel %vm511, %v2879, %v2881
    %v2891 = vsel %vm511, %v2881, %v2883
    %v2900 = vadd.f32 %v2776, %v2884
    %v2901 = vadd.f32 %v2777, %v2885
    %v2902 = vadd.f32 %v2778, %v2886
    %v2903 = vadd.f32 %v2779, %v2887
    %v2904 = vadd.f32 %v2780, %v2888
    %v2905 = vadd.f32 %v2781, %v2889
    %v2906 = vadd.f32 %v2782, %v2890
    %v2907 = vadd.f32 %v2783, %v2891
    %s2908 = sld [smem:[#allocation6 + $0x35]]
    %v2909 = vstv %s2908
    %v2910 = vmul.f32 %v2909, %v2429
    %v2911 = vmul.f32 %v2909, %v2430
    %v2912 = vmul.f32 %v2909, %v2431
    %v2913 = vmul.f32 %v2909, %v2432
    %v2914 = vmul.f32 %v2909, %v2433
    %v2915 = vmul.f32 %v2909, %v2434
    %v2916 = vmul.f32 %v2909, %v2435
    %v2917 = vmul.f32 %v2909, %v2436
    %v2918 = vmul.f32 %v2909, %v2437
    %2928 = vrot.lane.b32.xlu0 %v2910, 124
    %v2929 = vpop.permute.xlu0 %2928
    %2930 = vrot.lane.b32.xlu0 %v2911, 124
    %v2931 = vpop.permute.xlu0 %2930
    %2932 = vrot.lane.b32.xlu0 %v2912, 124
    %v2933 = vpop.permute.xlu0 %2932
    %2934 = vrot.lane.b32.xlu0 %v2913, 124
    %v2935 = vpop.permute.xlu0 %2934
    %2936 = vrot.lane.b32.xlu0 %v2914, 124
    %v2937 = vpop.permute.xlu0 %2936
    %2938 = vrot.lane.b32.xlu0 %v2915, 124
    %v2939 = vpop.permute.xlu0 %2938
    %2940 = vrot.lane.b32.xlu0 %v2916, 124
    %v2941 = vpop.permute.xlu0 %2940
    %2942 = vrot.lane.b32.xlu0 %v2917, 124
    %v2943 = vpop.permute.xlu0 %2942
    %2944 = vrot.lane.b32.xlu0 %v2918, 124
    %v2945 = vpop.permute.xlu0 %2944
    %v2946 = vsel %vm511, %v2929, %v2931
    %v2947 = vsel %vm511, %v2931, %v2933
    %v2948 = vsel %vm511, %v2933, %v2935
    %v2949 = vsel %vm511, %v2935, %v2937
    %v2950 = vsel %vm511, %v2937, %v2939
    %v2951 = vsel %vm511, %v2939, %v2941
    %v2952 = vsel %vm511, %v2941, %v2943
    %v2953 = vsel %vm511, %v2943, %v2945
    %v2962 = vadd.f32 %v2838, %v2946
    %v2963 = vadd.f32 %v2839, %v2947
    %v2964 = vadd.f32 %v2840, %v2948
    %v2965 = vadd.f32 %v2841, %v2949
    %v2966 = vadd.f32 %v2842, %v2950
    %v2967 = vadd.f32 %v2843, %v2951
    %v2968 = vadd.f32 %v2844, %v2952
    %v2969 = vadd.f32 %v2845, %v2953
    %s2970 = sld [smem:[#allocation6 + $0x1a]]
    %v2971 = vstv %s2970
    %v2972 = vmul.f32 %v2971, %v2429
    %v2973 = vmul.f32 %v2971, %v2430
    %v2974 = vmul.f32 %v2971, %v2431
    %v2975 = vmul.f32 %v2971, %v2432
    %v2976 = vmul.f32 %v2971, %v2433
    %v2977 = vmul.f32 %v2971, %v2434
    %v2978 = vmul.f32 %v2971, %v2435
    %v2979 = vmul.f32 %v2971, %v2436
    %v2980 = vmul.f32 %v2971, %v2437
    %2990 = vrot.lane.b32.xlu0 %v2972, 123
    %v2991 = vpop.permute.xlu0 %2990
    %2992 = vrot.lane.b32.xlu0 %v2973, 123
    %v2993 = vpop.permute.xlu0 %2992
    %2994 = vrot.lane.b32.xlu0 %v2974, 123
    %v2995 = vpop.permute.xlu0 %2994
    %2996 = vrot.lane.b32.xlu0 %v2975, 123
    %v2997 = vpop.permute.xlu0 %2996
    %2998 = vrot.lane.b32.xlu0 %v2976, 123
    %v2999 = vpop.permute.xlu0 %2998
    %3000 = vrot.lane.b32.xlu0 %v2977, 123
    %v3001 = vpop.permute.xlu0 %3000
    %3002 = vrot.lane.b32.xlu0 %v2978, 123
    %v3003 = vpop.permute.xlu0 %3002
    %3004 = vrot.lane.b32.xlu0 %v2979, 123
    %v3005 = vpop.permute.xlu0 %3004
    %3006 = vrot.lane.b32.xlu0 %v2980, 123
    %v3007 = vpop.permute.xlu0 %3006
    %v3008 = vsel %vm636, %v2991, %v2993
    %v3009 = vsel %vm636, %v2993, %v2995
    %v3010 = vsel %vm636, %v2995, %v2997
    %v3011 = vsel %vm636, %v2997, %v2999
    %v3012 = vsel %vm636, %v2999, %v3001
    %v3013 = vsel %vm636, %v3001, %v3003
    %v3014 = vsel %vm636, %v3003, %v3005
    %v3015 = vsel %vm636, %v3005, %v3007
    %v3024 = vadd.f32 %v2900, %v3008
    %v3025 = vadd.f32 %v2901, %v3009
    %v3026 = vadd.f32 %v2902, %v3010
    %v3027 = vadd.f32 %v2903, %v3011
    %v3028 = vadd.f32 %v2904, %v3012
    %v3029 = vadd.f32 %v2905, %v3013
    %v3030 = vadd.f32 %v2906, %v3014
    %v3031 = vadd.f32 %v2907, %v3015
    %s3032 = sld [smem:[#allocation6 + $0x36]]
    %v3033 = vstv %s3032
    %v3034 = vmul.f32 %v3033, %v2429
    %v3035 = vmul.f32 %v3033, %v2430
    %v3036 = vmul.f32 %v3033, %v2431
    %v3037 = vmul.f32 %v3033, %v2432
    %v3038 = vmul.f32 %v3033, %v2433
    %v3039 = vmul.f32 %v3033, %v2434
    %v3040 = vmul.f32 %v3033, %v2435
    %v3041 = vmul.f32 %v3033, %v2436
    %v3042 = vmul.f32 %v3033, %v2437
    %3052 = vrot.lane.b32.xlu0 %v3034, 123
    %v3053 = vpop.permute.xlu0 %3052
    %3054 = vrot.lane.b32.xlu0 %v3035, 123
    %v3055 = vpop.permute.xlu0 %3054
    %3056 = vrot.lane.b32.xlu0 %v3036, 123
    %v3057 = vpop.permute.xlu0 %3056
    %3058 = vrot.lane.b32.xlu0 %v3037, 123
    %v3059 = vpop.permute.xlu0 %3058
    %3060 = vrot.lane.b32.xlu0 %v3038, 123
    %v3061 = vpop.permute.xlu0 %3060
    %3062 = vrot.lane.b32.xlu0 %v3039, 123
    %v3063 = vpop.permute.xlu0 %3062
    %3064 = vrot.lane.b32.xlu0 %v3040, 123
    %v3065 = vpop.permute.xlu0 %3064
    %3066 = vrot.lane.b32.xlu0 %v3041, 123
    %v3067 = vpop.permute.xlu0 %3066
    %3068 = vrot.lane.b32.xlu0 %v3042, 123
    %v3069 = vpop.permute.xlu0 %3068
    %v3070 = vsel %vm636, %v3053, %v3055
    %v3071 = vsel %vm636, %v3055, %v3057
    %v3072 = vsel %vm636, %v3057, %v3059
    %v3073 = vsel %vm636, %v3059, %v3061
    %v3074 = vsel %vm636, %v3061, %v3063
    %v3075 = vsel %vm636, %v3063, %v3065
    %v3076 = vsel %vm636, %v3065, %v3067
    %v3077 = vsel %vm636, %v3067, %v3069
    %v3086 = vadd.f32 %v2962, %v3070
    %v3087 = vadd.f32 %v2963, %v3071
    %v3088 = vadd.f32 %v2964, %v3072
    %v3089 = vadd.f32 %v2965, %v3073
    %v3090 = vadd.f32 %v2966, %v3074
    %v3091 = vadd.f32 %v2967, %v3075
    %v3092 = vadd.f32 %v2968, %v3076
    %v3093 = vadd.f32 %v2969, %v3077
    %s3094 = sld [smem:[#allocation6 + $0x1b]]
    %v3095 = vstv %s3094
    %v3096 = vmul.f32 %v3095, %v2429
    %v3097 = vmul.f32 %v3095, %v2430
    %v3098 = vmul.f32 %v3095, %v2431
    %v3099 = vmul.f32 %v3095, %v2432
    %v3100 = vmul.f32 %v3095, %v2433
    %v3101 = vmul.f32 %v3095, %v2434
    %v3102 = vmul.f32 %v3095, %v2435
    %v3103 = vmul.f32 %v3095, %v2436
    %v3104 = vmul.f32 %v3095, %v2437
    %3114 = vrot.lane.b32.xlu0 %v3096, 122
    %v3115 = vpop.permute.xlu0 %3114
    %3116 = vrot.lane.b32.xlu0 %v3097, 122
    %v3117 = vpop.permute.xlu0 %3116
    %3118 = vrot.lane.b32.xlu0 %v3098, 122
    %v3119 = vpop.permute.xlu0 %3118
    %3120 = vrot.lane.b32.xlu0 %v3099, 122
    %v3121 = vpop.permute.xlu0 %3120
    %3122 = vrot.lane.b32.xlu0 %v3100, 122
    %v3123 = vpop.permute.xlu0 %3122
    %3124 = vrot.lane.b32.xlu0 %v3101, 122
    %v3125 = vpop.permute.xlu0 %3124
    %3126 = vrot.lane.b32.xlu0 %v3102, 122
    %v3127 = vpop.permute.xlu0 %3126
    %3128 = vrot.lane.b32.xlu0 %v3103, 122
    %v3129 = vpop.permute.xlu0 %3128
    %3130 = vrot.lane.b32.xlu0 %v3104, 122
    %v3131 = vpop.permute.xlu0 %3130
    %v3132 = vsel %vm761, %v3115, %v3117
    %v3133 = vsel %vm761, %v3117, %v3119
    %v3134 = vsel %vm761, %v3119, %v3121
    %v3135 = vsel %vm761, %v3121, %v3123
    %v3136 = vsel %vm761, %v3123, %v3125
    %v3137 = vsel %vm761, %v3125, %v3127
    %v3138 = vsel %vm761, %v3127, %v3129
    %v3139 = vsel %vm761, %v3129, %v3131
    %v3148 = vadd.f32 %v3024, %v3132
    %v3149 = vadd.f32 %v3025, %v3133
    %v3150 = vadd.f32 %v3026, %v3134
    %v3151 = vadd.f32 %v3027, %v3135
    %v3152 = vadd.f32 %v3028, %v3136
    %v3153 = vadd.f32 %v3029, %v3137
    %v3154 = vadd.f32 %v3030, %v3138
    %v3155 = vadd.f32 %v3031, %v3139
    %s3156 = sld [smem:[#allocation6 + $0x37]]
    %v3157 = vstv %s3156
    %v3158 = vmul.f32 %v3157, %v2429
    %v3159 = vmul.f32 %v3157, %v2430
    %v3160 = vmul.f32 %v3157, %v2431
    %v3161 = vmul.f32 %v3157, %v2432
    %v3162 = vmul.f32 %v3157, %v2433
    %v3163 = vmul.f32 %v3157, %v2434
    %v3164 = vmul.f32 %v3157, %v2435
    %v3165 = vmul.f32 %v3157, %v2436
    %v3166 = vmul.f32 %v3157, %v2437
    %3176 = vrot.lane.b32.xlu0 %v3158, 122
    %v3177 = vpop.permute.xlu0 %3176
    %3178 = vrot.lane.b32.xlu0 %v3159, 122
    %v3179 = vpop.permute.xlu0 %3178
    %3180 = vrot.lane.b32.xlu0 %v3160, 122
    %v3181 = vpop.permute.xlu0 %3180
    %3182 = vrot.lane.b32.xlu0 %v3161, 122
    %v3183 = vpop.permute.xlu0 %3182
    %3184 = vrot.lane.b32.xlu0 %v3162, 122
    %v3185 = vpop.permute.xlu0 %3184
    %3186 = vrot.lane.b32.xlu0 %v3163, 122
    %v3187 = vpop.permute.xlu0 %3186
    %3188 = vrot.lane.b32.xlu0 %v3164, 122
    %v3189 = vpop.permute.xlu0 %3188
    %3190 = vrot.lane.b32.xlu0 %v3165, 122
    %v3191 = vpop.permute.xlu0 %3190
    %3192 = vrot.lane.b32.xlu0 %v3166, 122
    %v3193 = vpop.permute.xlu0 %3192
    %v3194 = vsel %vm761, %v3177, %v3179
    %v3195 = vsel %vm761, %v3179, %v3181
    %v3196 = vsel %vm761, %v3181, %v3183
    %v3197 = vsel %vm761, %v3183, %v3185
    %v3198 = vsel %vm761, %v3185, %v3187
    %v3199 = vsel %vm761, %v3187, %v3189
    %v3200 = vsel %vm761, %v3189, %v3191
    %v3201 = vsel %vm761, %v3191, %v3193
    %v3210 = vadd.f32 %v3086, %v3194
    %v3211 = vadd.f32 %v3087, %v3195
    %v3212 = vadd.f32 %v3088, %v3196
    %v3213 = vadd.f32 %v3089, %v3197
    %v3214 = vadd.f32 %v3090, %v3198
    %v3215 = vadd.f32 %v3091, %v3199
    %v3216 = vadd.f32 %v3092, %v3200
    %v3217 = vadd.f32 %v3093, %v3201
    %v3218 = vmax.f32 %v3148, %v3149
    %v3219 = vmax.f32 %v3218, %v3150
    %v3220 = vmax.f32 %v3219, %v3151
    %v3221 = vmax.f32 %v3220, %v3152
    %v3222 = vmax.f32 %v3221, %v3153
    %v3223 = vmax.f32 %v3222, %v3154
    %v3224 = vmax.f32 %v3223, %v3155
    %v3225 = vmax.f32 %v3224, %v3210
    %v3226 = vmax.f32 %v3225, %v3211
    %v3227 = vmax.f32 %v3226, %v3212
    %v3228 = vmax.f32 %v3227, %v3213
    %v3229 = vmax.f32 %v3228, %v3214
    %v3230 = vmax.f32 %v3229, %v3215
    %v3231 = vmax.f32 %v3230, %v3216
    %v3232 = vmax.f32 %v3231, %v3217
    %v3233 = vld [vmem:[#allocation2] sm:$0xff]
    %v3234 = vmax.f32 %v3233, %v3232
    %v3235 = vsub.f32 %v3233, %v3234
    %v3236 = vmul.f32 %v3235, 1.442695
    %v3237 = vpow.pop %v3236
    %v3238 = vld [vmem:[#allocation3] sm:$0xff]
    %v3239 = vmul.f32 %v3237, %v3238
    %v3240 = vld [vmem:[#allocation4] sm:$0xff]
    %v3241 = vmul.f32 %v3237, %v3240
    %v3242 = vld [vmem:[#allocation5] sm:$0xff]
    %v3243 = vsub.f32 %v3148, %v3234
    %v3244 = vmul.f32 %v3243, 1.442695
    %v3245 = vpow.pop %v3244
    %v3246 = vadd.f32 %v3239, %v3245
    %v3247 = vmul.f32 %v3148, %v3245
    %v3248 = vadd.f32 %v3241, %v3247
    %v3249 = vadd.f32 %v3242, %v3148
    %v3250 = vsub.f32 %v3149, %v3234
    %v3251 = vmul.f32 %v3250, 1.442695
    %v3252 = vpow.pop %v3251
    %v3253 = vadd.f32 %v3246, %v3252
    %v3254 = vmul.f32 %v3149, %v3252
    %v3255 = vadd.f32 %v3248, %v3254
    %v3256 = vadd.f32 %v3249, %v3149
    %v3257 = vsub.f32 %v3150, %v3234
    %v3258 = vmul.f32 %v3257, 1.442695
    %v3259 = vpow.pop %v3258
    %v3260 = vadd.f32 %v3253, %v3259
    %v3261 = vmul.f32 %v3150, %v3259
    %v3262 = vadd.f32 %v3255, %v3261
    %v3263 = vadd.f32 %v3256, %v3150
    %v3264 = vsub.f32 %v3151, %v3234
    %v3265 = vmul.f32 %v3264, 1.442695
    %v3266 = vpow.pop %v3265
    %v3267 = vadd.f32 %v3260, %v3266
    %v3268 = vmul.f32 %v3151, %v3266
    %v3269 = vadd.f32 %v3262, %v3268
    %v3270 = vadd.f32 %v3263, %v3151
    %v3271 = vsub.f32 %v3152, %v3234
    %v3272 = vmul.f32 %v3271, 1.442695
    %v3273 = vpow.pop %v3272
    %v3274 = vadd.f32 %v3267, %v3273
    %v3275 = vmul.f32 %v3152, %v3273
    %v3276 = vadd.f32 %v3269, %v3275
    %v3277 = vadd.f32 %v3270, %v3152
    %v3278 = vsub.f32 %v3153, %v3234
    %v3279 = vmul.f32 %v3278, 1.442695
    %v3280 = vpow.pop %v3279
    %v3281 = vadd.f32 %v3274, %v3280
    %v3282 = vmul.f32 %v3153, %v3280
    %v3283 = vadd.f32 %v3276, %v3282
    %v3284 = vadd.f32 %v3277, %v3153
    %v3285 = vsub.f32 %v3154, %v3234
    %v3286 = vmul.f32 %v3285, 1.442695
    %v3287 = vpow.pop %v3286
    %v3288 = vadd.f32 %v3281, %v3287
    %v3289 = vmul.f32 %v3154, %v3287
    %v3290 = vadd.f32 %v3283, %v3289
    %v3291 = vadd.f32 %v3284, %v3154
    %v3292 = vsub.f32 %v3155, %v3234
    %v3293 = vmul.f32 %v3292, 1.442695
    %v3294 = vpow.pop %v3293
    %v3295 = vadd.f32 %v3288, %v3294
    %v3296 = vmul.f32 %v3155, %v3294
    %v3297 = vadd.f32 %v3290, %v3296
    %v3298 = vadd.f32 %v3291, %v3155
    %v3299 = vsub.f32 %v3210, %v3234
    %v3300 = vmul.f32 %v3299, 1.442695
    %v3301 = vpow.pop %v3300
    %v3302 = vadd.f32 %v3295, %v3301
    %v3303 = vmul.f32 %v3210, %v3301
    %v3304 = vadd.f32 %v3297, %v3303
    %v3305 = vadd.f32 %v3298, %v3210
    %v3306 = vsub.f32 %v3211, %v3234
    %v3307 = vmul.f32 %v3306, 1.442695
    %v3308 = vpow.pop %v3307
    %v3309 = vadd.f32 %v3302, %v3308
    %v3310 = vmul.f32 %v3211, %v3308
    %v3311 = vadd.f32 %v3304, %v3310
    %v3312 = vadd.f32 %v3305, %v3211
    %v3313 = vsub.f32 %v3212, %v3234
    %v3314 = vmul.f32 %v3313, 1.442695
    %v3315 = vpow.pop %v3314
    %v3316 = vadd.f32 %v3309, %v3315
    %v3317 = vmul.f32 %v3212, %v3315
    %v3318 = vadd.f32 %v3311, %v3317
    %v3319 = vadd.f32 %v3312, %v3212
    %v3320 = vsub.f32 %v3213, %v3234
    %v3321 = vmul.f32 %v3320, 1.442695
    %v3322 = vpow.pop %v3321
    %v3323 = vadd.f32 %v3316, %v3322
    %v3324 = vmul.f32 %v3213, %v3322
    %v3325 = vadd.f32 %v3318, %v3324
    %v3326 = vadd.f32 %v3319, %v3213
    %v3327 = vsub.f32 %v3214, %v3234
    %v3328 = vmul.f32 %v3327, 1.442695
    %v3329 = vpow.pop %v3328
    %v3330 = vadd.f32 %v3323, %v3329
    %v3331 = vmul.f32 %v3214, %v3329
    %v3332 = vadd.f32 %v3325, %v3331
    %v3333 = vadd.f32 %v3326, %v3214
    %v3334 = vsub.f32 %v3215, %v3234
    %v3335 = vmul.f32 %v3334, 1.442695
    %v3336 = vpow.pop %v3335
    %v3337 = vadd.f32 %v3330, %v3336
    %v3338 = vmul.f32 %v3215, %v3336
    %v3339 = vadd.f32 %v3332, %v3338
    %v3340 = vadd.f32 %v3333, %v3215
    %v3341 = vsub.f32 %v3216, %v3234
    %v3342 = vmul.f32 %v3341, 1.442695
    %v3343 = vpow.pop %v3342
    %v3344 = vadd.f32 %v3337, %v3343
    %v3345 = vmul.f32 %v3216, %v3343
    %v3346 = vadd.f32 %v3339, %v3345
    %v3347 = vadd.f32 %v3340, %v3216
    %v3348 = vsub.f32 %v3217, %v3234
    %v3349 = vmul.f32 %v3348, 1.442695
    %v3350 = vpow.pop %v3349
    %v3351 = vadd.f32 %v3344, %v3350
    %v3352 = vmul.f32 %v3217, %v3350
    %v3353 = vadd.f32 %v3346, %v3352
    %v3354 = vadd.f32 %v3347, %v3217
    %3355 = vst [vmem:[#allocation2] sm:$0xff] %v3234
    %3356 = vst [vmem:[#allocation3] sm:$0xff] %v3351
    %3357 = vst [vmem:[#allocation4] sm:$0xff] %v3353
    %3358 = vst [vmem:[#allocation5] sm:$0xff] %v3354
    // Predicated region
    $region26: #{profile_wrapper_forward.1} parent=1 // pred_check
      %p3359 = pneg %p39
    $region27: #{profile_wrapper_forward.1} parent=1 // pred_check_branch
      %3361 = sbr.rel (%p3359) target = $region29
    $region28: #{profile_wrapper_forward.1} parent=1 // pred_region
      %v3362 = vld [vmem:[#allocation2] sm:$0xff]
      %3363 = vmax.xlane.f32.xlu0 %v3362
      %v3364 = vpop.xlane.xlu0 %3363
      %v3365 = vsub.f32 %v3362, %v3364
      %v3366 = vmul.f32 %v3365, 1.442695
      %v3367 = vpow.pop %v3366
      %v3368 = vld [vmem:[#allocation3] sm:$0xff]
      %v3369 = vmul.f32 %v3368, %v3367
      %3370 = vadd.xlane.f32.xlu0 %v3369
      %v3371 = vpop.xlane.xlu0 %3370
      %v3372 = vld [vmem:[#allocation4] sm:$0xff]
      %v3373 = vmul.f32 %v3372, %v3367
      %3374 = vadd.xlane.f32.xlu0 %v3373
      %v3375 = vpop.xlane.xlu0 %3374
      %v3376 = vld [vmem:[#allocation5] sm:$0xff]
      %3377 = vadd.xlane.f32.xlu0 %v3376
      %v3378 = vpop.xlane.xlu0 %3377
      %v3379 = vrcp.pop %v3371
      %v3380 = vmul.f32 %v3375, %v3379
      %v3381 = vmul.f32 %v3378, 0.00048828125
      %v3382 = vsub.f32 %v3380, %v3381
      %vm3383 = vcmask 7168
      %3384 = vst.msk [vmem:[%s3] sm:$0xff] %vm3383, %v3382
    $region29: #{profile_wrapper_forward.1} parent=1 // pred_fallthru
      _
    // Predicated region
    $region30: #{profile_wrapper_forward.1} parent=1 // pred_check
      _
    $region31: #{profile_wrapper_forward.1} parent=1 // pred_check_branch
      %3386 = sbr.rel (0) target = $region33
    $region32: #{profile_wrapper_forward.1} parent=1 // pred_region
      _
    $region33: #{profile_wrapper_forward.1} parent=1 // pred_fallthru
      _
    // Predicated region
    $region34: #{profile_wrapper_forward.1} parent=1 // pred_check
      _
    $region35: #{profile_wrapper_forward.1} parent=1 // pred_check_branch
      %3388 = sbr.rel (0) target = $region37
    $region36: #{profile_wrapper_forward.1} parent=1 // pred_region
      _
    $region37: #{profile_wrapper_forward.1} parent=1 // pred_fallthru
      _
    %3389 = vsyncpa [#allocation7], 1
    %3390 = vsyncpa [#allocation9], 1

</llo_original>
